<compile_context>
chip_gen: v7x
topology: tpu7x:2x2x1
jax: 0.10.0
libtpu: 0.0.40
codegen_flags: <defaults>
</compile_context>

<pallas_src>
import jax
import jax.numpy as jnp
from jax.experimental import pallas as pl


# ------------------------- fused LSTM + FC kernel ---------------------------

def make_fused_lstm_fc(S, B, E, H, O, n_layers):
    """Build one pallas_call running all LSTM layers/directions + the FC."""

    def run_direction(xw, whh, reverse):
        # xw: (S*B, 4H) precomputed input contribution (x @ W_ih + b_ih + b_hh)
        # Returns (per-timestep hidden states indexed by t, final hidden (B,H)).
        xw_t = [xw[t * B:(t + 1) * B, :] for t in range(S)]
        h = jnp.zeros((B, H), jnp.float32)
        c = jnp.zeros((B, H), jnp.float32)
        outs = [None] * S
        order = range(S - 1, -1, -1) if reverse else range(S)
        for t in order:                      # S=8: fully unrolled, state in vregs
            g = jnp.dot(h, whh, preferred_element_type=jnp.float32) + xw_t[t]
            sg = jax.nn.sigmoid(g)           # one 128-lane EUP pass
            tg = jnp.tanh(g)                 # one 128-lane EUP pass
            i = sg[:, 0 * H:1 * H]           # PyTorch gate order: i, f, g, o
            f = sg[:, 1 * H:2 * H]
            gg = tg[:, 2 * H:3 * H]
            o = sg[:, 3 * H:4 * H]
            c = f * c + i * gg
            h = o * jnp.tanh(c)
            outs[t] = h
        return outs, h

    def kernel(*refs):
        x_ref = refs[0]
        w_refs = refs[1:1 + 6 * n_layers]
        fwf_ref, fwb_ref, feb_ref = refs[1 + 6 * n_layers:-1]
        out_ref = refs[-1]

        x = x_ref[...]                       # (S*B, E), sequence-major
        of = ob = None                       # previous-layer outputs (S*B, H)
        hf = hb = None                       # final hidden per direction (B, H)
        for layer in range(n_layers):
            wih_f = w_refs[6 * layer + 0][...]
            whh_f = w_refs[6 * layer + 1][...]
            b_f = w_refs[6 * layer + 2][...]
            wih_b = w_refs[6 * layer + 3][...]
            whh_b = w_refs[6 * layer + 4][...]
            b_b = w_refs[6 * layer + 5][...]

            if layer == 0:
                xw_f = jnp.dot(x, wih_f, preferred_element_type=jnp.float32) + b_f
                xw_b = jnp.dot(x, wih_b, preferred_element_type=jnp.float32) + b_b
            else:
                # layer input is concat(of, ob); distribute matmul over concat
                xw_f = (jnp.dot(of, wih_f[:H], preferred_element_type=jnp.float32)
                        + jnp.dot(ob, wih_f[H:], preferred_element_type=jnp.float32)
                        + b_f)
                xw_b = (jnp.dot(of, wih_b[:H], preferred_element_type=jnp.float32)
                        + jnp.dot(ob, wih_b[H:], preferred_element_type=jnp.float32)
                        + b_b)

            outs_f, hf = run_direction(xw_f, whh_f, reverse=False)
            outs_b, hb = run_direction(xw_b, whh_b, reverse=True)

            if layer < n_layers - 1:
                of = jnp.concatenate(outs_f, axis=0)   # (S*B, H), time-major
                ob = jnp.concatenate(outs_b, axis=0)
                # inter-layer dropout (p=0.2) is identity in eval mode

        # FC epilogue: concat(h_fwd, h_bwd, emoji) @ W_fc + b, with the concat
        # distributed over W_fc row-blocks; the tiny (B,3)x(3,O) emoji term +
        # bias is precomputed in the wrapper and arrives as feb_ref.
        logits = (jnp.dot(hf, fwf_ref[...], preferred_element_type=jnp.float32)
                  + jnp.dot(hb, fwb_ref[...], preferred_element_type=jnp.float32)
                  + feb_ref[...])
        out_ref[...] = logits

    # TODO(synk): on v7x the two directions could run concurrently on the two
    # TensorCores (size-2 "parallel" direction axis / core_map); skipped here.
    return pl.pallas_call(
        kernel,
        out_shape=jax.ShapeDtypeStruct((B, O), jnp.float32),
    )


# ------------------------------ Full forward --------------------------------

def bilstm_forward(params, text, emoji_feature):
    # Embedding gather (XLA glue). padding_idx=0 row is zeroed at init.
    emb = params["embedding"][text]                     # (B, S, E)
    B, S, E = emb.shape
    H = params["layers"][0][0][1].shape[0]              # whh_t: (H, 4H)
    O = params["fc_b"].shape[-1]
    n_layers = len(params["layers"])

    # Sequence-major, flattened to (S*B, E): the hoisted input projection is a
    # single matmul and per-step slices inside the kernel are static windows.
    x = jnp.transpose(emb, (1, 0, 2)).reshape(S * B, E)

    flat_w = []
    for f_dir, b_dir in params["layers"]:
        flat_w.extend(f_dir)
        flat_w.extend(b_dir)

    # Trivial emoji-feature FC term + bias, left to XLA (3-wide contraction).
    fc_emoji = jnp.dot(emoji_feature, params["fc_w_e"]) + params["fc_b"]  # (B, O)
    # self.dropout(combined) is identity in eval mode.

    fused = make_fused_lstm_fc(S, B, E, H, O, n_layers)
    return fused(x, *flat_w, params["fc_w_f"], params["fc_w_b"], fc_emoji)


# ------------------------------- Param init ---------------------------------

def init_params(key, vocab_size, embedding_dim, hidden_dim, output_dim,
                n_layers):
    keys = list(jax.random.split(key, 8 * n_layers + 3))
    kit = iter(keys)

    def unif(k, shape, bound):
        return jax.random.uniform(k, shape, jnp.float32, -bound, bound)

    emb = jax.random.normal(next(kit), (vocab_size, embedding_dim), jnp.float32)
    emb = emb.at[0].set(0.0)                            # padding_idx=0

    H = hidden_dim
    bound = 1.0 / (H ** 0.5)
    layers = []
    in_dim = embedding_dim
    for _ in range(n_layers):
        dirs = []
        for _d in range(2):                             # forward, backward
            w_ih = unif(next(kit), (4 * H, in_dim), bound)
            w_hh = unif(next(kit), (4 * H, H), bound)
            b_ih = unif(next(kit), (4 * H,), bound)
            b_hh = unif(next(kit), (4 * H,), bound)
            dirs.append((w_ih.T, w_hh.T, (b_ih + b_hh)[None, :]))
        layers.append(tuple(dirs))
        in_dim = 2 * H

    fc_in = 2 * H + 3
    fb = 1.0 / (fc_in ** 0.5)
    fc_w = unif(next(kit), (output_dim, fc_in), fb)     # torch Linear layout
    fc_b = unif(next(kit), (output_dim,), fb)
    fc_w_t = fc_w.T                                     # (2H+3, O)

    return {"embedding": emb, "layers": layers,
            "fc_w_f": fc_w_t[:H],            # FC rows for forward hidden
            "fc_w_b": fc_w_t[H:2 * H],       # FC rows for backward hidden
            "fc_w_e": fc_w_t[2 * H:],        # FC rows for emoji features
            "fc_b": fc_b[None, :]}


# ---------------------------------- Main -------------------------------------

if __name__ == "__main__":
    vocab_size, embedding_dim, hidden_dim, output_dim = 64, 16, 32, 3
    n_layers = 2
    batch, seq = 2, 8

    key = jax.random.PRNGKey(0)
    k_param, k_text, k_emoji = jax.random.split(key, 3)

    params = init_params(k_param, vocab_size, embedding_dim, hidden_dim,
                         output_dim, n_layers)
    text = jax.random.randint(k_text, (batch, seq), 0, vocab_size,
                              dtype=jnp.int32)          # token ids, 0 = pad
    emoji_feature = jax.random.normal(k_emoji, (batch, 3), jnp.float32)

    fwd = jax.jit(bilstm_forward)
    out = fwd(params, text, emoji_feature)              # (batch, output_dim)
    jax.block_until_ready(out)
    assert out.shape == (batch, output_dim)
    print("KERNEL_OK")
</pallas_src>

<mosaic_0001>
module attributes {stable_mosaic.version = 11 : i64} {
  func.func @kernel(%arg0: memref<16x16xf32, #tpu.memory_space<vmem>>, %arg1: memref<16x128xf32, #tpu.memory_space<vmem>>, %arg2: memref<32x128xf32, #tpu.memory_space<vmem>>, %arg3: memref<1x128xf32, #tpu.memory_space<vmem>>, %arg4: memref<16x128xf32, #tpu.memory_space<vmem>>, %arg5: memref<32x128xf32, #tpu.memory_space<vmem>>, %arg6: memref<1x128xf32, #tpu.memory_space<vmem>>, %arg7: memref<64x128xf32, #tpu.memory_space<vmem>>, %arg8: memref<32x128xf32, #tpu.memory_space<vmem>>, %arg9: memref<1x128xf32, #tpu.memory_space<vmem>>, %arg10: memref<64x128xf32, #tpu.memory_space<vmem>>, %arg11: memref<32x128xf32, #tpu.memory_space<vmem>>, %arg12: memref<1x128xf32, #tpu.memory_space<vmem>>, %arg13: memref<32x3xf32, #tpu.memory_space<vmem>>, %arg14: memref<32x3xf32, #tpu.memory_space<vmem>>, %arg15: memref<2x3xf32, #tpu.memory_space<vmem>>, %arg16: memref<2x3xf32, #tpu.memory_space<vmem>>) attributes {dimension_semantics = [], scalar_prefetch = 0 : i64, scratch_operands = 0 : i64, tpu.core_type = #tpu.core_type<tc>} {
    %c0 = arith.constant 0 : index
    %c0_0 = arith.constant 0 : index
    %0 = vector.load %arg0[%c0, %c0_0] : memref<16x16xf32, #tpu.memory_space<vmem>>, vector<16x16xf32>
    %c0_1 = arith.constant 0 : index
    %c0_2 = arith.constant 0 : index
    %1 = vector.load %arg1[%c0_1, %c0_2] : memref<16x128xf32, #tpu.memory_space<vmem>>, vector<16x128xf32>
    %c0_3 = arith.constant 0 : index
    %c0_4 = arith.constant 0 : index
    %2 = vector.load %arg2[%c0_3, %c0_4] : memref<32x128xf32, #tpu.memory_space<vmem>>, vector<32x128xf32>
    %c0_5 = arith.constant 0 : index
    %c0_6 = arith.constant 0 : index
    %3 = vector.load %arg3[%c0_5, %c0_6] : memref<1x128xf32, #tpu.memory_space<vmem>>, vector<1x128xf32>
    %c0_7 = arith.constant 0 : index
    %c0_8 = arith.constant 0 : index
    %4 = vector.load %arg4[%c0_7, %c0_8] : memref<16x128xf32, #tpu.memory_space<vmem>>, vector<16x128xf32>
    %c0_9 = arith.constant 0 : index
    %c0_10 = arith.constant 0 : index
    %5 = vector.load %arg5[%c0_9, %c0_10] : memref<32x128xf32, #tpu.memory_space<vmem>>, vector<32x128xf32>
    %c0_11 = arith.constant 0 : index
    %c0_12 = arith.constant 0 : index
    %6 = vector.load %arg6[%c0_11, %c0_12] : memref<1x128xf32, #tpu.memory_space<vmem>>, vector<1x128xf32>
    %cst = arith.constant dense<0.000000e+00> : vector<16x128xf32>
    %7 = tpu.matmul %0, %1, %cst {dimension_numbers = #tpu.dot_dimension_numbers<[1], [0], [0], [1], [0, 0, 1, 1], [], []>} : vector<16x16xf32>, vector<16x128xf32>, vector<16x128xf32> -> vector<16x128xf32>
    %8 = vector.broadcast %3 : vector<1x128xf32> to vector<16x128xf32>
    %9 = arith.addf %7, %8 : vector<16x128xf32>
    %cst_13 = arith.constant dense<0.000000e+00> : vector<16x128xf32>
    %10 = tpu.matmul %0, %4, %cst_13 {dimension_numbers = #tpu.dot_dimension_numbers<[1], [0], [0], [1], [0, 0, 1, 1], [], []>} : vector<16x16xf32>, vector<16x128xf32>, vector<16x128xf32> -> vector<16x128xf32>
    %11 = vector.broadcast %6 : vector<1x128xf32> to vector<16x128xf32>
    %12 = arith.addf %10, %11 : vector<16x128xf32>
    %13 = vector.extract_strided_slice %9 {offsets = [0, 0], sizes = [2, 128], strides = [1, 1]} : vector<16x128xf32> to vector<2x128xf32>
    %14 = vector.extract_strided_slice %9 {offsets = [2, 0], sizes = [2, 128], strides = [1, 1]} : vector<16x128xf32> to vector<2x128xf32>
    %15 = vector.extract_strided_slice %9 {offsets = [4, 0], sizes = [2, 128], strides = [1, 1]} : vector<16x128xf32> to vector<2x128xf32>
    %16 = vector.extract_strided_slice %9 {offsets = [6, 0], sizes = [2, 128], strides = [1, 1]} : vector<16x128xf32> to vector<2x128xf32>
    %17 = vector.extract_strided_slice %9 {offsets = [8, 0], sizes = [2, 128], strides = [1, 1]} : vector<16x128xf32> to vector<2x128xf32>
    %18 = vector.extract_strided_slice %9 {offsets = [10, 0], sizes = [2, 128], strides = [1, 1]} : vector<16x128xf32> to vector<2x128xf32>
    %19 = vector.extract_strided_slice %9 {offsets = [12, 0], sizes = [2, 128], strides = [1, 1]} : vector<16x128xf32> to vector<2x128xf32>
    %20 = vector.extract_strided_slice %9 {offsets = [14, 0], sizes = [2, 128], strides = [1, 1]} : vector<16x128xf32> to vector<2x128xf32>
    %cst_14 = arith.constant 0.000000e+00 : f32
    %21 = vector.broadcast %cst_14 : f32 to vector<2x32xf32>
    %cst_15 = arith.constant 0.000000e+00 : f32
    %22 = vector.broadcast %cst_15 : f32 to vector<2x32xf32>
    %cst_16 = arith.constant dense<0.000000e+00> : vector<2x128xf32>
    %23 = tpu.matmul %21, %2, %cst_16 {dimension_numbers = #tpu.dot_dimension_numbers<[1], [0], [0], [1], [0, 0, 1, 1], [], []>} : vector<2x32xf32>, vector<32x128xf32>, vector<2x128xf32> -> vector<2x128xf32>
    %24 = arith.addf %23, %13 : vector<2x128xf32>
    %25 = arith.negf %24 : vector<2x128xf32>
    %26 = math.exp %25 : vector<2x128xf32>
    %cst_17 = arith.constant 1.000000e+00 : f32
    %27 = vector.broadcast %cst_17 : f32 to vector<2x128xf32>
    %28 = arith.addf %27, %26 : vector<2x128xf32>
    %29 = arith.divf %27, %28 : vector<2x128xf32>
    %30 = math.tanh %24 : vector<2x128xf32>
    %31 = vector.extract_strided_slice %29 {offsets = [0, 0], sizes = [2, 32], strides = [1, 1]} : vector<2x128xf32> to vector<2x32xf32>
    %32 = vector.extract_strided_slice %29 {offsets = [0, 32], sizes = [2, 32], strides = [1, 1]} : vector<2x128xf32> to vector<2x32xf32>
    %33 = vector.extract_strided_slice %30 {offsets = [0, 64], sizes = [2, 32], strides = [1, 1]} : vector<2x128xf32> to vector<2x32xf32>
    %34 = vector.extract_strided_slice %29 {offsets = [0, 96], sizes = [2, 32], strides = [1, 1]} : vector<2x128xf32> to vector<2x32xf32>
    %35 = arith.mulf %32, %22 : vector<2x32xf32>
    %36 = arith.mulf %31, %33 : vector<2x32xf32>
    %37 = arith.addf %35, %36 : vector<2x32xf32>
    %38 = math.tanh %37 : vector<2x32xf32>
    %39 = arith.mulf %34, %38 : vector<2x32xf32>
    %cst_18 = arith.constant dense<0.000000e+00> : vector<2x128xf32>
    %40 = tpu.matmul %39, %2, %cst_18 {dimension_numbers = #tpu.dot_dimension_numbers<[1], [0], [0], [1], [0, 0, 1, 1], [], []>} : vector<2x32xf32>, vector<32x128xf32>, vector<2x128xf32> -> vector<2x128xf32>
    %41 = arith.addf %40, %14 : vector<2x128xf32>
    %42 = arith.negf %41 : vector<2x128xf32>
    %43 = math.exp %42 : vector<2x128xf32>
    %cst_19 = arith.constant 1.000000e+00 : f32
    %44 = vector.broadcast %cst_19 : f32 to vector<2x128xf32>
    %45 = arith.addf %44, %43 : vector<2x128xf32>
    %46 = arith.divf %44, %45 : vector<2x128xf32>
    %47 = math.tanh %41 : vector<2x128xf32>
    %48 = vector.extract_strided_slice %46 {offsets = [0, 0], sizes = [2, 32], strides = [1, 1]} : vector<2x128xf32> to vector<2x32xf32>
    %49 = vector.extract_strided_slice %46 {offsets = [0, 32], sizes = [2, 32], strides = [1, 1]} : vector<2x128xf32> to vector<2x32xf32>
    %50 = vector.extract_strided_slice %47 {offsets = [0, 64], sizes = [2, 32], strides = [1, 1]} : vector<2x128xf32> to vector<2x32xf32>
    %51 = vector.extract_strided_slice %46 {offsets = [0, 96], sizes = [2, 32], strides = [1, 1]} : vector<2x128xf32> to vector<2x32xf32>
    %52 = arith.mulf %49, %37 : vector<2x32xf32>
    %53 = arith.mulf %48, %50 : vector<2x32xf32>
    %54 = arith.addf %52, %53 : vector<2x32xf32>
    %55 = math.tanh %54 : vector<2x32xf32>
    %56 = arith.mulf %51, %55 : vector<2x32xf32>
    %cst_20 = arith.constant dense<0.000000e+00> : vector<2x128xf32>
    %57 = tpu.matmul %56, %2, %cst_20 {dimension_numbers = #tpu.dot_dimension_numbers<[1], [0], [0], [1], [0, 0, 1, 1], [], []>} : vector<2x32xf32>, vector<32x128xf32>, vector<2x128xf32> -> vector<2x128xf32>
    %58 = arith.addf %57, %15 : vector<2x128xf32>
    %59 = arith.negf %58 : vector<2x128xf32>
    %60 = math.exp %59 : vector<2x128xf32>
    %cst_21 = arith.constant 1.000000e+00 : f32
    %61 = vector.broadcast %cst_21 : f32 to vector<2x128xf32>
    %62 = arith.addf %61, %60 : vector<2x128xf32>
    %63 = arith.divf %61, %62 : vector<2x128xf32>
    %64 = math.tanh %58 : vector<2x128xf32>
    %65 = vector.extract_strided_slice %63 {offsets = [0, 0], sizes = [2, 32], strides = [1, 1]} : vector<2x128xf32> to vector<2x32xf32>
    %66 = vector.extract_strided_slice %63 {offsets = [0, 32], sizes = [2, 32], strides = [1, 1]} : vector<2x128xf32> to vector<2x32xf32>
    %67 = vector.extract_strided_slice %64 {offsets = [0, 64], sizes = [2, 32], strides = [1, 1]} : vector<2x128xf32> to vector<2x32xf32>
    %68 = vector.extract_strided_slice %63 {offsets = [0, 96], sizes = [2, 32], strides = [1, 1]} : vector<2x128xf32> to vector<2x32xf32>
    %69 = arith.mulf %66, %54 : vector<2x32xf32>
    %70 = arith.mulf %65, %67 : vector<2x32xf32>
    %71 = arith.addf %69, %70 : vector<2x32xf32>
    %72 = math.tanh %71 : vector<2x32xf32>
    %73 = arith.mulf %68, %72 : vector<2x32xf32>
    %cst_22 = arith.constant dense<0.000000e+00> : vector<2x128xf32>
    %74 = tpu.matmul %73, %2, %cst_22 {dimension_numbers = #tpu.dot_dimension_numbers<[1], [0], [0], [1], [0, 0, 1, 1], [], []>} : vector<2x32xf32>, vector<32x128xf32>, vector<2x128xf32> -> vector<2x128xf32>
    %75 = arith.addf %74, %16 : vector<2x128xf32>
    %76 = arith.negf %75 : vector<2x128xf32>
    %77 = math.exp %76 : vector<2x128xf32>
    %cst_23 = arith.constant 1.000000e+00 : f32
    %78 = vector.broadcast %cst_23 : f32 to vector<2x128xf32>
    %79 = arith.addf %78, %77 : vector<2x128xf32>
    %80 = arith.divf %78, %79 : vector<2x128xf32>
    %81 = math.tanh %75 : vector<2x128xf32>
    %82 = vector.extract_strided_slice %80 {offsets = [0, 0], sizes = [2, 32], strides = [1, 1]} : vector<2x128xf32> to vector<2x32xf32>
    %83 = vector.extract_strided_slice %80 {offsets = [0, 32], sizes = [2, 32], strides = [1, 1]} : vector<2x128xf32> to vector<2x32xf32>
    %84 = vector.extract_strided_slice %81 {offsets = [0, 64], sizes = [2, 32], strides = [1, 1]} : vector<2x128xf32> to vector<2x32xf32>
    %85 = vector.extract_strided_slice %80 {offsets = [0, 96], sizes = [2, 32], strides = [1, 1]} : vector<2x128xf32> to vector<2x32xf32>
    %86 = arith.mulf %83, %71 : vector<2x32xf32>
    %87 = arith.mulf %82, %84 : vector<2x32xf32>
    %88 = arith.addf %86, %87 : vector<2x32xf32>
    %89 = math.tanh %88 : vector<2x32xf32>
    %90 = arith.mulf %85, %89 : vector<2x32xf32>
    %cst_24 = arith.constant dense<0.000000e+00> : vector<2x128xf32>
    %91 = tpu.matmul %90, %2, %cst_24 {dimension_numbers = #tpu.dot_dimension_numbers<[1], [0], [0], [1], [0, 0, 1, 1], [], []>} : vector<2x32xf32>, vector<32x128xf32>, vector<2x128xf32> -> vector<2x128xf32>
    %92 = arith.addf %91, %17 : vector<2x128xf32>
    %93 = arith.negf %92 : vector<2x128xf32>
    %94 = math.exp %93 : vector<2x128xf32>
    %cst_25 = arith.constant 1.000000e+00 : f32
    %95 = vector.broadcast %cst_25 : f32 to vector<2x128xf32>
    %96 = arith.addf %95, %94 : vector<2x128xf32>
    %97 = arith.divf %95, %96 : vector<2x128xf32>
    %98 = math.tanh %92 : vector<2x128xf32>
    %99 = vector.extract_strided_slice %97 {offsets = [0, 0], sizes = [2, 32], strides = [1, 1]} : vector<2x128xf32> to vector<2x32xf32>
    %100 = vector.extract_strided_slice %97 {offsets = [0, 32], sizes = [2, 32], strides = [1, 1]} : vector<2x128xf32> to vector<2x32xf32>
    %101 = vector.extract_strided_slice %98 {offsets = [0, 64], sizes = [2, 32], strides = [1, 1]} : vector<2x128xf32> to vector<2x32xf32>
    %102 = vector.extract_strided_slice %97 {offsets = [0, 96], sizes = [2, 32], strides = [1, 1]} : vector<2x128xf32> to vector<2x32xf32>
    %103 = arith.mulf %100, %88 : vector<2x32xf32>
    %104 = arith.mulf %99, %101 : vector<2x32xf32>
    %105 = arith.addf %103, %104 : vector<2x32xf32>
    %106 = math.tanh %105 : vector<2x32xf32>
    %107 = arith.mulf %102, %106 : vector<2x32xf32>
    %cst_26 = arith.constant dense<0.000000e+00> : vector<2x128xf32>
    %108 = tpu.matmul %107, %2, %cst_26 {dimension_numbers = #tpu.dot_dimension_numbers<[1], [0], [0], [1], [0, 0, 1, 1], [], []>} : vector<2x32xf32>, vector<32x128xf32>, vector<2x128xf32> -> vector<2x128xf32>
    %109 = arith.addf %108, %18 : vector<2x128xf32>
    %110 = arith.negf %109 : vector<2x128xf32>
    %111 = math.exp %110 : vector<2x128xf32>
    %cst_27 = arith.constant 1.000000e+00 : f32
    %112 = vector.broadcast %cst_27 : f32 to vector<2x128xf32>
    %113 = arith.addf %112, %111 : vector<2x128xf32>
    %114 = arith.divf %112, %113 : vector<2x128xf32>
    %115 = math.tanh %109 : vector<2x128xf32>
    %116 = vector.extract_strided_slice %114 {offsets = [0, 0], sizes = [2, 32], strides = [1, 1]} : vector<2x128xf32> to vector<2x32xf32>
    %117 = vector.extract_strided_slice %114 {offsets = [0, 32], sizes = [2, 32], strides = [1, 1]} : vector<2x128xf32> to vector<2x32xf32>
    %118 = vector.extract_strided_slice %115 {offsets = [0, 64], sizes = [2, 32], strides = [1, 1]} : vector<2x128xf32> to vector<2x32xf32>
    %119 = vector.extract_strided_slice %114 {offsets = [0, 96], sizes = [2, 32], strides = [1, 1]} : vector<2x128xf32> to vector<2x32xf32>
    %120 = arith.mulf %117, %105 : vector<2x32xf32>
    %121 = arith.mulf %116, %118 : vector<2x32xf32>
    %122 = arith.addf %120, %121 : vector<2x32xf32>
    %123 = math.tanh %122 : vector<2x32xf32>
    %124 = arith.mulf %119, %123 : vector<2x32xf32>
    %cst_28 = arith.constant dense<0.000000e+00> : vector<2x128xf32>
    %125 = tpu.matmul %124, %2, %cst_28 {dimension_numbers = #tpu.dot_dimension_numbers<[1], [0], [0], [1], [0, 0, 1, 1], [], []>} : vector<2x32xf32>, vector<32x128xf32>, vector<2x128xf32> -> vector<2x128xf32>
    %126 = arith.addf %125, %19 : vector<2x128xf32>
    %127 = arith.negf %126 : vector<2x128xf32>
    %128 = math.exp %127 : vector<2x128xf32>
    %cst_29 = arith.constant 1.000000e+00 : f32
    %129 = vector.broadcast %cst_29 : f32 to vector<2x128xf32>
    %130 = arith.addf %129, %128 : vector<2x128xf32>
    %131 = arith.divf %129, %130 : vector<2x128xf32>
    %132 = math.tanh %126 : vector<2x128xf32>
    %133 = vector.extract_strided_slice %131 {offsets = [0, 0], sizes = [2, 32], strides = [1, 1]} : vector<2x128xf32> to vector<2x32xf32>
    %134 = vector.extract_strided_slice %131 {offsets = [0, 32], sizes = [2, 32], strides = [1, 1]} : vector<2x128xf32> to vector<2x32xf32>
    %135 = vector.extract_strided_slice %132 {offsets = [0, 64], sizes = [2, 32], strides = [1, 1]} : vector<2x128xf32> to vector<2x32xf32>
    %136 = vector.extract_strided_slice %131 {offsets = [0, 96], sizes = [2, 32], strides = [1, 1]} : vector<2x128xf32> to vector<2x32xf32>
    %137 = arith.mulf %134, %122 : vector<2x32xf32>
    %138 = arith.mulf %133, %135 : vector<2x32xf32>
    %139 = arith.addf %137, %138 : vector<2x32xf32>
    %140 = math.tanh %139 : vector<2x32xf32>
    %141 = arith.mulf %136, %140 : vector<2x32xf32>
    %cst_30 = arith.constant dense<0.000000e+00> : vector<2x128xf32>
    %142 = tpu.matmul %141, %2, %cst_30 {dimension_numbers = #tpu.dot_dimension_numbers<[1], [0], [0], [1], [0, 0, 1, 1], [], []>} : vector<2x32xf32>, vector<32x128xf32>, vector<2x128xf32> -> vector<2x128xf32>
    %143 = arith.addf %142, %20 : vector<2x128xf32>
    %144 = arith.negf %143 : vector<2x128xf32>
    %145 = math.exp %144 : vector<2x128xf32>
    %cst_31 = arith.constant 1.000000e+00 : f32
    %146 = vector.broadcast %cst_31 : f32 to vector<2x128xf32>
    %147 = arith.addf %146, %145 : vector<2x128xf32>
    %148 = arith.divf %146, %147 : vector<2x128xf32>
    %149 = math.tanh %143 : vector<2x128xf32>
    %150 = vector.extract_strided_slice %148 {offsets = [0, 0], sizes = [2, 32], strides = [1, 1]} : vector<2x128xf32> to vector<2x32xf32>
    %151 = vector.extract_strided_slice %148 {offsets = [0, 32], sizes = [2, 32], strides = [1, 1]} : vector<2x128xf32> to vector<2x32xf32>
    %152 = vector.extract_strided_slice %149 {offsets = [0, 64], sizes = [2, 32], strides = [1, 1]} : vector<2x128xf32> to vector<2x32xf32>
    %153 = vector.extract_strided_slice %148 {offsets = [0, 96], sizes = [2, 32], strides = [1, 1]} : vector<2x128xf32> to vector<2x32xf32>
    %154 = arith.mulf %151, %139 : vector<2x32xf32>
    %155 = arith.mulf %150, %152 : vector<2x32xf32>
    %156 = arith.addf %154, %155 : vector<2x32xf32>
    %157 = math.tanh %156 : vector<2x32xf32>
    %158 = arith.mulf %153, %157 : vector<2x32xf32>
    %159 = vector.extract_strided_slice %12 {offsets = [0, 0], sizes = [2, 128], strides = [1, 1]} : vector<16x128xf32> to vector<2x128xf32>
    %160 = vector.extract_strided_slice %12 {offsets = [2, 0], sizes = [2, 128], strides = [1, 1]} : vector<16x128xf32> to vector<2x128xf32>
    %161 = vector.extract_strided_slice %12 {offsets = [4, 0], sizes = [2, 128], strides = [1, 1]} : vector<16x128xf32> to vector<2x128xf32>
    %162 = vector.extract_strided_slice %12 {offsets = [6, 0], sizes = [2, 128], strides = [1, 1]} : vector<16x128xf32> to vector<2x128xf32>
    %163 = vector.extract_strided_slice %12 {offsets = [8, 0], sizes = [2, 128], strides = [1, 1]} : vector<16x128xf32> to vector<2x128xf32>
    %164 = vector.extract_strided_slice %12 {offsets = [10, 0], sizes = [2, 128], strides = [1, 1]} : vector<16x128xf32> to vector<2x128xf32>
    %165 = vector.extract_strided_slice %12 {offsets = [12, 0], sizes = [2, 128], strides = [1, 1]} : vector<16x128xf32> to vector<2x128xf32>
    %166 = vector.extract_strided_slice %12 {offsets = [14, 0], sizes = [2, 128], strides = [1, 1]} : vector<16x128xf32> to vector<2x128xf32>
    %cst_32 = arith.constant 0.000000e+00 : f32
    %167 = vector.broadcast %cst_32 : f32 to vector<2x32xf32>
    %cst_33 = arith.constant 0.000000e+00 : f32
    %168 = vector.broadcast %cst_33 : f32 to vector<2x32xf32>
    %cst_34 = arith.constant dense<0.000000e+00> : vector<2x128xf32>
    %169 = tpu.matmul %167, %5, %cst_34 {dimension_numbers = #tpu.dot_dimension_numbers<[1], [0], [0], [1], [0, 0, 1, 1], [], []>} : vector<2x32xf32>, vector<32x128xf32>, vector<2x128xf32> -> vector<2x128xf32>
    %170 = arith.addf %169, %166 : vector<2x128xf32>
    %171 = arith.negf %170 : vector<2x128xf32>
    %172 = math.exp %171 : vector<2x128xf32>
    %cst_35 = arith.constant 1.000000e+00 : f32
    %173 = vector.broadcast %cst_35 : f32 to vector<2x128xf32>
    %174 = arith.addf %173, %172 : vector<2x128xf32>
    %175 = arith.divf %173, %174 : vector<2x128xf32>
    %176 = math.tanh %170 : vector<2x128xf32>
    %177 = vector.extract_strided_slice %175 {offsets = [0, 0], sizes = [2, 32], strides = [1, 1]} : vector<2x128xf32> to vector<2x32xf32>
    %178 = vector.extract_strided_slice %175 {offsets = [0, 32], sizes = [2, 32], strides = [1, 1]} : vector<2x128xf32> to vector<2x32xf32>
    %179 = vector.extract_strided_slice %176 {offsets = [0, 64], sizes = [2, 32], strides = [1, 1]} : vector<2x128xf32> to vector<2x32xf32>
    %180 = vector.extract_strided_slice %175 {offsets = [0, 96], sizes = [2, 32], strides = [1, 1]} : vector<2x128xf32> to vector<2x32xf32>
    %181 = arith.mulf %178, %168 : vector<2x32xf32>
    %182 = arith.mulf %177, %179 : vector<2x32xf32>
    %183 = arith.addf %181, %182 : vector<2x32xf32>
    %184 = math.tanh %183 : vector<2x32xf32>
    %185 = arith.mulf %180, %184 : vector<2x32xf32>
    %cst_36 = arith.constant dense<0.000000e+00> : vector<2x128xf32>
    %186 = tpu.matmul %185, %5, %cst_36 {dimension_numbers = #tpu.dot_dimension_numbers<[1], [0], [0], [1], [0, 0, 1, 1], [], []>} : vector<2x32xf32>, vector<32x128xf32>, vector<2x128xf32> -> vector<2x128xf32>
    %187 = arith.addf %186, %165 : vector<2x128xf32>
    %188 = arith.negf %187 : vector<2x128xf32>
    %189 = math.exp %188 : vector<2x128xf32>
    %cst_37 = arith.constant 1.000000e+00 : f32
    %190 = vector.broadcast %cst_37 : f32 to vector<2x128xf32>
    %191 = arith.addf %190, %189 : vector<2x128xf32>
    %192 = arith.divf %190, %191 : vector<2x128xf32>
    %193 = math.tanh %187 : vector<2x128xf32>
    %194 = vector.extract_strided_slice %192 {offsets = [0, 0], sizes = [2, 32], strides = [1, 1]} : vector<2x128xf32> to vector<2x32xf32>
    %195 = vector.extract_strided_slice %192 {offsets = [0, 32], sizes = [2, 32], strides = [1, 1]} : vector<2x128xf32> to vector<2x32xf32>
    %196 = vector.extract_strided_slice %193 {offsets = [0, 64], sizes = [2, 32], strides = [1, 1]} : vector<2x128xf32> to vector<2x32xf32>
    %197 = vector.extract_strided_slice %192 {offsets = [0, 96], sizes = [2, 32], strides = [1, 1]} : vector<2x128xf32> to vector<2x32xf32>
    %198 = arith.mulf %195, %183 : vector<2x32xf32>
    %199 = arith.mulf %194, %196 : vector<2x32xf32>
    %200 = arith.addf %198, %199 : vector<2x32xf32>
    %201 = math.tanh %200 : vector<2x32xf32>
    %202 = arith.mulf %197, %201 : vector<2x32xf32>
    %cst_38 = arith.constant dense<0.000000e+00> : vector<2x128xf32>
    %203 = tpu.matmul %202, %5, %cst_38 {dimension_numbers = #tpu.dot_dimension_numbers<[1], [0], [0], [1], [0, 0, 1, 1], [], []>} : vector<2x32xf32>, vector<32x128xf32>, vector<2x128xf32> -> vector<2x128xf32>
    %204 = arith.addf %203, %164 : vector<2x128xf32>
    %205 = arith.negf %204 : vector<2x128xf32>
    %206 = math.exp %205 : vector<2x128xf32>
    %cst_39 = arith.constant 1.000000e+00 : f32
    %207 = vector.broadcast %cst_39 : f32 to vector<2x128xf32>
    %208 = arith.addf %207, %206 : vector<2x128xf32>
    %209 = arith.divf %207, %208 : vector<2x128xf32>
    %210 = math.tanh %204 : vector<2x128xf32>
    %211 = vector.extract_strided_slice %209 {offsets = [0, 0], sizes = [2, 32], strides = [1, 1]} : vector<2x128xf32> to vector<2x32xf32>
    %212 = vector.extract_strided_slice %209 {offsets = [0, 32], sizes = [2, 32], strides = [1, 1]} : vector<2x128xf32> to vector<2x32xf32>
    %213 = vector.extract_strided_slice %210 {offsets = [0, 64], sizes = [2, 32], strides = [1, 1]} : vector<2x128xf32> to vector<2x32xf32>
    %214 = vector.extract_strided_slice %209 {offsets = [0, 96], sizes = [2, 32], strides = [1, 1]} : vector<2x128xf32> to vector<2x32xf32>
    %215 = arith.mulf %212, %200 : vector<2x32xf32>
    %216 = arith.mulf %211, %213 : vector<2x32xf32>
    %217 = arith.addf %215, %216 : vector<2x32xf32>
    %218 = math.tanh %217 : vector<2x32xf32>
    %219 = arith.mulf %214, %218 : vector<2x32xf32>
    %cst_40 = arith.constant dense<0.000000e+00> : vector<2x128xf32>
    %220 = tpu.matmul %219, %5, %cst_40 {dimension_numbers = #tpu.dot_dimension_numbers<[1], [0], [0], [1], [0, 0, 1, 1], [], []>} : vector<2x32xf32>, vector<32x128xf32>, vector<2x128xf32> -> vector<2x128xf32>
    %221 = arith.addf %220, %163 : vector<2x128xf32>
    %222 = arith.negf %221 : vector<2x128xf32>
    %223 = math.exp %222 : vector<2x128xf32>
    %cst_41 = arith.constant 1.000000e+00 : f32
    %224 = vector.broadcast %cst_41 : f32 to vector<2x128xf32>
    %225 = arith.addf %224, %223 : vector<2x128xf32>
    %226 = arith.divf %224, %225 : vector<2x128xf32>
    %227 = math.tanh %221 : vector<2x128xf32>
    %228 = vector.extract_strided_slice %226 {offsets = [0, 0], sizes = [2, 32], strides = [1, 1]} : vector<2x128xf32> to vector<2x32xf32>
    %229 = vector.extract_strided_slice %226 {offsets = [0, 32], sizes = [2, 32], strides = [1, 1]} : vector<2x128xf32> to vector<2x32xf32>
    %230 = vector.extract_strided_slice %227 {offsets = [0, 64], sizes = [2, 32], strides = [1, 1]} : vector<2x128xf32> to vector<2x32xf32>
    %231 = vector.extract_strided_slice %226 {offsets = [0, 96], sizes = [2, 32], strides = [1, 1]} : vector<2x128xf32> to vector<2x32xf32>
    %232 = arith.mulf %229, %217 : vector<2x32xf32>
    %233 = arith.mulf %228, %230 : vector<2x32xf32>
    %234 = arith.addf %232, %233 : vector<2x32xf32>
    %235 = math.tanh %234 : vector<2x32xf32>
    %236 = arith.mulf %231, %235 : vector<2x32xf32>
    %cst_42 = arith.constant dense<0.000000e+00> : vector<2x128xf32>
    %237 = tpu.matmul %236, %5, %cst_42 {dimension_numbers = #tpu.dot_dimension_numbers<[1], [0], [0], [1], [0, 0, 1, 1], [], []>} : vector<2x32xf32>, vector<32x128xf32>, vector<2x128xf32> -> vector<2x128xf32>
    %238 = arith.addf %237, %162 : vector<2x128xf32>
    %239 = arith.negf %238 : vector<2x128xf32>
    %240 = math.exp %239 : vector<2x128xf32>
    %cst_43 = arith.constant 1.000000e+00 : f32
    %241 = vector.broadcast %cst_43 : f32 to vector<2x128xf32>
    %242 = arith.addf %241, %240 : vector<2x128xf32>
    %243 = arith.divf %241, %242 : vector<2x128xf32>
    %244 = math.tanh %238 : vector<2x128xf32>
    %245 = vector.extract_strided_slice %243 {offsets = [0, 0], sizes = [2, 32], strides = [1, 1]} : vector<2x128xf32> to vector<2x32xf32>
    %246 = vector.extract_strided_slice %243 {offsets = [0, 32], sizes = [2, 32], strides = [1, 1]} : vector<2x128xf32> to vector<2x32xf32>
    %247 = vector.extract_strided_slice %244 {offsets = [0, 64], sizes = [2, 32], strides = [1, 1]} : vector<2x128xf32> to vector<2x32xf32>
    %248 = vector.extract_strided_slice %243 {offsets = [0, 96], sizes = [2, 32], strides = [1, 1]} : vector<2x128xf32> to vector<2x32xf32>
    %249 = arith.mulf %246, %234 : vector<2x32xf32>
    %250 = arith.mulf %245, %247 : vector<2x32xf32>
    %251 = arith.addf %249, %250 : vector<2x32xf32>
    %252 = math.tanh %251 : vector<2x32xf32>
    %253 = arith.mulf %248, %252 : vector<2x32xf32>
    %cst_44 = arith.constant dense<0.000000e+00> : vector<2x128xf32>
    %254 = tpu.matmul %253, %5, %cst_44 {dimension_numbers = #tpu.dot_dimension_numbers<[1], [0], [0], [1], [0, 0, 1, 1], [], []>} : vector<2x32xf32>, vector<32x128xf32>, vector<2x128xf32> -> vector<2x128xf32>
    %255 = arith.addf %254, %161 : vector<2x128xf32>
    %256 = arith.negf %255 : vector<2x128xf32>
    %257 = math.exp %256 : vector<2x128xf32>
    %cst_45 = arith.constant 1.000000e+00 : f32
    %258 = vector.broadcast %cst_45 : f32 to vector<2x128xf32>
    %259 = arith.addf %258, %257 : vector<2x128xf32>
    %260 = arith.divf %258, %259 : vector<2x128xf32>
    %261 = math.tanh %255 : vector<2x128xf32>
    %262 = vector.extract_strided_slice %260 {offsets = [0, 0], sizes = [2, 32], strides = [1, 1]} : vector<2x128xf32> to vector<2x32xf32>
    %263 = vector.extract_strided_slice %260 {offsets = [0, 32], sizes = [2, 32], strides = [1, 1]} : vector<2x128xf32> to vector<2x32xf32>
    %264 = vector.extract_strided_slice %261 {offsets = [0, 64], sizes = [2, 32], strides = [1, 1]} : vector<2x128xf32> to vector<2x32xf32>
    %265 = vector.extract_strided_slice %260 {offsets = [0, 96], sizes = [2, 32], strides = [1, 1]} : vector<2x128xf32> to vector<2x32xf32>
    %266 = arith.mulf %263, %251 : vector<2x32xf32>
    %267 = arith.mulf %262, %264 : vector<2x32xf32>
    %268 = arith.addf %266, %267 : vector<2x32xf32>
    %269 = math.tanh %268 : vector<2x32xf32>
    %270 = arith.mulf %265, %269 : vector<2x32xf32>
    %cst_46 = arith.constant dense<0.000000e+00> : vector<2x128xf32>
    %271 = tpu.matmul %270, %5, %cst_46 {dimension_numbers = #tpu.dot_dimension_numbers<[1], [0], [0], [1], [0, 0, 1, 1], [], []>} : vector<2x32xf32>, vector<32x128xf32>, vector<2x128xf32> -> vector<2x128xf32>
    %272 = arith.addf %271, %160 : vector<2x128xf32>
    %273 = arith.negf %272 : vector<2x128xf32>
    %274 = math.exp %273 : vector<2x128xf32>
    %cst_47 = arith.constant 1.000000e+00 : f32
    %275 = vector.broadcast %cst_47 : f32 to vector<2x128xf32>
    %276 = arith.addf %275, %274 : vector<2x128xf32>
    %277 = arith.divf %275, %276 : vector<2x128xf32>
    %278 = math.tanh %272 : vector<2x128xf32>
    %279 = vector.extract_strided_slice %277 {offsets = [0, 0], sizes = [2, 32], strides = [1, 1]} : vector<2x128xf32> to vector<2x32xf32>
    %280 = vector.extract_strided_slice %277 {offsets = [0, 32], sizes = [2, 32], strides = [1, 1]} : vector<2x128xf32> to vector<2x32xf32>
    %281 = vector.extract_strided_slice %278 {offsets = [0, 64], sizes = [2, 32], strides = [1, 1]} : vector<2x128xf32> to vector<2x32xf32>
    %282 = vector.extract_strided_slice %277 {offsets = [0, 96], sizes = [2, 32], strides = [1, 1]} : vector<2x128xf32> to vector<2x32xf32>
    %283 = arith.mulf %280, %268 : vector<2x32xf32>
    %284 = arith.mulf %279, %281 : vector<2x32xf32>
    %285 = arith.addf %283, %284 : vector<2x32xf32>
    %286 = math.tanh %285 : vector<2x32xf32>
    %287 = arith.mulf %282, %286 : vector<2x32xf32>
    %cst_48 = arith.constant dense<0.000000e+00> : vector<2x128xf32>
    %288 = tpu.matmul %287, %5, %cst_48 {dimension_numbers = #tpu.dot_dimension_numbers<[1], [0], [0], [1], [0, 0, 1, 1], [], []>} : vector<2x32xf32>, vector<32x128xf32>, vector<2x128xf32> -> vector<2x128xf32>
    %289 = arith.addf %288, %159 : vector<2x128xf32>
    %290 = arith.negf %289 : vector<2x128xf32>
    %291 = math.exp %290 : vector<2x128xf32>
    %cst_49 = arith.constant 1.000000e+00 : f32
    %292 = vector.broadcast %cst_49 : f32 to vector<2x128xf32>
    %293 = arith.addf %292, %291 : vector<2x128xf32>
    %294 = arith.divf %292, %293 : vector<2x128xf32>
    %295 = math.tanh %289 : vector<2x128xf32>
    %296 = vector.extract_strided_slice %294 {offsets = [0, 0], sizes = [2, 32], strides = [1, 1]} : vector<2x128xf32> to vector<2x32xf32>
    %297 = vector.extract_strided_slice %294 {offsets = [0, 32], sizes = [2, 32], strides = [1, 1]} : vector<2x128xf32> to vector<2x32xf32>
    %298 = vector.extract_strided_slice %295 {offsets = [0, 64], sizes = [2, 32], strides = [1, 1]} : vector<2x128xf32> to vector<2x32xf32>
    %299 = vector.extract_strided_slice %294 {offsets = [0, 96], sizes = [2, 32], strides = [1, 1]} : vector<2x128xf32> to vector<2x32xf32>
    %300 = arith.mulf %297, %285 : vector<2x32xf32>
    %301 = arith.mulf %296, %298 : vector<2x32xf32>
    %302 = arith.addf %300, %301 : vector<2x32xf32>
    %303 = math.tanh %302 : vector<2x32xf32>
    %304 = arith.mulf %299, %303 : vector<2x32xf32>
    %305 = tpu.concatenate %39, %56, %73, %90, %107, %124, %141, %158 in 0 : vector<2x32xf32>, vector<2x32xf32>, vector<2x32xf32>, vector<2x32xf32>, vector<2x32xf32>, vector<2x32xf32>, vector<2x32xf32>, vector<2x32xf32> -> vector<16x32xf32>
    %306 = tpu.concatenate %304, %287, %270, %253, %236, %219, %202, %185 in 0 : vector<2x32xf32>, vector<2x32xf32>, vector<2x32xf32>, vector<2x32xf32>, vector<2x32xf32>, vector<2x32xf32>, vector<2x32xf32>, vector<2x32xf32> -> vector<16x32xf32>
    %c0_50 = arith.constant 0 : index
    %c0_51 = arith.constant 0 : index
    %307 = vector.load %arg7[%c0_50, %c0_51] : memref<64x128xf32, #tpu.memory_space<vmem>>, vector<64x128xf32>
    %c0_52 = arith.constant 0 : index
    %c0_53 = arith.constant 0 : index
    %308 = vector.load %arg8[%c0_52, %c0_53] : memref<32x128xf32, #tpu.memory_space<vmem>>, vector<32x128xf32>
    %c0_54 = arith.constant 0 : index
    %c0_55 = arith.constant 0 : index
    %309 = vector.load %arg9[%c0_54, %c0_55] : memref<1x128xf32, #tpu.memory_space<vmem>>, vector<1x128xf32>
    %c0_56 = arith.constant 0 : index
    %c0_57 = arith.constant 0 : index
    %310 = vector.load %arg10[%c0_56, %c0_57] : memref<64x128xf32, #tpu.memory_space<vmem>>, vector<64x128xf32>
    %c0_58 = arith.constant 0 : index
    %c0_59 = arith.constant 0 : index
    %311 = vector.load %arg11[%c0_58, %c0_59] : memref<32x128xf32, #tpu.memory_space<vmem>>, vector<32x128xf32>
    %c0_60 = arith.constant 0 : index
    %c0_61 = arith.constant 0 : index
    %312 = vector.load %arg12[%c0_60, %c0_61] : memref<1x128xf32, #tpu.memory_space<vmem>>, vector<1x128xf32>
    %313 = vector.extract_strided_slice %307 {offsets = [0, 0], sizes = [32, 128], strides = [1, 1]} : vector<64x128xf32> to vector<32x128xf32>
    %cst_62 = arith.constant dense<0.000000e+00> : vector<16x128xf32>
    %314 = tpu.matmul %305, %313, %cst_62 {dimension_numbers = #tpu.dot_dimension_numbers<[1], [0], [0], [1], [0, 0, 1, 1], [], []>} : vector<16x32xf32>, vector<32x128xf32>, vector<16x128xf32> -> vector<16x128xf32>
    %315 = vector.extract_strided_slice %307 {offsets = [32, 0], sizes = [32, 128], strides = [1, 1]} : vector<64x128xf32> to vector<32x128xf32>
    %cst_63 = arith.constant dense<0.000000e+00> : vector<16x128xf32>
    %316 = tpu.matmul %306, %315, %cst_63 {dimension_numbers = #tpu.dot_dimension_numbers<[1], [0], [0], [1], [0, 0, 1, 1], [], []>} : vector<16x32xf32>, vector<32x128xf32>, vector<16x128xf32> -> vector<16x128xf32>
    %317 = arith.addf %314, %316 : vector<16x128xf32>
    %318 = vector.broadcast %309 : vector<1x128xf32> to vector<16x128xf32>
    %319 = arith.addf %317, %318 : vector<16x128xf32>
    %320 = vector.extract_strided_slice %310 {offsets = [0, 0], sizes = [32, 128], strides = [1, 1]} : vector<64x128xf32> to vector<32x128xf32>
    %cst_64 = arith.constant dense<0.000000e+00> : vector<16x128xf32>
    %321 = tpu.matmul %305, %320, %cst_64 {dimension_numbers = #tpu.dot_dimension_numbers<[1], [0], [0], [1], [0, 0, 1, 1], [], []>} : vector<16x32xf32>, vector<32x128xf32>, vector<16x128xf32> -> vector<16x128xf32>
    %322 = vector.extract_strided_slice %310 {offsets = [32, 0], sizes = [32, 128], strides = [1, 1]} : vector<64x128xf32> to vector<32x128xf32>
    %cst_65 = arith.constant dense<0.000000e+00> : vector<16x128xf32>
    %323 = tpu.matmul %306, %322, %cst_65 {dimension_numbers = #tpu.dot_dimension_numbers<[1], [0], [0], [1], [0, 0, 1, 1], [], []>} : vector<16x32xf32>, vector<32x128xf32>, vector<16x128xf32> -> vector<16x128xf32>
    %324 = arith.addf %321, %323 : vector<16x128xf32>
    %325 = vector.broadcast %312 : vector<1x128xf32> to vector<16x128xf32>
    %326 = arith.addf %324, %325 : vector<16x128xf32>
    %327 = vector.extract_strided_slice %319 {offsets = [0, 0], sizes = [2, 128], strides = [1, 1]} : vector<16x128xf32> to vector<2x128xf32>
    %328 = vector.extract_strided_slice %319 {offsets = [2, 0], sizes = [2, 128], strides = [1, 1]} : vector<16x128xf32> to vector<2x128xf32>
    %329 = vector.extract_strided_slice %319 {offsets = [4, 0], sizes = [2, 128], strides = [1, 1]} : vector<16x128xf32> to vector<2x128xf32>
    %330 = vector.extract_strided_slice %319 {offsets = [6, 0], sizes = [2, 128], strides = [1, 1]} : vector<16x128xf32> to vector<2x128xf32>
    %331 = vector.extract_strided_slice %319 {offsets = [8, 0], sizes = [2, 128], strides = [1, 1]} : vector<16x128xf32> to vector<2x128xf32>
    %332 = vector.extract_strided_slice %319 {offsets = [10, 0], sizes = [2, 128], strides = [1, 1]} : vector<16x128xf32> to vector<2x128xf32>
    %333 = vector.extract_strided_slice %319 {offsets = [12, 0], sizes = [2, 128], strides = [1, 1]} : vector<16x128xf32> to vector<2x128xf32>
    %334 = vector.extract_strided_slice %319 {offsets = [14, 0], sizes = [2, 128], strides = [1, 1]} : vector<16x128xf32> to vector<2x128xf32>
    %cst_66 = arith.constant 0.000000e+00 : f32
    %335 = vector.broadcast %cst_66 : f32 to vector<2x32xf32>
    %cst_67 = arith.constant 0.000000e+00 : f32
    %336 = vector.broadcast %cst_67 : f32 to vector<2x32xf32>
    %cst_68 = arith.constant dense<0.000000e+00> : vector<2x128xf32>
    %337 = tpu.matmul %335, %308, %cst_68 {dimension_numbers = #tpu.dot_dimension_numbers<[1], [0], [0], [1], [0, 0, 1, 1], [], []>} : vector<2x32xf32>, vector<32x128xf32>, vector<2x128xf32> -> vector<2x128xf32>
    %338 = arith.addf %337, %327 : vector<2x128xf32>
    %339 = arith.negf %338 : vector<2x128xf32>
    %340 = math.exp %339 : vector<2x128xf32>
    %cst_69 = arith.constant 1.000000e+00 : f32
    %341 = vector.broadcast %cst_69 : f32 to vector<2x128xf32>
    %342 = arith.addf %341, %340 : vector<2x128xf32>
    %343 = arith.divf %341, %342 : vector<2x128xf32>
    %344 = math.tanh %338 : vector<2x128xf32>
    %345 = vector.extract_strided_slice %343 {offsets = [0, 0], sizes = [2, 32], strides = [1, 1]} : vector<2x128xf32> to vector<2x32xf32>
    %346 = vector.extract_strided_slice %343 {offsets = [0, 32], sizes = [2, 32], strides = [1, 1]} : vector<2x128xf32> to vector<2x32xf32>
    %347 = vector.extract_strided_slice %344 {offsets = [0, 64], sizes = [2, 32], strides = [1, 1]} : vector<2x128xf32> to vector<2x32xf32>
    %348 = vector.extract_strided_slice %343 {offsets = [0, 96], sizes = [2, 32], strides = [1, 1]} : vector<2x128xf32> to vector<2x32xf32>
    %349 = arith.mulf %346, %336 : vector<2x32xf32>
    %350 = arith.mulf %345, %347 : vector<2x32xf32>
    %351 = arith.addf %349, %350 : vector<2x32xf32>
    %352 = math.tanh %351 : vector<2x32xf32>
    %353 = arith.mulf %348, %352 : vector<2x32xf32>
    %cst_70 = arith.constant dense<0.000000e+00> : vector<2x128xf32>
    %354 = tpu.matmul %353, %308, %cst_70 {dimension_numbers = #tpu.dot_dimension_numbers<[1], [0], [0], [1], [0, 0, 1, 1], [], []>} : vector<2x32xf32>, vector<32x128xf32>, vector<2x128xf32> -> vector<2x128xf32>
    %355 = arith.addf %354, %328 : vector<2x128xf32>
    %356 = arith.negf %355 : vector<2x128xf32>
    %357 = math.exp %356 : vector<2x128xf32>
    %cst_71 = arith.constant 1.000000e+00 : f32
    %358 = vector.broadcast %cst_71 : f32 to vector<2x128xf32>
    %359 = arith.addf %358, %357 : vector<2x128xf32>
    %360 = arith.divf %358, %359 : vector<2x128xf32>
    %361 = math.tanh %355 : vector<2x128xf32>
    %362 = vector.extract_strided_slice %360 {offsets = [0, 0], sizes = [2, 32], strides = [1, 1]} : vector<2x128xf32> to vector<2x32xf32>
    %363 = vector.extract_strided_slice %360 {offsets = [0, 32], sizes = [2, 32], strides = [1, 1]} : vector<2x128xf32> to vector<2x32xf32>
    %364 = vector.extract_strided_slice %361 {offsets = [0, 64], sizes = [2, 32], strides = [1, 1]} : vector<2x128xf32> to vector<2x32xf32>
    %365 = vector.extract_strided_slice %360 {offsets = [0, 96], sizes = [2, 32], strides = [1, 1]} : vector<2x128xf32> to vector<2x32xf32>
    %366 = arith.mulf %363, %351 : vector<2x32xf32>
    %367 = arith.mulf %362, %364 : vector<2x32xf32>
    %368 = arith.addf %366, %367 : vector<2x32xf32>
    %369 = math.tanh %368 : vector<2x32xf32>
    %370 = arith.mulf %365, %369 : vector<2x32xf32>
    %cst_72 = arith.constant dense<0.000000e+00> : vector<2x128xf32>
    %371 = tpu.matmul %370, %308, %cst_72 {dimension_numbers = #tpu.dot_dimension_numbers<[1], [0], [0], [1], [0, 0, 1, 1], [], []>} : vector<2x32xf32>, vector<32x128xf32>, vector<2x128xf32> -> vector<2x128xf32>
    %372 = arith.addf %371, %329 : vector<2x128xf32>
    %373 = arith.negf %372 : vector<2x128xf32>
    %374 = math.exp %373 : vector<2x128xf32>
    %cst_73 = arith.constant 1.000000e+00 : f32
    %375 = vector.broadcast %cst_73 : f32 to vector<2x128xf32>
    %376 = arith.addf %375, %374 : vector<2x128xf32>
    %377 = arith.divf %375, %376 : vector<2x128xf32>
    %378 = math.tanh %372 : vector<2x128xf32>
    %379 = vector.extract_strided_slice %377 {offsets = [0, 0], sizes = [2, 32], strides = [1, 1]} : vector<2x128xf32> to vector<2x32xf32>
    %380 = vector.extract_strided_slice %377 {offsets = [0, 32], sizes = [2, 32], strides = [1, 1]} : vector<2x128xf32> to vector<2x32xf32>
    %381 = vector.extract_strided_slice %378 {offsets = [0, 64], sizes = [2, 32], strides = [1, 1]} : vector<2x128xf32> to vector<2x32xf32>
    %382 = vector.extract_strided_slice %377 {offsets = [0, 96], sizes = [2, 32], strides = [1, 1]} : vector<2x128xf32> to vector<2x32xf32>
    %383 = arith.mulf %380, %368 : vector<2x32xf32>
    %384 = arith.mulf %379, %381 : vector<2x32xf32>
    %385 = arith.addf %383, %384 : vector<2x32xf32>
    %386 = math.tanh %385 : vector<2x32xf32>
    %387 = arith.mulf %382, %386 : vector<2x32xf32>
    %cst_74 = arith.constant dense<0.000000e+00> : vector<2x128xf32>
    %388 = tpu.matmul %387, %308, %cst_74 {dimension_numbers = #tpu.dot_dimension_numbers<[1], [0], [0], [1], [0, 0, 1, 1], [], []>} : vector<2x32xf32>, vector<32x128xf32>, vector<2x128xf32> -> vector<2x128xf32>
    %389 = arith.addf %388, %330 : vector<2x128xf32>
    %390 = arith.negf %389 : vector<2x128xf32>
    %391 = math.exp %390 : vector<2x128xf32>
    %cst_75 = arith.constant 1.000000e+00 : f32
    %392 = vector.broadcast %cst_75 : f32 to vector<2x128xf32>
    %393 = arith.addf %392, %391 : vector<2x128xf32>
    %394 = arith.divf %392, %393 : vector<2x128xf32>
    %395 = math.tanh %389 : vector<2x128xf32>
    %396 = vector.extract_strided_slice %394 {offsets = [0, 0], sizes = [2, 32], strides = [1, 1]} : vector<2x128xf32> to vector<2x32xf32>
    %397 = vector.extract_strided_slice %394 {offsets = [0, 32], sizes = [2, 32], strides = [1, 1]} : vector<2x128xf32> to vector<2x32xf32>
    %398 = vector.extract_strided_slice %395 {offsets = [0, 64], sizes = [2, 32], strides = [1, 1]} : vector<2x128xf32> to vector<2x32xf32>
    %399 = vector.extract_strided_slice %394 {offsets = [0, 96], sizes = [2, 32], strides = [1, 1]} : vector<2x128xf32> to vector<2x32xf32>
    %400 = arith.mulf %397, %385 : vector<2x32xf32>
    %401 = arith.mulf %396, %398 : vector<2x32xf32>
    %402 = arith.addf %400, %401 : vector<2x32xf32>
    %403 = math.tanh %402 : vector<2x32xf32>
    %404 = arith.mulf %399, %403 : vector<2x32xf32>
    %cst_76 = arith.constant dense<0.000000e+00> : vector<2x128xf32>
    %405 = tpu.matmul %404, %308, %cst_76 {dimension_numbers = #tpu.dot_dimension_numbers<[1], [0], [0], [1], [0, 0, 1, 1], [], []>} : vector<2x32xf32>, vector<32x128xf32>, vector<2x128xf32> -> vector<2x128xf32>
    %406 = arith.addf %405, %331 : vector<2x128xf32>
    %407 = arith.negf %406 : vector<2x128xf32>
    %408 = math.exp %407 : vector<2x128xf32>
    %cst_77 = arith.constant 1.000000e+00 : f32
    %409 = vector.broadcast %cst_77 : f32 to vector<2x128xf32>
    %410 = arith.addf %409, %408 : vector<2x128xf32>
    %411 = arith.divf %409, %410 : vector<2x128xf32>
    %412 = math.tanh %406 : vector<2x128xf32>
    %413 = vector.extract_strided_slice %411 {offsets = [0, 0], sizes = [2, 32], strides = [1, 1]} : vector<2x128xf32> to vector<2x32xf32>
    %414 = vector.extract_strided_slice %411 {offsets = [0, 32], sizes = [2, 32], strides = [1, 1]} : vector<2x128xf32> to vector<2x32xf32>
    %415 = vector.extract_strided_slice %412 {offsets = [0, 64], sizes = [2, 32], strides = [1, 1]} : vector<2x128xf32> to vector<2x32xf32>
    %416 = vector.extract_strided_slice %411 {offsets = [0, 96], sizes = [2, 32], strides = [1, 1]} : vector<2x128xf32> to vector<2x32xf32>
    %417 = arith.mulf %414, %402 : vector<2x32xf32>
    %418 = arith.mulf %413, %415 : vector<2x32xf32>
    %419 = arith.addf %417, %418 : vector<2x32xf32>
    %420 = math.tanh %419 : vector<2x32xf32>
    %421 = arith.mulf %416, %420 : vector<2x32xf32>
    %cst_78 = arith.constant dense<0.000000e+00> : vector<2x128xf32>
    %422 = tpu.matmul %421, %308, %cst_78 {dimension_numbers = #tpu.dot_dimension_numbers<[1], [0], [0], [1], [0, 0, 1, 1], [], []>} : vector<2x32xf32>, vector<32x128xf32>, vector<2x128xf32> -> vector<2x128xf32>
    %423 = arith.addf %422, %332 : vector<2x128xf32>
    %424 = arith.negf %423 : vector<2x128xf32>
    %425 = math.exp %424 : vector<2x128xf32>
    %cst_79 = arith.constant 1.000000e+00 : f32
    %426 = vector.broadcast %cst_79 : f32 to vector<2x128xf32>
    %427 = arith.addf %426, %425 : vector<2x128xf32>
    %428 = arith.divf %426, %427 : vector<2x128xf32>
    %429 = math.tanh %423 : vector<2x128xf32>
    %430 = vector.extract_strided_slice %428 {offsets = [0, 0], sizes = [2, 32], strides = [1, 1]} : vector<2x128xf32> to vector<2x32xf32>
    %431 = vector.extract_strided_slice %428 {offsets = [0, 32], sizes = [2, 32], strides = [1, 1]} : vector<2x128xf32> to vector<2x32xf32>
    %432 = vector.extract_strided_slice %429 {offsets = [0, 64], sizes = [2, 32], strides = [1, 1]} : vector<2x128xf32> to vector<2x32xf32>
    %433 = vector.extract_strided_slice %428 {offsets = [0, 96], sizes = [2, 32], strides = [1, 1]} : vector<2x128xf32> to vector<2x32xf32>
    %434 = arith.mulf %431, %419 : vector<2x32xf32>
    %435 = arith.mulf %430, %432 : vector<2x32xf32>
    %436 = arith.addf %434, %435 : vector<2x32xf32>
    %437 = math.tanh %436 : vector<2x32xf32>
    %438 = arith.mulf %433, %437 : vector<2x32xf32>
    %cst_80 = arith.constant dense<0.000000e+00> : vector<2x128xf32>
    %439 = tpu.matmul %438, %308, %cst_80 {dimension_numbers = #tpu.dot_dimension_numbers<[1], [0], [0], [1], [0, 0, 1, 1], [], []>} : vector<2x32xf32>, vector<32x128xf32>, vector<2x128xf32> -> vector<2x128xf32>
    %440 = arith.addf %439, %333 : vector<2x128xf32>
    %441 = arith.negf %440 : vector<2x128xf32>
    %442 = math.exp %441 : vector<2x128xf32>
    %cst_81 = arith.constant 1.000000e+00 : f32
    %443 = vector.broadcast %cst_81 : f32 to vector<2x128xf32>
    %444 = arith.addf %443, %442 : vector<2x128xf32>
    %445 = arith.divf %443, %444 : vector<2x128xf32>
    %446 = math.tanh %440 : vector<2x128xf32>
    %447 = vector.extract_strided_slice %445 {offsets = [0, 0], sizes = [2, 32], strides = [1, 1]} : vector<2x128xf32> to vector<2x32xf32>
    %448 = vector.extract_strided_slice %445 {offsets = [0, 32], sizes = [2, 32], strides = [1, 1]} : vector<2x128xf32> to vector<2x32xf32>
    %449 = vector.extract_strided_slice %446 {offsets = [0, 64], sizes = [2, 32], strides = [1, 1]} : vector<2x128xf32> to vector<2x32xf32>
    %450 = vector.extract_strided_slice %445 {offsets = [0, 96], sizes = [2, 32], strides = [1, 1]} : vector<2x128xf32> to vector<2x32xf32>
    %451 = arith.mulf %448, %436 : vector<2x32xf32>
    %452 = arith.mulf %447, %449 : vector<2x32xf32>
    %453 = arith.addf %451, %452 : vector<2x32xf32>
    %454 = math.tanh %453 : vector<2x32xf32>
    %455 = arith.mulf %450, %454 : vector<2x32xf32>
    %cst_82 = arith.constant dense<0.000000e+00> : vector<2x128xf32>
    %456 = tpu.matmul %455, %308, %cst_82 {dimension_numbers = #tpu.dot_dimension_numbers<[1], [0], [0], [1], [0, 0, 1, 1], [], []>} : vector<2x32xf32>, vector<32x128xf32>, vector<2x128xf32> -> vector<2x128xf32>
    %457 = arith.addf %456, %334 : vector<2x128xf32>
    %458 = arith.negf %457 : vector<2x128xf32>
    %459 = math.exp %458 : vector<2x128xf32>
    %cst_83 = arith.constant 1.000000e+00 : f32
    %460 = vector.broadcast %cst_83 : f32 to vector<2x128xf32>
    %461 = arith.addf %460, %459 : vector<2x128xf32>
    %462 = arith.divf %460, %461 : vector<2x128xf32>
    %463 = math.tanh %457 : vector<2x128xf32>
    %464 = vector.extract_strided_slice %462 {offsets = [0, 0], sizes = [2, 32], strides = [1, 1]} : vector<2x128xf32> to vector<2x32xf32>
    %465 = vector.extract_strided_slice %462 {offsets = [0, 32], sizes = [2, 32], strides = [1, 1]} : vector<2x128xf32> to vector<2x32xf32>
    %466 = vector.extract_strided_slice %463 {offsets = [0, 64], sizes = [2, 32], strides = [1, 1]} : vector<2x128xf32> to vector<2x32xf32>
    %467 = vector.extract_strided_slice %462 {offsets = [0, 96], sizes = [2, 32], strides = [1, 1]} : vector<2x128xf32> to vector<2x32xf32>
    %468 = arith.mulf %465, %453 : vector<2x32xf32>
    %469 = arith.mulf %464, %466 : vector<2x32xf32>
    %470 = arith.addf %468, %469 : vector<2x32xf32>
    %471 = math.tanh %470 : vector<2x32xf32>
    %472 = arith.mulf %467, %471 : vector<2x32xf32>
    %473 = vector.extract_strided_slice %326 {offsets = [0, 0], sizes = [2, 128], strides = [1, 1]} : vector<16x128xf32> to vector<2x128xf32>
    %474 = vector.extract_strided_slice %326 {offsets = [2, 0], sizes = [2, 128], strides = [1, 1]} : vector<16x128xf32> to vector<2x128xf32>
    %475 = vector.extract_strided_slice %326 {offsets = [4, 0], sizes = [2, 128], strides = [1, 1]} : vector<16x128xf32> to vector<2x128xf32>
    %476 = vector.extract_strided_slice %326 {offsets = [6, 0], sizes = [2, 128], strides = [1, 1]} : vector<16x128xf32> to vector<2x128xf32>
    %477 = vector.extract_strided_slice %326 {offsets = [8, 0], sizes = [2, 128], strides = [1, 1]} : vector<16x128xf32> to vector<2x128xf32>
    %478 = vector.extract_strided_slice %326 {offsets = [10, 0], sizes = [2, 128], strides = [1, 1]} : vector<16x128xf32> to vector<2x128xf32>
    %479 = vector.extract_strided_slice %326 {offsets = [12, 0], sizes = [2, 128], strides = [1, 1]} : vector<16x128xf32> to vector<2x128xf32>
    %480 = vector.extract_strided_slice %326 {offsets = [14, 0], sizes = [2, 128], strides = [1, 1]} : vector<16x128xf32> to vector<2x128xf32>
    %cst_84 = arith.constant 0.000000e+00 : f32
    %481 = vector.broadcast %cst_84 : f32 to vector<2x32xf32>
    %cst_85 = arith.constant 0.000000e+00 : f32
    %482 = vector.broadcast %cst_85 : f32 to vector<2x32xf32>
    %cst_86 = arith.constant dense<0.000000e+00> : vector<2x128xf32>
    %483 = tpu.matmul %481, %311, %cst_86 {dimension_numbers = #tpu.dot_dimension_numbers<[1], [0], [0], [1], [0, 0, 1, 1], [], []>} : vector<2x32xf32>, vector<32x128xf32>, vector<2x128xf32> -> vector<2x128xf32>
    %484 = arith.addf %483, %480 : vector<2x128xf32>
    %485 = arith.negf %484 : vector<2x128xf32>
    %486 = math.exp %485 : vector<2x128xf32>
    %cst_87 = arith.constant 1.000000e+00 : f32
    %487 = vector.broadcast %cst_87 : f32 to vector<2x128xf32>
    %488 = arith.addf %487, %486 : vector<2x128xf32>
    %489 = arith.divf %487, %488 : vector<2x128xf32>
    %490 = math.tanh %484 : vector<2x128xf32>
    %491 = vector.extract_strided_slice %489 {offsets = [0, 0], sizes = [2, 32], strides = [1, 1]} : vector<2x128xf32> to vector<2x32xf32>
    %492 = vector.extract_strided_slice %489 {offsets = [0, 32], sizes = [2, 32], strides = [1, 1]} : vector<2x128xf32> to vector<2x32xf32>
    %493 = vector.extract_strided_slice %490 {offsets = [0, 64], sizes = [2, 32], strides = [1, 1]} : vector<2x128xf32> to vector<2x32xf32>
    %494 = vector.extract_strided_slice %489 {offsets = [0, 96], sizes = [2, 32], strides = [1, 1]} : vector<2x128xf32> to vector<2x32xf32>
    %495 = arith.mulf %492, %482 : vector<2x32xf32>
    %496 = arith.mulf %491, %493 : vector<2x32xf32>
    %497 = arith.addf %495, %496 : vector<2x32xf32>
    %498 = math.tanh %497 : vector<2x32xf32>
    %499 = arith.mulf %494, %498 : vector<2x32xf32>
    %cst_88 = arith.constant dense<0.000000e+00> : vector<2x128xf32>
    %500 = tpu.matmul %499, %311, %cst_88 {dimension_numbers = #tpu.dot_dimension_numbers<[1], [0], [0], [1], [0, 0, 1, 1], [], []>} : vector<2x32xf32>, vector<32x128xf32>, vector<2x128xf32> -> vector<2x128xf32>
    %501 = arith.addf %500, %479 : vector<2x128xf32>
    %502 = arith.negf %501 : vector<2x128xf32>
    %503 = math.exp %502 : vector<2x128xf32>
    %cst_89 = arith.constant 1.000000e+00 : f32
    %504 = vector.broadcast %cst_89 : f32 to vector<2x128xf32>
    %505 = arith.addf %504, %503 : vector<2x128xf32>
    %506 = arith.divf %504, %505 : vector<2x128xf32>
    %507 = math.tanh %501 : vector<2x128xf32>
    %508 = vector.extract_strided_slice %506 {offsets = [0, 0], sizes = [2, 32], strides = [1, 1]} : vector<2x128xf32> to vector<2x32xf32>
    %509 = vector.extract_strided_slice %506 {offsets = [0, 32], sizes = [2, 32], strides = [1, 1]} : vector<2x128xf32> to vector<2x32xf32>
    %510 = vector.extract_strided_slice %507 {offsets = [0, 64], sizes = [2, 32], strides = [1, 1]} : vector<2x128xf32> to vector<2x32xf32>
    %511 = vector.extract_strided_slice %506 {offsets = [0, 96], sizes = [2, 32], strides = [1, 1]} : vector<2x128xf32> to vector<2x32xf32>
    %512 = arith.mulf %509, %497 : vector<2x32xf32>
    %513 = arith.mulf %508, %510 : vector<2x32xf32>
    %514 = arith.addf %512, %513 : vector<2x32xf32>
    %515 = math.tanh %514 : vector<2x32xf32>
    %516 = arith.mulf %511, %515 : vector<2x32xf32>
    %cst_90 = arith.constant dense<0.000000e+00> : vector<2x128xf32>
    %517 = tpu.matmul %516, %311, %cst_90 {dimension_numbers = #tpu.dot_dimension_numbers<[1], [0], [0], [1], [0, 0, 1, 1], [], []>} : vector<2x32xf32>, vector<32x128xf32>, vector<2x128xf32> -> vector<2x128xf32>
    %518 = arith.addf %517, %478 : vector<2x128xf32>
    %519 = arith.negf %518 : vector<2x128xf32>
    %520 = math.exp %519 : vector<2x128xf32>
    %cst_91 = arith.constant 1.000000e+00 : f32
    %521 = vector.broadcast %cst_91 : f32 to vector<2x128xf32>
    %522 = arith.addf %521, %520 : vector<2x128xf32>
    %523 = arith.divf %521, %522 : vector<2x128xf32>
    %524 = math.tanh %518 : vector<2x128xf32>
    %525 = vector.extract_strided_slice %523 {offsets = [0, 0], sizes = [2, 32], strides = [1, 1]} : vector<2x128xf32> to vector<2x32xf32>
    %526 = vector.extract_strided_slice %523 {offsets = [0, 32], sizes = [2, 32], strides = [1, 1]} : vector<2x128xf32> to vector<2x32xf32>
    %527 = vector.extract_strided_slice %524 {offsets = [0, 64], sizes = [2, 32], strides = [1, 1]} : vector<2x128xf32> to vector<2x32xf32>
    %528 = vector.extract_strided_slice %523 {offsets = [0, 96], sizes = [2, 32], strides = [1, 1]} : vector<2x128xf32> to vector<2x32xf32>
    %529 = arith.mulf %526, %514 : vector<2x32xf32>
    %530 = arith.mulf %525, %527 : vector<2x32xf32>
    %531 = arith.addf %529, %530 : vector<2x32xf32>
    %532 = math.tanh %531 : vector<2x32xf32>
    %533 = arith.mulf %528, %532 : vector<2x32xf32>
    %cst_92 = arith.constant dense<0.000000e+00> : vector<2x128xf32>
    %534 = tpu.matmul %533, %311, %cst_92 {dimension_numbers = #tpu.dot_dimension_numbers<[1], [0], [0], [1], [0, 0, 1, 1], [], []>} : vector<2x32xf32>, vector<32x128xf32>, vector<2x128xf32> -> vector<2x128xf32>
    %535 = arith.addf %534, %477 : vector<2x128xf32>
    %536 = arith.negf %535 : vector<2x128xf32>
    %537 = math.exp %536 : vector<2x128xf32>
    %cst_93 = arith.constant 1.000000e+00 : f32
    %538 = vector.broadcast %cst_93 : f32 to vector<2x128xf32>
    %539 = arith.addf %538, %537 : vector<2x128xf32>
    %540 = arith.divf %538, %539 : vector<2x128xf32>
    %541 = math.tanh %535 : vector<2x128xf32>
    %542 = vector.extract_strided_slice %540 {offsets = [0, 0], sizes = [2, 32], strides = [1, 1]} : vector<2x128xf32> to vector<2x32xf32>
    %543 = vector.extract_strided_slice %540 {offsets = [0, 32], sizes = [2, 32], strides = [1, 1]} : vector<2x128xf32> to vector<2x32xf32>
    %544 = vector.extract_strided_slice %541 {offsets = [0, 64], sizes = [2, 32], strides = [1, 1]} : vector<2x128xf32> to vector<2x32xf32>
    %545 = vector.extract_strided_slice %540 {offsets = [0, 96], sizes = [2, 32], strides = [1, 1]} : vector<2x128xf32> to vector<2x32xf32>
    %546 = arith.mulf %543, %531 : vector<2x32xf32>
    %547 = arith.mulf %542, %544 : vector<2x32xf32>
    %548 = arith.addf %546, %547 : vector<2x32xf32>
    %549 = math.tanh %548 : vector<2x32xf32>
    %550 = arith.mulf %545, %549 : vector<2x32xf32>
    %cst_94 = arith.constant dense<0.000000e+00> : vector<2x128xf32>
    %551 = tpu.matmul %550, %311, %cst_94 {dimension_numbers = #tpu.dot_dimension_numbers<[1], [0], [0], [1], [0, 0, 1, 1], [], []>} : vector<2x32xf32>, vector<32x128xf32>, vector<2x128xf32> -> vector<2x128xf32>
    %552 = arith.addf %551, %476 : vector<2x128xf32>
    %553 = arith.negf %552 : vector<2x128xf32>
    %554 = math.exp %553 : vector<2x128xf32>
    %cst_95 = arith.constant 1.000000e+00 : f32
    %555 = vector.broadcast %cst_95 : f32 to vector<2x128xf32>
    %556 = arith.addf %555, %554 : vector<2x128xf32>
    %557 = arith.divf %555, %556 : vector<2x128xf32>
    %558 = math.tanh %552 : vector<2x128xf32>
    %559 = vector.extract_strided_slice %557 {offsets = [0, 0], sizes = [2, 32], strides = [1, 1]} : vector<2x128xf32> to vector<2x32xf32>
    %560 = vector.extract_strided_slice %557 {offsets = [0, 32], sizes = [2, 32], strides = [1, 1]} : vector<2x128xf32> to vector<2x32xf32>
    %561 = vector.extract_strided_slice %558 {offsets = [0, 64], sizes = [2, 32], strides = [1, 1]} : vector<2x128xf32> to vector<2x32xf32>
    %562 = vector.extract_strided_slice %557 {offsets = [0, 96], sizes = [2, 32], strides = [1, 1]} : vector<2x128xf32> to vector<2x32xf32>
    %563 = arith.mulf %560, %548 : vector<2x32xf32>
    %564 = arith.mulf %559, %561 : vector<2x32xf32>
    %565 = arith.addf %563, %564 : vector<2x32xf32>
    %566 = math.tanh %565 : vector<2x32xf32>
    %567 = arith.mulf %562, %566 : vector<2x32xf32>
    %cst_96 = arith.constant dense<0.000000e+00> : vector<2x128xf32>
    %568 = tpu.matmul %567, %311, %cst_96 {dimension_numbers = #tpu.dot_dimension_numbers<[1], [0], [0], [1], [0, 0, 1, 1], [], []>} : vector<2x32xf32>, vector<32x128xf32>, vector<2x128xf32> -> vector<2x128xf32>
    %569 = arith.addf %568, %475 : vector<2x128xf32>
    %570 = arith.negf %569 : vector<2x128xf32>
    %571 = math.exp %570 : vector<2x128xf32>
    %cst_97 = arith.constant 1.000000e+00 : f32
    %572 = vector.broadcast %cst_97 : f32 to vector<2x128xf32>
    %573 = arith.addf %572, %571 : vector<2x128xf32>
    %574 = arith.divf %572, %573 : vector<2x128xf32>
    %575 = math.tanh %569 : vector<2x128xf32>
    %576 = vector.extract_strided_slice %574 {offsets = [0, 0], sizes = [2, 32], strides = [1, 1]} : vector<2x128xf32> to vector<2x32xf32>
    %577 = vector.extract_strided_slice %574 {offsets = [0, 32], sizes = [2, 32], strides = [1, 1]} : vector<2x128xf32> to vector<2x32xf32>
    %578 = vector.extract_strided_slice %575 {offsets = [0, 64], sizes = [2, 32], strides = [1, 1]} : vector<2x128xf32> to vector<2x32xf32>
    %579 = vector.extract_strided_slice %574 {offsets = [0, 96], sizes = [2, 32], strides = [1, 1]} : vector<2x128xf32> to vector<2x32xf32>
    %580 = arith.mulf %577, %565 : vector<2x32xf32>
    %581 = arith.mulf %576, %578 : vector<2x32xf32>
    %582 = arith.addf %580, %581 : vector<2x32xf32>
    %583 = math.tanh %582 : vector<2x32xf32>
    %584 = arith.mulf %579, %583 : vector<2x32xf32>
    %cst_98 = arith.constant dense<0.000000e+00> : vector<2x128xf32>
    %585 = tpu.matmul %584, %311, %cst_98 {dimension_numbers = #tpu.dot_dimension_numbers<[1], [0], [0], [1], [0, 0, 1, 1], [], []>} : vector<2x32xf32>, vector<32x128xf32>, vector<2x128xf32> -> vector<2x128xf32>
    %586 = arith.addf %585, %474 : vector<2x128xf32>
    %587 = arith.negf %586 : vector<2x128xf32>
    %588 = math.exp %587 : vector<2x128xf32>
    %cst_99 = arith.constant 1.000000e+00 : f32
    %589 = vector.broadcast %cst_99 : f32 to vector<2x128xf32>
    %590 = arith.addf %589, %588 : vector<2x128xf32>
    %591 = arith.divf %589, %590 : vector<2x128xf32>
    %592 = math.tanh %586 : vector<2x128xf32>
    %593 = vector.extract_strided_slice %591 {offsets = [0, 0], sizes = [2, 32], strides = [1, 1]} : vector<2x128xf32> to vector<2x32xf32>
    %594 = vector.extract_strided_slice %591 {offsets = [0, 32], sizes = [2, 32], strides = [1, 1]} : vector<2x128xf32> to vector<2x32xf32>
    %595 = vector.extract_strided_slice %592 {offsets = [0, 64], sizes = [2, 32], strides = [1, 1]} : vector<2x128xf32> to vector<2x32xf32>
    %596 = vector.extract_strided_slice %591 {offsets = [0, 96], sizes = [2, 32], strides = [1, 1]} : vector<2x128xf32> to vector<2x32xf32>
    %597 = arith.mulf %594, %582 : vector<2x32xf32>
    %598 = arith.mulf %593, %595 : vector<2x32xf32>
    %599 = arith.addf %597, %598 : vector<2x32xf32>
    %600 = math.tanh %599 : vector<2x32xf32>
    %601 = arith.mulf %596, %600 : vector<2x32xf32>
    %cst_100 = arith.constant dense<0.000000e+00> : vector<2x128xf32>
    %602 = tpu.matmul %601, %311, %cst_100 {dimension_numbers = #tpu.dot_dimension_numbers<[1], [0], [0], [1], [0, 0, 1, 1], [], []>} : vector<2x32xf32>, vector<32x128xf32>, vector<2x128xf32> -> vector<2x128xf32>
    %603 = arith.addf %602, %473 : vector<2x128xf32>
    %604 = arith.negf %603 : vector<2x128xf32>
    %605 = math.exp %604 : vector<2x128xf32>
    %cst_101 = arith.constant 1.000000e+00 : f32
    %606 = vector.broadcast %cst_101 : f32 to vector<2x128xf32>
    %607 = arith.addf %606, %605 : vector<2x128xf32>
    %608 = arith.divf %606, %607 : vector<2x128xf32>
    %609 = math.tanh %603 : vector<2x128xf32>
    %610 = vector.extract_strided_slice %608 {offsets = [0, 0], sizes = [2, 32], strides = [1, 1]} : vector<2x128xf32> to vector<2x32xf32>
    %611 = vector.extract_strided_slice %608 {offsets = [0, 32], sizes = [2, 32], strides = [1, 1]} : vector<2x128xf32> to vector<2x32xf32>
    %612 = vector.extract_strided_slice %609 {offsets = [0, 64], sizes = [2, 32], strides = [1, 1]} : vector<2x128xf32> to vector<2x32xf32>
    %613 = vector.extract_strided_slice %608 {offsets = [0, 96], sizes = [2, 32], strides = [1, 1]} : vector<2x128xf32> to vector<2x32xf32>
    %614 = arith.mulf %611, %599 : vector<2x32xf32>
    %615 = arith.mulf %610, %612 : vector<2x32xf32>
    %616 = arith.addf %614, %615 : vector<2x32xf32>
    %617 = math.tanh %616 : vector<2x32xf32>
    %618 = arith.mulf %613, %617 : vector<2x32xf32>
    %c0_102 = arith.constant 0 : index
    %c0_103 = arith.constant 0 : index
    %619 = vector.load %arg13[%c0_102, %c0_103] : memref<32x3xf32, #tpu.memory_space<vmem>>, vector<32x3xf32>
    %cst_104 = arith.constant dense<0.000000e+00> : vector<2x3xf32>
    %620 = tpu.matmul %472, %619, %cst_104 {dimension_numbers = #tpu.dot_dimension_numbers<[1], [0], [0], [1], [0, 0, 1, 1], [], []>} : vector<2x32xf32>, vector<32x3xf32>, vector<2x3xf32> -> vector<2x3xf32>
    %c0_105 = arith.constant 0 : index
    %c0_106 = arith.constant 0 : index
    %621 = vector.load %arg14[%c0_105, %c0_106] : memref<32x3xf32, #tpu.memory_space<vmem>>, vector<32x3xf32>
    %cst_107 = arith.constant dense<0.000000e+00> : vector<2x3xf32>
    %622 = tpu.matmul %618, %621, %cst_107 {dimension_numbers = #tpu.dot_dimension_numbers<[1], [0], [0], [1], [0, 0, 1, 1], [], []>} : vector<2x32xf32>, vector<32x3xf32>, vector<2x3xf32> -> vector<2x3xf32>
    %623 = arith.addf %620, %622 : vector<2x3xf32>
    %c0_108 = arith.constant 0 : index
    %c0_109 = arith.constant 0 : index
    %624 = vector.load %arg15[%c0_108, %c0_109] : memref<2x3xf32, #tpu.memory_space<vmem>>, vector<2x3xf32>
    %625 = arith.addf %623, %624 : vector<2x3xf32>
    %c0_110 = arith.constant 0 : index
    %c0_111 = arith.constant 0 : index
    %626 = vector.load %arg16[%c0_110, %c0_111] : memref<2x3xf32, #tpu.memory_space<vmem>>, vector<2x3xf32>
    tpu.vector_store %arg16[%c0_110, %c0_111], %625 {strides = array<i32>} : memref<2x3xf32, #tpu.memory_space<vmem>>, vector<2x3xf32>,
    return
  }
}

</mosaic_0001>

<llo_original>
// kernel: bilstm_forward.1
$region0: #{bilstm_forward.1}
  #allocation0 [shape = 'u32[]', space=smem, size = 0x4, offset = 0x4, fixed_abs, tag = 'smem constant byte address 0x4 - core index']
  #allocation1 [shape = 'u32[144,128]{1,0:T(1,128)}', space=vmem, size = 0x12000, scoped, tag = 'internal scratch']
  %s0 = inlined_call_operand.vmem [shape: f32[16,16], index: 0, kind: input, shape index: {}]
  %s1 = inlined_call_operand.vmem [shape: f32[16,128], index: 1, kind: input, shape index: {}]
  %s2 = inlined_call_operand.vmem [shape: f32[32,128], index: 2, kind: input, shape index: {}]
  %s3 = inlined_call_operand.vmem [shape: f32[1,128], index: 3, kind: input, shape index: {}]
  %s4 = inlined_call_operand.vmem [shape: f32[16,128], index: 4, kind: input, shape index: {}]
  %s5 = inlined_call_operand.vmem [shape: f32[32,128], index: 5, kind: input, shape index: {}]
  %s6 = inlined_call_operand.vmem [shape: f32[1,128], index: 6, kind: input, shape index: {}]
  %s7 = inlined_call_operand.vmem [shape: f32[64,128], index: 7, kind: input, shape index: {}]
  %s8 = inlined_call_operand.vmem [shape: f32[32,128], index: 8, kind: input, shape index: {}]
  %s9 = inlined_call_operand.vmem [shape: f32[1,128], index: 9, kind: input, shape index: {}]
  %s10 = inlined_call_operand.vmem [shape: f32[64,128], index: 10, kind: input, shape index: {}]
  %s11 = inlined_call_operand.vmem [shape: f32[32,128], index: 11, kind: input, shape index: {}]
  %s12 = inlined_call_operand.vmem [shape: f32[1,128], index: 12, kind: input, shape index: {}]
  %s13 = inlined_call_operand.vmem [shape: f32[32,3], index: 13, kind: input, shape index: {}]
  %s14 = inlined_call_operand.vmem [shape: f32[32,3], index: 14, kind: input, shape index: {}]
  %s15 = inlined_call_operand.vmem [shape: f32[2,3], index: 15, kind: input, shape index: {}]
  %s16 = inlined_call_operand.hbm [shape: f32[2,3], index: 16, kind: output, shape index: {}]
  %s17 = sld [smem:[#allocation0]]
  $region74: #{bilstm_forward.1} parent=0
    _
  %s19 = ssub.s32 1, %s17
  %s20 = scalar_select 0, %s19, %s17
  $region1: #{bilstm_forward.1} parent=0
    #allocation2 [shape = 'u8[1024]{0}', space=vmem, size = 0x400, scoped, tag = 'output window, operand 0, single buffered']
    #allocation3 [shape = 's32[1]{0}', space=sflag, size = 0x4, scoped, tag = 'scoped memory for bilstm_forward.1']
    %21 = vsyncpa [#allocation3], 0
    // Predicated region
    $region2: #{bilstm_forward.1} parent=1 // pred_check
      _
    $region3: #{bilstm_forward.1} parent=1 // pred_check_branch
      %23 = sbr.rel (0) target = $region5
    $region4: #{bilstm_forward.1} parent=1 // pred_region
      _
    $region5: #{bilstm_forward.1} parent=1 // pred_fallthru
      _
    // Predicated region
    $region6: #{bilstm_forward.1} parent=1 // pred_check
      _
    $region7: #{bilstm_forward.1} parent=1 // pred_check_branch
      %25 = sbr.rel (0) target = $region9
    $region8: #{bilstm_forward.1} parent=1 // pred_region
      _
    $region9: #{bilstm_forward.1} parent=1 // pred_fallthru
      _
    // Predicated region
    $region10: #{bilstm_forward.1} parent=1 // pred_check
      _
    $region11: #{bilstm_forward.1} parent=1 // pred_check_branch
      %27 = sbr.rel (0) target = $region13
    $region12: #{bilstm_forward.1} parent=1 // pred_region
      _
    $region13: #{bilstm_forward.1} parent=1 // pred_fallthru
      _
    // Predicated region
    $region14: #{bilstm_forward.1} parent=1 // pred_check
      _
    $region15: #{bilstm_forward.1} parent=1 // pred_check_branch
      %29 = sbr.rel (0) target = $region17
    $region16: #{bilstm_forward.1} parent=1 // pred_region
      _
    $region17: #{bilstm_forward.1} parent=1 // pred_fallthru
      _
    // Predicated region
    $region18: #{bilstm_forward.1} parent=1 // pred_check
      _
    $region19: #{bilstm_forward.1} parent=1 // pred_check_branch
      %31 = sbr.rel (0) target = $region21
    $region20: #{bilstm_forward.1} parent=1 // pred_region
      _
    $region21: #{bilstm_forward.1} parent=1 // pred_fallthru
      _
    // Predicated region
    $region22: #{bilstm_forward.1} parent=1 // pred_check
      _
    $region23: #{bilstm_forward.1} parent=1 // pred_check_branch
      %33 = sbr.rel (0) target = $region25
    $region24: #{bilstm_forward.1} parent=1 // pred_region
      _
    $region25: #{bilstm_forward.1} parent=1 // pred_fallthru
      _
    // Predicated region
    $region26: #{bilstm_forward.1} parent=1 // pred_check
      _
    $region27: #{bilstm_forward.1} parent=1 // pred_check_branch
      %35 = sbr.rel (0) target = $region29
    $region28: #{bilstm_forward.1} parent=1 // pred_region
      _
    $region29: #{bilstm_forward.1} parent=1 // pred_fallthru
      _
    // Predicated region
    $region30: #{bilstm_forward.1} parent=1 // pred_check
      _
    $region31: #{bilstm_forward.1} parent=1 // pred_check_branch
      %37 = sbr.rel (0) target = $region33
    $region32: #{bilstm_forward.1} parent=1 // pred_region
      _
    $region33: #{bilstm_forward.1} parent=1 // pred_fallthru
      _
    // Predicated region
    $region34: #{bilstm_forward.1} parent=1 // pred_check
      _
    $region35: #{bilstm_forward.1} parent=1 // pred_check_branch
      %39 = sbr.rel (0) target = $region37
    $region36: #{bilstm_forward.1} parent=1 // pred_region
      _
    $region37: #{bilstm_forward.1} parent=1 // pred_fallthru
      _
    // Predicated region
    $region38: #{bilstm_forward.1} parent=1 // pred_check
      _
    $region39: #{bilstm_forward.1} parent=1 // pred_check_branch
      %41 = sbr.rel (0) target = $region41
    $region40: #{bilstm_forward.1} parent=1 // pred_region
      _
    $region41: #{bilstm_forward.1} parent=1 // pred_fallthru
      _
    // Predicated region
    $region42: #{bilstm_forward.1} parent=1 // pred_check
      _
    $region43: #{bilstm_forward.1} parent=1 // pred_check_branch
      %43 = sbr.rel (0) target = $region45
    $region44: #{bilstm_forward.1} parent=1 // pred_region
      _
    $region45: #{bilstm_forward.1} parent=1 // pred_fallthru
      _
    // Predicated region
    $region46: #{bilstm_forward.1} parent=1 // pred_check
      _
    $region47: #{bilstm_forward.1} parent=1 // pred_check_branch
      %45 = sbr.rel (0) target = $region49
    $region48: #{bilstm_forward.1} parent=1 // pred_region
      _
    $region49: #{bilstm_forward.1} parent=1 // pred_fallthru
      _
    // Predicated region
    $region50: #{bilstm_forward.1} parent=1 // pred_check
      _
    $region51: #{bilstm_forward.1} parent=1 // pred_check_branch
      %47 = sbr.rel (0) target = $region53
    $region52: #{bilstm_forward.1} parent=1 // pred_region
      _
    $region53: #{bilstm_forward.1} parent=1 // pred_fallthru
      _
    // Predicated region
    $region54: #{bilstm_forward.1} parent=1 // pred_check
      _
    $region55: #{bilstm_forward.1} parent=1 // pred_check_branch
      %49 = sbr.rel (0) target = $region57
    $region56: #{bilstm_forward.1} parent=1 // pred_region
      _
    $region57: #{bilstm_forward.1} parent=1 // pred_fallthru
      _
    // Predicated region
    $region58: #{bilstm_forward.1} parent=1 // pred_check
      _
    $region59: #{bilstm_forward.1} parent=1 // pred_check_branch
      %51 = sbr.rel (0) target = $region61
    $region60: #{bilstm_forward.1} parent=1 // pred_region
      _
    $region61: #{bilstm_forward.1} parent=1 // pred_fallthru
      _
    // Predicated region
    $region62: #{bilstm_forward.1} parent=1 // pred_check
      _
    $region63: #{bilstm_forward.1} parent=1 // pred_check_branch
      %53 = sbr.rel (0) target = $region65
    $region64: #{bilstm_forward.1} parent=1 // pred_region
      _
    $region65: #{bilstm_forward.1} parent=1 // pred_fallthru
      _
    %v54 = vld [vmem:[%s0] sm:$0xff]
    %v55 = vld [vmem:[%s0 + $0x8] sm:$0xff]
    %v56 = vld [vmem:[%s1] sm:$0xff]
    %v57 = vld [vmem:[%s1 + $0x8] sm:$0xff]
    %v58 = vld [vmem:[%s2] sm:$0xff]
    %v59 = vld [vmem:[%s2 + $0x8] sm:$0xff]
    %v60 = vld [vmem:[%s2 + $0x10] sm:$0xff]
    %v61 = vld [vmem:[%s2 + $0x18] sm:$0xff]
    %v62 = vld [vmem:[%s3] sm:$0x1]
    %v63 = vld [vmem:[%s4] sm:$0xff]
    %v64 = vld [vmem:[%s4 + $0x8] sm:$0xff]
    %v65 = vld [vmem:[%s5] sm:$0xff]
    %v66 = vld [vmem:[%s5 + $0x8] sm:$0xff]
    %v67 = vld [vmem:[%s5 + $0x10] sm:$0xff]
    %v68 = vld [vmem:[%s5 + $0x18] sm:$0xff]
    %v69 = vld [vmem:[%s6] sm:$0x1]
    %v71 = vlaneseq
    %v72 = vshrl.u32 %v71, 7
    %v73 = vsub.s32 0, %v72
    %v74 = vrot.slane %v62, %v73
    %vm76 = vcmask 130048
    %v78 = vsel %vm76, %v54, 0
    %v81 = vsel %vm76, %v55, 0
    %83 = vmatprep.subr.mxu0 0.0
    %84 = vmatpush1.msra.mxu0 %v56
    %85 = vmatprep.subr.mxu0 0.0
    %86 = vmatpush1.msra.mxu0 %v57
    %87 = vmatprep.subr.mxu0 0.0
    %88 = vmatpush1.msra.mxu0 0.0
    %89 = vmatprep.subr.mxu0 0.0
    %90 = vmatpush1.msra.mxu0 0.0
    %91 = vmatprep.subr.mxu0 0.0
    %92 = vmatpush1.msra.mxu0 0.0
    %93 = vmatprep.subr.mxu0 0.0
    %94 = vmatpush1.msra.mxu0 0.0
    %95 = vmatprep.subr.mxu0 0.0
    %96 = vmatpush1.msra.mxu0 0.0
    %97 = vmatprep.subr.mxu0 0.0
    %98 = vmatpush1.msra.mxu0 0.0
    %99 = vmatprep.subr.mxu0 0.0
    %100 = vmatpush1.msra.mxu0 0.0
    %101 = vmatprep.subr.mxu0 0.0
    %102 = vmatpush1.msra.mxu0 0.0
    %103 = vmatprep.subr.mxu0 0.0
    %104 = vmatpush1.msra.mxu0 0.0
    %105 = vmatprep.subr.mxu0 0.0
    %106 = vmatpush1.msra.mxu0 0.0
    %107 = vmatprep.subr.mxu0 0.0
    %108 = vmatpush1.msra.mxu0 0.0
    %109 = vmatprep.subr.mxu0 0.0
    %110 = vmatpush1.msra.mxu0 0.0
    %111 = vmatprep.subr.mxu0 0.0
    %112 = vmatpush1.msra.mxu0 0.0
    %113 = vmatprep.subr.mxu0 0.0
    %114 = vmatpush1.msra.mxu0 0.0
    %115 = vmatprep.subr.mxu0 0.0
    %116 = vmatpush1.msra.mxu0 0.0
    %117 = vmatprep.subr.mxu0 0.0
    %118 = vmatpush1.msra.mxu0 0.0
    %119 = vmatprep.subr.mxu0 0.0
    %120 = vmatpush1.msra.mxu0 0.0
    %121 = vmatprep.subr.mxu0 0.0
    %122 = vmatpush1.msra.mxu0 0.0
    %123 = vmatprep.subr.mxu0 0.0
    %124 = vmatpush1.msra.mxu0 0.0
    %125 = vmatprep.subr.mxu0 0.0
    %126 = vmatpush1.msra.mxu0 0.0
    %127 = vmatprep.subr.mxu0 0.0
    %128 = vmatpush1.msra.mxu0 0.0
    %129 = vmatprep.subr.mxu0 0.0
    %130 = vmatpush1.msra.mxu0 0.0
    %131 = vmatprep.subr.mxu0 0.0
    %132 = vmatpush1.msra.mxu0 0.0
    %133 = vmatprep.subr.mxu0 0.0
    %134 = vmatpush1.msra.mxu0 0.0
    %135 = vmatprep.subr.mxu0 0.0
    %136 = vmatpush1.msra.mxu0 0.0
    %137 = vmatprep.subr.mxu0 0.0
    %138 = vmatpush1.msra.mxu0 0.0
    %139 = vmatprep.subr.mxu0 0.0
    %140 = vmatpush1.msra.mxu0 0.0
    %141 = vmatprep.subr.mxu0 0.0
    %142 = vmatpush1.msra.mxu0 0.0
    %143 = vmatprep.subr.mxu0 0.0
    %144 = vmatpush1.msra.mxu0 0.0
    %145 = vmatprep.subr.mxu0 0.0
    %146 = vmatpush1.msra.mxu0 0.0
    %147 = vmatprep.mubr.f32.mxu0 0.0
    %148 = vmatmul.mubr.f32.gmra.mrb[0].mxu0 %v78
    %v149 = vpop.f32.mrb[0].mxu0
    %v150 = vadd.f32 %v74, %v149
    %v151 = vpop.f32.mrb[0].mxu0
    %152 = vmatprep.mubr.f32.mxu0 0.0
    %153 = vmatmul.mubr.f32.gmra.mrb[0].mxu0 %v81
    %v154 = vpop.f32.mrb[0].mxu0
    %v155 = vadd.f32 %v74, %v154
    %v156 = vpop.f32.mrb[0].mxu0
    %157 = vdwg.mxu0
    %v159 = vlaneseq
    %v160 = vshrl.u32 %v159, 7
    %v161 = vsub.s32 0, %v160
    %v162 = vrot.slane %v69, %v161
    %164 = vmatprep.subr.mxu0 0.0
    %165 = vmatpush1.msra.mxu0 %v63
    %166 = vmatprep.subr.mxu0 0.0
    %167 = vmatpush1.msra.mxu0 %v64
    %168 = vmatprep.subr.mxu0 0.0
    %169 = vmatpush1.msra.mxu0 0.0
    %170 = vmatprep.subr.mxu0 0.0
    %171 = vmatpush1.msra.mxu0 0.0
    %172 = vmatprep.subr.mxu0 0.0
    %173 = vmatpush1.msra.mxu0 0.0
    %174 = vmatprep.subr.mxu0 0.0
    %175 = vmatpush1.msra.mxu0 0.0
    %176 = vmatprep.subr.mxu0 0.0
    %177 = vmatpush1.msra.mxu0 0.0
    %178 = vmatprep.subr.mxu0 0.0
    %179 = vmatpush1.msra.mxu0 0.0
    %180 = vmatprep.subr.mxu0 0.0
    %181 = vmatpush1.msra.mxu0 0.0
    %182 = vmatprep.subr.mxu0 0.0
    %183 = vmatpush1.msra.mxu0 0.0
    %184 = vmatprep.subr.mxu0 0.0
    %185 = vmatpush1.msra.mxu0 0.0
    %186 = vmatprep.subr.mxu0 0.0
    %187 = vmatpush1.msra.mxu0 0.0
    %188 = vmatprep.subr.mxu0 0.0
    %189 = vmatpush1.msra.mxu0 0.0
    %190 = vmatprep.subr.mxu0 0.0
    %191 = vmatpush1.msra.mxu0 0.0
    %192 = vmatprep.subr.mxu0 0.0
    %193 = vmatpush1.msra.mxu0 0.0
    %194 = vmatprep.subr.mxu0 0.0
    %195 = vmatpush1.msra.mxu0 0.0
    %196 = vmatprep.subr.mxu0 0.0
    %197 = vmatpush1.msra.mxu0 0.0
    %198 = vmatprep.subr.mxu0 0.0
    %199 = vmatpush1.msra.mxu0 0.0
    %200 = vmatprep.subr.mxu0 0.0
    %201 = vmatpush1.msra.mxu0 0.0
    %202 = vmatprep.subr.mxu0 0.0
    %203 = vmatpush1.msra.mxu0 0.0
    %204 = vmatprep.subr.mxu0 0.0
    %205 = vmatpush1.msra.mxu0 0.0
    %206 = vmatprep.subr.mxu0 0.0
    %207 = vmatpush1.msra.mxu0 0.0
    %208 = vmatprep.subr.mxu0 0.0
    %209 = vmatpush1.msra.mxu0 0.0
    %210 = vmatprep.subr.mxu0 0.0
    %211 = vmatpush1.msra.mxu0 0.0
    %212 = vmatprep.subr.mxu0 0.0
    %213 = vmatpush1.msra.mxu0 0.0
    %214 = vmatprep.subr.mxu0 0.0
    %215 = vmatpush1.msra.mxu0 0.0
    %216 = vmatprep.subr.mxu0 0.0
    %217 = vmatpush1.msra.mxu0 0.0
    %218 = vmatprep.subr.mxu0 0.0
    %219 = vmatpush1.msra.mxu0 0.0
    %220 = vmatprep.subr.mxu0 0.0
    %221 = vmatpush1.msra.mxu0 0.0
    %222 = vmatprep.subr.mxu0 0.0
    %223 = vmatpush1.msra.mxu0 0.0
    %224 = vmatprep.subr.mxu0 0.0
    %225 = vmatpush1.msra.mxu0 0.0
    %226 = vmatprep.subr.mxu0 0.0
    %227 = vmatpush1.msra.mxu0 0.0
    %228 = vmatprep.mubr.f32.mxu0 0.0
    %229 = vmatmul.mubr.f32.gmra.mrb[0].mxu0 %v78
    %v230 = vpop.f32.mrb[0].mxu0
    %v231 = vadd.f32 %v162, %v230
    %v232 = vpop.f32.mrb[0].mxu0
    %233 = vmatprep.mubr.f32.mxu0 0.0
    %234 = vmatmul.mubr.f32.gmra.mrb[0].mxu0 %v81
    %v235 = vpop.f32.mrb[0].mxu0
    %v236 = vadd.f32 %v162, %v235
    %v237 = vpop.f32.mrb[0].mxu0
    %238 = vdwg.mxu0
    %vm239 = vcmask 261120
    %v241 = vsel %vm239, 0.0, 0
    %243 = vmatprep.subr.mxu0 0.0
    %244 = vmatpush1.msra.mxu0 %v58
    %245 = vmatprep.subr.mxu0 0.0
    %246 = vmatpush1.msra.mxu0 %v59
    %247 = vmatprep.subr.mxu0 0.0
    %248 = vmatpush1.msra.mxu0 %v60
    %249 = vmatprep.subr.mxu0 0.0
    %250 = vmatpush1.msra.mxu0 %v61
    %251 = vmatprep.subr.mxu0 0.0
    %252 = vmatpush1.msra.mxu0 0.0
    %253 = vmatprep.subr.mxu0 0.0
    %254 = vmatpush1.msra.mxu0 0.0
    %255 = vmatprep.subr.mxu0 0.0
    %256 = vmatpush1.msra.mxu0 0.0
    %257 = vmatprep.subr.mxu0 0.0
    %258 = vmatpush1.msra.mxu0 0.0
    %259 = vmatprep.subr.mxu0 0.0
    %260 = vmatpush1.msra.mxu0 0.0
    %261 = vmatprep.subr.mxu0 0.0
    %262 = vmatpush1.msra.mxu0 0.0
    %263 = vmatprep.subr.mxu0 0.0
    %264 = vmatpush1.msra.mxu0 0.0
    %265 = vmatprep.subr.mxu0 0.0
    %266 = vmatpush1.msra.mxu0 0.0
    %267 = vmatprep.subr.mxu0 0.0
    %268 = vmatpush1.msra.mxu0 0.0
    %269 = vmatprep.subr.mxu0 0.0
    %270 = vmatpush1.msra.mxu0 0.0
    %271 = vmatprep.subr.mxu0 0.0
    %272 = vmatpush1.msra.mxu0 0.0
    %273 = vmatprep.subr.mxu0 0.0
    %274 = vmatpush1.msra.mxu0 0.0
    %275 = vmatprep.subr.mxu0 0.0
    %276 = vmatpush1.msra.mxu0 0.0
    %277 = vmatprep.subr.mxu0 0.0
    %278 = vmatpush1.msra.mxu0 0.0
    %279 = vmatprep.subr.mxu0 0.0
    %280 = vmatpush1.msra.mxu0 0.0
    %281 = vmatprep.subr.mxu0 0.0
    %282 = vmatpush1.msra.mxu0 0.0
    %283 = vmatprep.subr.mxu0 0.0
    %284 = vmatpush1.msra.mxu0 0.0
    %285 = vmatprep.subr.mxu0 0.0
    %286 = vmatpush1.msra.mxu0 0.0
    %287 = vmatprep.subr.mxu0 0.0
    %288 = vmatpush1.msra.mxu0 0.0
    %289 = vmatprep.subr.mxu0 0.0
    %290 = vmatpush1.msra.mxu0 0.0
    %291 = vmatprep.subr.mxu0 0.0
    %292 = vmatpush1.msra.mxu0 0.0
    %293 = vmatprep.subr.mxu0 0.0
    %294 = vmatpush1.msra.mxu0 0.0
    %295 = vmatprep.subr.mxu0 0.0
    %296 = vmatpush1.msra.mxu0 0.0
    %297 = vmatprep.subr.mxu0 0.0
    %298 = vmatpush1.msra.mxu0 0.0
    %299 = vmatprep.subr.mxu0 0.0
    %300 = vmatpush1.msra.mxu0 0.0
    %301 = vmatprep.subr.mxu0 0.0
    %302 = vmatpush1.msra.mxu0 0.0
    %303 = vmatprep.subr.mxu0 0.0
    %304 = vmatpush1.msra.mxu0 0.0
    %305 = vmatprep.subr.mxu0 0.0
    %306 = vmatpush1.msra.mxu0 0.0
    %307 = vmatprep.mubr.f32.mxu0 0.0
    %308 = vmatmul.mubr.f32.gmra.mrb[0].mxu0 %v241
    %v309 = vpop.f32.mrb[0].mxu0
    %v310 = vadd.f32 %v150, %v309
    %v311 = vpop.f32.mrb[0].mxu0
    %312 = vdwg.mxu0
    %v313 = vxor.u32 %v310, 2147483648
    %v314 = vmul.f32 %v313, 1.442695
    %v315 = vpow.pop %v314
    %v316 = vadd.f32 %v315, 1.0
    %v317 = vrcp.pop %v316
    %v318 = vmul.f32 1.0, %v317
    %v319 = vtanh.pop %v310
    %v320 = vmul.f32 %v318, 0.0
    %322 = vrot.lane.b32.xlu0 %v319, 64
    %v323 = vpop.permute.xlu0 %322
    %v325 = vmul.f32 %v318, %v323
    %327 = vrot.lane.b32.xlu0 %v325, 32
    %v328 = vpop.permute.xlu0 %327
    %v330 = vadd.f32 %v320, %v328
    %v331 = vtanh.pop %v330
    %333 = vrot.lane.b32.xlu0 %v331, 64
    %v334 = vpop.permute.xlu0 %333
    %v336 = vmul.f32 %v318, %v334
    %338 = vrot.lane.b32.xlu0 %v336, 32
    %v339 = vpop.permute.xlu0 %338
    %v341 = vrot.slane %v150, 2
    %v343 = vsel %vm239, %v339, 0
    %345 = vmatprep.subr.mxu0 0.0
    %346 = vmatpush1.msra.mxu0 %v58
    %347 = vmatprep.subr.mxu0 0.0
    %348 = vmatpush1.msra.mxu0 %v59
    %349 = vmatprep.subr.mxu0 0.0
    %350 = vmatpush1.msra.mxu0 %v60
    %351 = vmatprep.subr.mxu0 0.0
    %352 = vmatpush1.msra.mxu0 %v61
    %353 = vmatprep.subr.mxu0 0.0
    %354 = vmatpush1.msra.mxu0 0.0
    %355 = vmatprep.subr.mxu0 0.0
    %356 = vmatpush1.msra.mxu0 0.0
    %357 = vmatprep.subr.mxu0 0.0
    %358 = vmatpush1.msra.mxu0 0.0
    %359 = vmatprep.subr.mxu0 0.0
    %360 = vmatpush1.msra.mxu0 0.0
    %361 = vmatprep.subr.mxu0 0.0
    %362 = vmatpush1.msra.mxu0 0.0
    %363 = vmatprep.subr.mxu0 0.0
    %364 = vmatpush1.msra.mxu0 0.0
    %365 = vmatprep.subr.mxu0 0.0
    %366 = vmatpush1.msra.mxu0 0.0
    %367 = vmatprep.subr.mxu0 0.0
    %368 = vmatpush1.msra.mxu0 0.0
    %369 = vmatprep.subr.mxu0 0.0
    %370 = vmatpush1.msra.mxu0 0.0
    %371 = vmatprep.subr.mxu0 0.0
    %372 = vmatpush1.msra.mxu0 0.0
    %373 = vmatprep.subr.mxu0 0.0
    %374 = vmatpush1.msra.mxu0 0.0
    %375 = vmatprep.subr.mxu0 0.0
    %376 = vmatpush1.msra.mxu0 0.0
    %377 = vmatprep.subr.mxu0 0.0
    %378 = vmatpush1.msra.mxu0 0.0
    %379 = vmatprep.subr.mxu0 0.0
    %380 = vmatpush1.msra.mxu0 0.0
    %381 = vmatprep.subr.mxu0 0.0
    %382 = vmatpush1.msra.mxu0 0.0
    %383 = vmatprep.subr.mxu0 0.0
    %384 = vmatpush1.msra.mxu0 0.0
    %385 = vmatprep.subr.mxu0 0.0
    %386 = vmatpush1.msra.mxu0 0.0
    %387 = vmatprep.subr.mxu0 0.0
    %388 = vmatpush1.msra.mxu0 0.0
    %389 = vmatprep.subr.mxu0 0.0
    %390 = vmatpush1.msra.mxu0 0.0
    %391 = vmatprep.subr.mxu0 0.0
    %392 = vmatpush1.msra.mxu0 0.0
    %393 = vmatprep.subr.mxu0 0.0
    %394 = vmatpush1.msra.mxu0 0.0
    %395 = vmatprep.subr.mxu0 0.0
    %396 = vmatpush1.msra.mxu0 0.0
    %397 = vmatprep.subr.mxu0 0.0
    %398 = vmatpush1.msra.mxu0 0.0
    %399 = vmatprep.subr.mxu0 0.0
    %400 = vmatpush1.msra.mxu0 0.0
    %401 = vmatprep.subr.mxu0 0.0
    %402 = vmatpush1.msra.mxu0 0.0
    %403 = vmatprep.subr.mxu0 0.0
    %404 = vmatpush1.msra.mxu0 0.0
    %405 = vmatprep.subr.mxu0 0.0
    %406 = vmatpush1.msra.mxu0 0.0
    %407 = vmatprep.subr.mxu0 0.0
    %408 = vmatpush1.msra.mxu0 0.0
    %409 = vmatprep.mubr.f32.mxu0 0.0
    %410 = vmatmul.mubr.f32.gmra.mrb[0].mxu0 %v343
    %v411 = vpop.f32.mrb[0].mxu0
    %v412 = vadd.f32 %v341, %v411
    %v413 = vpop.f32.mrb[0].mxu0
    %414 = vdwg.mxu0
    %v415 = vxor.u32 %v412, 2147483648
    %v416 = vmul.f32 %v415, 1.442695
    %v417 = vpow.pop %v416
    %v418 = vadd.f32 %v417, 1.0
    %v419 = vrcp.pop %v418
    %v420 = vmul.f32 1.0, %v419
    %v421 = vtanh.pop %v412
    %v422 = vmul.f32 %v420, %v330
    %424 = vrot.lane.b32.xlu0 %v421, 64
    %v425 = vpop.permute.xlu0 %424
    %v427 = vmul.f32 %v420, %v425
    %429 = vrot.lane.b32.xlu0 %v427, 32
    %v430 = vpop.permute.xlu0 %429
    %v432 = vadd.f32 %v422, %v430
    %v433 = vtanh.pop %v432
    %435 = vrot.lane.b32.xlu0 %v433, 64
    %v436 = vpop.permute.xlu0 %435
    %v438 = vmul.f32 %v420, %v436
    %440 = vrot.lane.b32.xlu0 %v438, 32
    %v441 = vpop.permute.xlu0 %440
    %v442 = vrot.slane %v150, 4
    %v444 = vsel %vm239, %v441, 0
    %446 = vmatprep.subr.mxu0 0.0
    %447 = vmatpush1.msra.mxu0 %v58
    %448 = vmatprep.subr.mxu0 0.0
    %449 = vmatpush1.msra.mxu0 %v59
    %450 = vmatprep.subr.mxu0 0.0
    %451 = vmatpush1.msra.mxu0 %v60
    %452 = vmatprep.subr.mxu0 0.0
    %453 = vmatpush1.msra.mxu0 %v61
    %454 = vmatprep.subr.mxu0 0.0
    %455 = vmatpush1.msra.mxu0 0.0
    %456 = vmatprep.subr.mxu0 0.0
    %457 = vmatpush1.msra.mxu0 0.0
    %458 = vmatprep.subr.mxu0 0.0
    %459 = vmatpush1.msra.mxu0 0.0
    %460 = vmatprep.subr.mxu0 0.0
    %461 = vmatpush1.msra.mxu0 0.0
    %462 = vmatprep.subr.mxu0 0.0
    %463 = vmatpush1.msra.mxu0 0.0
    %464 = vmatprep.subr.mxu0 0.0
    %465 = vmatpush1.msra.mxu0 0.0
    %466 = vmatprep.subr.mxu0 0.0
    %467 = vmatpush1.msra.mxu0 0.0
    %468 = vmatprep.subr.mxu0 0.0
    %469 = vmatpush1.msra.mxu0 0.0
    %470 = vmatprep.subr.mxu0 0.0
    %471 = vmatpush1.msra.mxu0 0.0
    %472 = vmatprep.subr.mxu0 0.0
    %473 = vmatpush1.msra.mxu0 0.0
    %474 = vmatprep.subr.mxu0 0.0
    %475 = vmatpush1.msra.mxu0 0.0
    %476 = vmatprep.subr.mxu0 0.0
    %477 = vmatpush1.msra.mxu0 0.0
    %478 = vmatprep.subr.mxu0 0.0
    %479 = vmatpush1.msra.mxu0 0.0
    %480 = vmatprep.subr.mxu0 0.0
    %481 = vmatpush1.msra.mxu0 0.0
    %482 = vmatprep.subr.mxu0 0.0
    %483 = vmatpush1.msra.mxu0 0.0
    %484 = vmatprep.subr.mxu0 0.0
    %485 = vmatpush1.msra.mxu0 0.0
    %486 = vmatprep.subr.mxu0 0.0
    %487 = vmatpush1.msra.mxu0 0.0
    %488 = vmatprep.subr.mxu0 0.0
    %489 = vmatpush1.msra.mxu0 0.0
    %490 = vmatprep.subr.mxu0 0.0
    %491 = vmatpush1.msra.mxu0 0.0
    %492 = vmatprep.subr.mxu0 0.0
    %493 = vmatpush1.msra.mxu0 0.0
    %494 = vmatprep.subr.mxu0 0.0
    %495 = vmatpush1.msra.mxu0 0.0
    %496 = vmatprep.subr.mxu0 0.0
    %497 = vmatpush1.msra.mxu0 0.0
    %498 = vmatprep.subr.mxu0 0.0
    %499 = vmatpush1.msra.mxu0 0.0
    %500 = vmatprep.subr.mxu0 0.0
    %501 = vmatpush1.msra.mxu0 0.0
    %502 = vmatprep.subr.mxu0 0.0
    %503 = vmatpush1.msra.mxu0 0.0
    %504 = vmatprep.subr.mxu0 0.0
    %505 = vmatpush1.msra.mxu0 0.0
    %506 = vmatprep.subr.mxu0 0.0
    %507 = vmatpush1.msra.mxu0 0.0
    %508 = vmatprep.subr.mxu0 0.0
    %509 = vmatpush1.msra.mxu0 0.0
    %510 = vmatprep.mubr.f32.mxu0 0.0
    %511 = vmatmul.mubr.f32.gmra.mrb[0].mxu0 %v444
    %v512 = vpop.f32.mrb[0].mxu0
    %v513 = vadd.f32 %v442, %v512
    %v514 = vpop.f32.mrb[0].mxu0
    %515 = vdwg.mxu0
    %v516 = vxor.u32 %v513, 2147483648
    %v517 = vmul.f32 %v516, 1.442695
    %v518 = vpow.pop %v517
    %v519 = vadd.f32 %v518, 1.0
    %v520 = vrcp.pop %v519
    %v521 = vmul.f32 1.0, %v520
    %v522 = vtanh.pop %v513
    %v523 = vmul.f32 %v521, %v432
    %525 = vrot.lane.b32.xlu0 %v522, 64
    %v526 = vpop.permute.xlu0 %525
    %v528 = vmul.f32 %v521, %v526
    %530 = vrot.lane.b32.xlu0 %v528, 32
    %v531 = vpop.permute.xlu0 %530
    %v533 = vadd.f32 %v523, %v531
    %v534 = vtanh.pop %v533
    %536 = vrot.lane.b32.xlu0 %v534, 64
    %v537 = vpop.permute.xlu0 %536
    %v539 = vmul.f32 %v521, %v537
    %541 = vrot.lane.b32.xlu0 %v539, 32
    %v542 = vpop.permute.xlu0 %541
    %v543 = vrot.slane %v150, 6
    %v545 = vsel %vm239, %v542, 0
    %547 = vmatprep.subr.mxu0 0.0
    %548 = vmatpush1.msra.mxu0 %v58
    %549 = vmatprep.subr.mxu0 0.0
    %550 = vmatpush1.msra.mxu0 %v59
    %551 = vmatprep.subr.mxu0 0.0
    %552 = vmatpush1.msra.mxu0 %v60
    %553 = vmatprep.subr.mxu0 0.0
    %554 = vmatpush1.msra.mxu0 %v61
    %555 = vmatprep.subr.mxu0 0.0
    %556 = vmatpush1.msra.mxu0 0.0
    %557 = vmatprep.subr.mxu0 0.0
    %558 = vmatpush1.msra.mxu0 0.0
    %559 = vmatprep.subr.mxu0 0.0
    %560 = vmatpush1.msra.mxu0 0.0
    %561 = vmatprep.subr.mxu0 0.0
    %562 = vmatpush1.msra.mxu0 0.0
    %563 = vmatprep.subr.mxu0 0.0
    %564 = vmatpush1.msra.mxu0 0.0
    %565 = vmatprep.subr.mxu0 0.0
    %566 = vmatpush1.msra.mxu0 0.0
    %567 = vmatprep.subr.mxu0 0.0
    %568 = vmatpush1.msra.mxu0 0.0
    %569 = vmatprep.subr.mxu0 0.0
    %570 = vmatpush1.msra.mxu0 0.0
    %571 = vmatprep.subr.mxu0 0.0
    %572 = vmatpush1.msra.mxu0 0.0
    %573 = vmatprep.subr.mxu0 0.0
    %574 = vmatpush1.msra.mxu0 0.0
    %575 = vmatprep.subr.mxu0 0.0
    %576 = vmatpush1.msra.mxu0 0.0
    %577 = vmatprep.subr.mxu0 0.0
    %578 = vmatpush1.msra.mxu0 0.0
    %579 = vmatprep.subr.mxu0 0.0
    %580 = vmatpush1.msra.mxu0 0.0
    %581 = vmatprep.subr.mxu0 0.0
    %582 = vmatpush1.msra.mxu0 0.0
    %583 = vmatprep.subr.mxu0 0.0
    %584 = vmatpush1.msra.mxu0 0.0
    %585 = vmatprep.subr.mxu0 0.0
    %586 = vmatpush1.msra.mxu0 0.0
    %587 = vmatprep.subr.mxu0 0.0
    %588 = vmatpush1.msra.mxu0 0.0
    %589 = vmatprep.subr.mxu0 0.0
    %590 = vmatpush1.msra.mxu0 0.0
    %591 = vmatprep.subr.mxu0 0.0
    %592 = vmatpush1.msra.mxu0 0.0
    %593 = vmatprep.subr.mxu0 0.0
    %594 = vmatpush1.msra.mxu0 0.0
    %595 = vmatprep.subr.mxu0 0.0
    %596 = vmatpush1.msra.mxu0 0.0
    %597 = vmatprep.subr.mxu0 0.0
    %598 = vmatpush1.msra.mxu0 0.0
    %599 = vmatprep.subr.mxu0 0.0
    %600 = vmatpush1.msra.mxu0 0.0
    %601 = vmatprep.subr.mxu0 0.0
    %602 = vmatpush1.msra.mxu0 0.0
    %603 = vmatprep.subr.mxu0 0.0
    %604 = vmatpush1.msra.mxu0 0.0
    %605 = vmatprep.subr.mxu0 0.0
    %606 = vmatpush1.msra.mxu0 0.0
    %607 = vmatprep.subr.mxu0 0.0
    %608 = vmatpush1.msra.mxu0 0.0
    %609 = vmatprep.subr.mxu0 0.0
    %610 = vmatpush1.msra.mxu0 0.0
    %611 = vmatprep.mubr.f32.mxu0 0.0
    %612 = vmatmul.mubr.f32.gmra.mrb[0].mxu0 %v545
    %v613 = vpop.f32.mrb[0].mxu0
    %v614 = vadd.f32 %v543, %v613
    %v615 = vpop.f32.mrb[0].mxu0
    %616 = vdwg.mxu0
    %v617 = vxor.u32 %v614, 2147483648
    %v618 = vmul.f32 %v617, 1.442695
    %v619 = vpow.pop %v618
    %v620 = vadd.f32 %v619, 1.0
    %v621 = vrcp.pop %v620
    %v622 = vmul.f32 1.0, %v621
    %v623 = vtanh.pop %v614
    %v624 = vmul.f32 %v622, %v533
    %626 = vrot.lane.b32.xlu0 %v623, 64
    %v627 = vpop.permute.xlu0 %626
    %v629 = vmul.f32 %v622, %v627
    %631 = vrot.lane.b32.xlu0 %v629, 32
    %v632 = vpop.permute.xlu0 %631
    %v634 = vadd.f32 %v624, %v632
    %v635 = vtanh.pop %v634
    %637 = vrot.lane.b32.xlu0 %v635, 64
    %v638 = vpop.permute.xlu0 %637
    %v640 = vmul.f32 %v622, %v638
    %642 = vrot.lane.b32.xlu0 %v640, 32
    %v643 = vpop.permute.xlu0 %642
    %v644 = vsel %vm239, %v643, 0
    %646 = vmatprep.subr.mxu0 0.0
    %647 = vmatpush1.msra.mxu0 %v58
    %648 = vmatprep.subr.mxu0 0.0
    %649 = vmatpush1.msra.mxu0 %v59
    %650 = vmatprep.subr.mxu0 0.0
    %651 = vmatpush1.msra.mxu0 %v60
    %652 = vmatprep.subr.mxu0 0.0
    %653 = vmatpush1.msra.mxu0 %v61
    %654 = vmatprep.subr.mxu0 0.0
    %655 = vmatpush1.msra.mxu0 0.0
    %656 = vmatprep.subr.mxu0 0.0
    %657 = vmatpush1.msra.mxu0 0.0
    %658 = vmatprep.subr.mxu0 0.0
    %659 = vmatpush1.msra.mxu0 0.0
    %660 = vmatprep.subr.mxu0 0.0
    %661 = vmatpush1.msra.mxu0 0.0
    %662 = vmatprep.subr.mxu0 0.0
    %663 = vmatpush1.msra.mxu0 0.0
    %664 = vmatprep.subr.mxu0 0.0
    %665 = vmatpush1.msra.mxu0 0.0
    %666 = vmatprep.subr.mxu0 0.0
    %667 = vmatpush1.msra.mxu0 0.0
    %668 = vmatprep.subr.mxu0 0.0
    %669 = vmatpush1.msra.mxu0 0.0
    %670 = vmatprep.subr.mxu0 0.0
    %671 = vmatpush1.msra.mxu0 0.0
    %672 = vmatprep.subr.mxu0 0.0
    %673 = vmatpush1.msra.mxu0 0.0
    %674 = vmatprep.subr.mxu0 0.0
    %675 = vmatpush1.msra.mxu0 0.0
    %676 = vmatprep.subr.mxu0 0.0
    %677 = vmatpush1.msra.mxu0 0.0
    %678 = vmatprep.subr.mxu0 0.0
    %679 = vmatpush1.msra.mxu0 0.0
    %680 = vmatprep.subr.mxu0 0.0
    %681 = vmatpush1.msra.mxu0 0.0
    %682 = vmatprep.subr.mxu0 0.0
    %683 = vmatpush1.msra.mxu0 0.0
    %684 = vmatprep.subr.mxu0 0.0
    %685 = vmatpush1.msra.mxu0 0.0
    %686 = vmatprep.subr.mxu0 0.0
    %687 = vmatpush1.msra.mxu0 0.0
    %688 = vmatprep.subr.mxu0 0.0
    %689 = vmatpush1.msra.mxu0 0.0
    %690 = vmatprep.subr.mxu0 0.0
    %691 = vmatpush1.msra.mxu0 0.0
    %692 = vmatprep.subr.mxu0 0.0
    %693 = vmatpush1.msra.mxu0 0.0
    %694 = vmatprep.subr.mxu0 0.0
    %695 = vmatpush1.msra.mxu0 0.0
    %696 = vmatprep.subr.mxu0 0.0
    %697 = vmatpush1.msra.mxu0 0.0
    %698 = vmatprep.subr.mxu0 0.0
    %699 = vmatpush1.msra.mxu0 0.0
    %700 = vmatprep.subr.mxu0 0.0
    %701 = vmatpush1.msra.mxu0 0.0
    %702 = vmatprep.subr.mxu0 0.0
    %703 = vmatpush1.msra.mxu0 0.0
    %704 = vmatprep.subr.mxu0 0.0
    %705 = vmatpush1.msra.mxu0 0.0
    %706 = vmatprep.subr.mxu0 0.0
    %707 = vmatpush1.msra.mxu0 0.0
    %708 = vmatprep.subr.mxu0 0.0
    %709 = vmatpush1.msra.mxu0 0.0
    %710 = vmatprep.mubr.f32.mxu0 0.0
    %711 = vmatmul.mubr.f32.gmra.mrb[0].mxu0 %v644
    %v712 = vpop.f32.mrb[0].mxu0
    %v713 = vadd.f32 %v155, %v712
    %v714 = vpop.f32.mrb[0].mxu0
    %715 = vdwg.mxu0
    %v716 = vxor.u32 %v713, 2147483648
    %v717 = vmul.f32 %v716, 1.442695
    %v718 = vpow.pop %v717
    %v719 = vadd.f32 %v718, 1.0
    %v720 = vrcp.pop %v719
    %v721 = vmul.f32 1.0, %v720
    %v722 = vtanh.pop %v713
    %v723 = vmul.f32 %v721, %v634
    %725 = vrot.lane.b32.xlu0 %v722, 64
    %v726 = vpop.permute.xlu0 %725
    %v728 = vmul.f32 %v721, %v726
    %730 = vrot.lane.b32.xlu0 %v728, 32
    %v731 = vpop.permute.xlu0 %730
    %v733 = vadd.f32 %v723, %v731
    %v734 = vtanh.pop %v733
    %736 = vrot.lane.b32.xlu0 %v734, 64
    %v737 = vpop.permute.xlu0 %736
    %v739 = vmul.f32 %v721, %v737
    %741 = vrot.lane.b32.xlu0 %v739, 32
    %v742 = vpop.permute.xlu0 %741
    %v744 = vrot.slane %v155, 2
    %v746 = vsel %vm239, %v742, 0
    %748 = vmatprep.subr.mxu0 0.0
    %749 = vmatpush1.msra.mxu0 %v58
    %750 = vmatprep.subr.mxu0 0.0
    %751 = vmatpush1.msra.mxu0 %v59
    %752 = vmatprep.subr.mxu0 0.0
    %753 = vmatpush1.msra.mxu0 %v60
    %754 = vmatprep.subr.mxu0 0.0
    %755 = vmatpush1.msra.mxu0 %v61
    %756 = vmatprep.subr.mxu0 0.0
    %757 = vmatpush1.msra.mxu0 0.0
    %758 = vmatprep.subr.mxu0 0.0
    %759 = vmatpush1.msra.mxu0 0.0
    %760 = vmatprep.subr.mxu0 0.0
    %761 = vmatpush1.msra.mxu0 0.0
    %762 = vmatprep.subr.mxu0 0.0
    %763 = vmatpush1.msra.mxu0 0.0
    %764 = vmatprep.subr.mxu0 0.0
    %765 = vmatpush1.msra.mxu0 0.0
    %766 = vmatprep.subr.mxu0 0.0
    %767 = vmatpush1.msra.mxu0 0.0
    %768 = vmatprep.subr.mxu0 0.0
    %769 = vmatpush1.msra.mxu0 0.0
    %770 = vmatprep.subr.mxu0 0.0
    %771 = vmatpush1.msra.mxu0 0.0
    %772 = vmatprep.subr.mxu0 0.0
    %773 = vmatpush1.msra.mxu0 0.0
    %774 = vmatprep.subr.mxu0 0.0
    %775 = vmatpush1.msra.mxu0 0.0
    %776 = vmatprep.subr.mxu0 0.0
    %777 = vmatpush1.msra.mxu0 0.0
    %778 = vmatprep.subr.mxu0 0.0
    %779 = vmatpush1.msra.mxu0 0.0
    %780 = vmatprep.subr.mxu0 0.0
    %781 = vmatpush1.msra.mxu0 0.0
    %782 = vmatprep.subr.mxu0 0.0
    %783 = vmatpush1.msra.mxu0 0.0
    %784 = vmatprep.subr.mxu0 0.0
    %785 = vmatpush1.msra.mxu0 0.0
    %786 = vmatprep.subr.mxu0 0.0
    %787 = vmatpush1.msra.mxu0 0.0
    %788 = vmatprep.subr.mxu0 0.0
    %789 = vmatpush1.msra.mxu0 0.0
    %790 = vmatprep.subr.mxu0 0.0
    %791 = vmatpush1.msra.mxu0 0.0
    %792 = vmatprep.subr.mxu0 0.0
    %793 = vmatpush1.msra.mxu0 0.0
    %794 = vmatprep.subr.mxu0 0.0
    %795 = vmatpush1.msra.mxu0 0.0
    %796 = vmatprep.subr.mxu0 0.0
    %797 = vmatpush1.msra.mxu0 0.0
    %798 = vmatprep.subr.mxu0 0.0
    %799 = vmatpush1.msra.mxu0 0.0
    %800 = vmatprep.subr.mxu0 0.0
    %801 = vmatpush1.msra.mxu0 0.0
    %802 = vmatprep.subr.mxu0 0.0
    %803 = vmatpush1.msra.mxu0 0.0
    %804 = vmatprep.subr.mxu0 0.0
    %805 = vmatpush1.msra.mxu0 0.0
    %806 = vmatprep.subr.mxu0 0.0
    %807 = vmatpush1.msra.mxu0 0.0
    %808 = vmatprep.subr.mxu0 0.0
    %809 = vmatpush1.msra.mxu0 0.0
    %810 = vmatprep.subr.mxu0 0.0
    %811 = vmatpush1.msra.mxu0 0.0
    %812 = vmatprep.mubr.f32.mxu0 0.0
    %813 = vmatmul.mubr.f32.gmra.mrb[0].mxu0 %v746
    %v814 = vpop.f32.mrb[0].mxu0
    %v815 = vadd.f32 %v744, %v814
    %v816 = vpop.f32.mrb[0].mxu0
    %817 = vdwg.mxu0
    %v818 = vxor.u32 %v815, 2147483648
    %v819 = vmul.f32 %v818, 1.442695
    %v820 = vpow.pop %v819
    %v821 = vadd.f32 %v820, 1.0
    %v822 = vrcp.pop %v821
    %v823 = vmul.f32 1.0, %v822
    %v824 = vtanh.pop %v815
    %v825 = vmul.f32 %v823, %v733
    %827 = vrot.lane.b32.xlu0 %v824, 64
    %v828 = vpop.permute.xlu0 %827
    %v830 = vmul.f32 %v823, %v828
    %832 = vrot.lane.b32.xlu0 %v830, 32
    %v833 = vpop.permute.xlu0 %832
    %v835 = vadd.f32 %v825, %v833
    %v836 = vtanh.pop %v835
    %838 = vrot.lane.b32.xlu0 %v836, 64
    %v839 = vpop.permute.xlu0 %838
    %v841 = vmul.f32 %v823, %v839
    %843 = vrot.lane.b32.xlu0 %v841, 32
    %v844 = vpop.permute.xlu0 %843
    %v845 = vrot.slane %v155, 4
    %v847 = vsel %vm239, %v844, 0
    %849 = vmatprep.subr.mxu0 0.0
    %850 = vmatpush1.msra.mxu0 %v58
    %851 = vmatprep.subr.mxu0 0.0
    %852 = vmatpush1.msra.mxu0 %v59
    %853 = vmatprep.subr.mxu0 0.0
    %854 = vmatpush1.msra.mxu0 %v60
    %855 = vmatprep.subr.mxu0 0.0
    %856 = vmatpush1.msra.mxu0 %v61
    %857 = vmatprep.subr.mxu0 0.0
    %858 = vmatpush1.msra.mxu0 0.0
    %859 = vmatprep.subr.mxu0 0.0
    %860 = vmatpush1.msra.mxu0 0.0
    %861 = vmatprep.subr.mxu0 0.0
    %862 = vmatpush1.msra.mxu0 0.0
    %863 = vmatprep.subr.mxu0 0.0
    %864 = vmatpush1.msra.mxu0 0.0
    %865 = vmatprep.subr.mxu0 0.0
    %866 = vmatpush1.msra.mxu0 0.0
    %867 = vmatprep.subr.mxu0 0.0
    %868 = vmatpush1.msra.mxu0 0.0
    %869 = vmatprep.subr.mxu0 0.0
    %870 = vmatpush1.msra.mxu0 0.0
    %871 = vmatprep.subr.mxu0 0.0
    %872 = vmatpush1.msra.mxu0 0.0
    %873 = vmatprep.subr.mxu0 0.0
    %874 = vmatpush1.msra.mxu0 0.0
    %875 = vmatprep.subr.mxu0 0.0
    %876 = vmatpush1.msra.mxu0 0.0
    %877 = vmatprep.subr.mxu0 0.0
    %878 = vmatpush1.msra.mxu0 0.0
    %879 = vmatprep.subr.mxu0 0.0
    %880 = vmatpush1.msra.mxu0 0.0
    %881 = vmatprep.subr.mxu0 0.0
    %882 = vmatpush1.msra.mxu0 0.0
    %883 = vmatprep.subr.mxu0 0.0
    %884 = vmatpush1.msra.mxu0 0.0
    %885 = vmatprep.subr.mxu0 0.0
    %886 = vmatpush1.msra.mxu0 0.0
    %887 = vmatprep.subr.mxu0 0.0
    %888 = vmatpush1.msra.mxu0 0.0
    %889 = vmatprep.subr.mxu0 0.0
    %890 = vmatpush1.msra.mxu0 0.0
    %891 = vmatprep.subr.mxu0 0.0
    %892 = vmatpush1.msra.mxu0 0.0
    %893 = vmatprep.subr.mxu0 0.0
    %894 = vmatpush1.msra.mxu0 0.0
    %895 = vmatprep.subr.mxu0 0.0
    %896 = vmatpush1.msra.mxu0 0.0
    %897 = vmatprep.subr.mxu0 0.0
    %898 = vmatpush1.msra.mxu0 0.0
    %899 = vmatprep.subr.mxu0 0.0
    %900 = vmatpush1.msra.mxu0 0.0
    %901 = vmatprep.subr.mxu0 0.0
    %902 = vmatpush1.msra.mxu0 0.0
    %903 = vmatprep.subr.mxu0 0.0
    %904 = vmatpush1.msra.mxu0 0.0
    %905 = vmatprep.subr.mxu0 0.0
    %906 = vmatpush1.msra.mxu0 0.0
    %907 = vmatprep.subr.mxu0 0.0
    %908 = vmatpush1.msra.mxu0 0.0
    %909 = vmatprep.subr.mxu0 0.0
    %910 = vmatpush1.msra.mxu0 0.0
    %911 = vmatprep.subr.mxu0 0.0
    %912 = vmatpush1.msra.mxu0 0.0
    %913 = vmatprep.mubr.f32.mxu0 0.0
    %914 = vmatmul.mubr.f32.gmra.mrb[0].mxu0 %v847
    %v915 = vpop.f32.mrb[0].mxu0
    %v916 = vadd.f32 %v845, %v915
    %v917 = vpop.f32.mrb[0].mxu0
    %918 = vdwg.mxu0
    %v919 = vxor.u32 %v916, 2147483648
    %v920 = vmul.f32 %v919, 1.442695
    %v921 = vpow.pop %v920
    %v922 = vadd.f32 %v921, 1.0
    %v923 = vrcp.pop %v922
    %v924 = vmul.f32 1.0, %v923
    %v925 = vtanh.pop %v916
    %v926 = vmul.f32 %v924, %v835
    %928 = vrot.lane.b32.xlu0 %v925, 64
    %v929 = vpop.permute.xlu0 %928
    %v931 = vmul.f32 %v924, %v929
    %933 = vrot.lane.b32.xlu0 %v931, 32
    %v934 = vpop.permute.xlu0 %933
    %v936 = vadd.f32 %v926, %v934
    %v937 = vtanh.pop %v936
    %939 = vrot.lane.b32.xlu0 %v937, 64
    %v940 = vpop.permute.xlu0 %939
    %v942 = vmul.f32 %v924, %v940
    %944 = vrot.lane.b32.xlu0 %v942, 32
    %v945 = vpop.permute.xlu0 %944
    %v946 = vrot.slane %v155, 6
    %v948 = vsel %vm239, %v945, 0
    %950 = vmatprep.subr.mxu0 0.0
    %951 = vmatpush1.msra.mxu0 %v58
    %952 = vmatprep.subr.mxu0 0.0
    %953 = vmatpush1.msra.mxu0 %v59
    %954 = vmatprep.subr.mxu0 0.0
    %955 = vmatpush1.msra.mxu0 %v60
    %956 = vmatprep.subr.mxu0 0.0
    %957 = vmatpush1.msra.mxu0 %v61
    %958 = vmatprep.subr.mxu0 0.0
    %959 = vmatpush1.msra.mxu0 0.0
    %960 = vmatprep.subr.mxu0 0.0
    %961 = vmatpush1.msra.mxu0 0.0
    %962 = vmatprep.subr.mxu0 0.0
    %963 = vmatpush1.msra.mxu0 0.0
    %964 = vmatprep.subr.mxu0 0.0
    %965 = vmatpush1.msra.mxu0 0.0
    %966 = vmatprep.subr.mxu0 0.0
    %967 = vmatpush1.msra.mxu0 0.0
    %968 = vmatprep.subr.mxu0 0.0
    %969 = vmatpush1.msra.mxu0 0.0
    %970 = vmatprep.subr.mxu0 0.0
    %971 = vmatpush1.msra.mxu0 0.0
    %972 = vmatprep.subr.mxu0 0.0
    %973 = vmatpush1.msra.mxu0 0.0
    %974 = vmatprep.subr.mxu0 0.0
    %975 = vmatpush1.msra.mxu0 0.0
    %976 = vmatprep.subr.mxu0 0.0
    %977 = vmatpush1.msra.mxu0 0.0
    %978 = vmatprep.subr.mxu0 0.0
    %979 = vmatpush1.msra.mxu0 0.0
    %980 = vmatprep.subr.mxu0 0.0
    %981 = vmatpush1.msra.mxu0 0.0
    %982 = vmatprep.subr.mxu0 0.0
    %983 = vmatpush1.msra.mxu0 0.0
    %984 = vmatprep.subr.mxu0 0.0
    %985 = vmatpush1.msra.mxu0 0.0
    %986 = vmatprep.subr.mxu0 0.0
    %987 = vmatpush1.msra.mxu0 0.0
    %988 = vmatprep.subr.mxu0 0.0
    %989 = vmatpush1.msra.mxu0 0.0
    %990 = vmatprep.subr.mxu0 0.0
    %991 = vmatpush1.msra.mxu0 0.0
    %992 = vmatprep.subr.mxu0 0.0
    %993 = vmatpush1.msra.mxu0 0.0
    %994 = vmatprep.subr.mxu0 0.0
    %995 = vmatpush1.msra.mxu0 0.0
    %996 = vmatprep.subr.mxu0 0.0
    %997 = vmatpush1.msra.mxu0 0.0
    %998 = vmatprep.subr.mxu0 0.0
    %999 = vmatpush1.msra.mxu0 0.0
    %1000 = vmatprep.subr.mxu0 0.0
    %1001 = vmatpush1.msra.mxu0 0.0
    %1002 = vmatprep.subr.mxu0 0.0
    %1003 = vmatpush1.msra.mxu0 0.0
    %1004 = vmatprep.subr.mxu0 0.0
    %1005 = vmatpush1.msra.mxu0 0.0
    %1006 = vmatprep.subr.mxu0 0.0
    %1007 = vmatpush1.msra.mxu0 0.0
    %1008 = vmatprep.subr.mxu0 0.0
    %1009 = vmatpush1.msra.mxu0 0.0
    %1010 = vmatprep.subr.mxu0 0.0
    %1011 = vmatpush1.msra.mxu0 0.0
    %1012 = vmatprep.subr.mxu0 0.0
    %1013 = vmatpush1.msra.mxu0 0.0
    %1014 = vmatprep.mubr.f32.mxu0 0.0
    %1015 = vmatmul.mubr.f32.gmra.mrb[0].mxu0 %v948
    %v1016 = vpop.f32.mrb[0].mxu0
    %v1017 = vadd.f32 %v946, %v1016
    %v1018 = vpop.f32.mrb[0].mxu0
    %1019 = vdwg.mxu0
    %v1020 = vxor.u32 %v1017, 2147483648
    %v1021 = vmul.f32 %v1020, 1.442695
    %v1022 = vpow.pop %v1021
    %v1023 = vadd.f32 %v1022, 1.0
    %v1024 = vrcp.pop %v1023
    %v1025 = vmul.f32 1.0, %v1024
    %v1026 = vtanh.pop %v1017
    %v1027 = vmul.f32 %v1025, %v936
    %1029 = vrot.lane.b32.xlu0 %v1026, 64
    %v1030 = vpop.permute.xlu0 %1029
    %v1032 = vmul.f32 %v1025, %v1030
    %1034 = vrot.lane.b32.xlu0 %v1032, 32
    %v1035 = vpop.permute.xlu0 %1034
    %v1037 = vadd.f32 %v1027, %v1035
    %v1038 = vtanh.pop %v1037
    %1040 = vrot.lane.b32.xlu0 %v1038, 64
    %v1041 = vpop.permute.xlu0 %1040
    %v1043 = vmul.f32 %v1025, %v1041
    %v1045 = vrot.slane %v236, 6
    %1047 = vmatprep.subr.mxu0 0.0
    %1048 = vmatpush1.msra.mxu0 %v65
    %1049 = vmatprep.subr.mxu0 0.0
    %1050 = vmatpush1.msra.mxu0 %v66
    %1051 = vmatprep.subr.mxu0 0.0
    %1052 = vmatpush1.msra.mxu0 %v67
    %1053 = vmatprep.subr.mxu0 0.0
    %1054 = vmatpush1.msra.mxu0 %v68
    %1055 = vmatprep.subr.mxu0 0.0
    %1056 = vmatpush1.msra.mxu0 0.0
    %1057 = vmatprep.subr.mxu0 0.0
    %1058 = vmatpush1.msra.mxu0 0.0
    %1059 = vmatprep.subr.mxu0 0.0
    %1060 = vmatpush1.msra.mxu0 0.0
    %1061 = vmatprep.subr.mxu0 0.0
    %1062 = vmatpush1.msra.mxu0 0.0
    %1063 = vmatprep.subr.mxu0 0.0
    %1064 = vmatpush1.msra.mxu0 0.0
    %1065 = vmatprep.subr.mxu0 0.0
    %1066 = vmatpush1.msra.mxu0 0.0
    %1067 = vmatprep.subr.mxu0 0.0
    %1068 = vmatpush1.msra.mxu0 0.0
    %1069 = vmatprep.subr.mxu0 0.0
    %1070 = vmatpush1.msra.mxu0 0.0
    %1071 = vmatprep.subr.mxu0 0.0
    %1072 = vmatpush1.msra.mxu0 0.0
    %1073 = vmatprep.subr.mxu0 0.0
    %1074 = vmatpush1.msra.mxu0 0.0
    %1075 = vmatprep.subr.mxu0 0.0
    %1076 = vmatpush1.msra.mxu0 0.0
    %1077 = vmatprep.subr.mxu0 0.0
    %1078 = vmatpush1.msra.mxu0 0.0
    %1079 = vmatprep.subr.mxu0 0.0
    %1080 = vmatpush1.msra.mxu0 0.0
    %1081 = vmatprep.subr.mxu0 0.0
    %1082 = vmatpush1.msra.mxu0 0.0
    %1083 = vmatprep.subr.mxu0 0.0
    %1084 = vmatpush1.msra.mxu0 0.0
    %1085 = vmatprep.subr.mxu0 0.0
    %1086 = vmatpush1.msra.mxu0 0.0
    %1087 = vmatprep.subr.mxu0 0.0
    %1088 = vmatpush1.msra.mxu0 0.0
    %1089 = vmatprep.subr.mxu0 0.0
    %1090 = vmatpush1.msra.mxu0 0.0
    %1091 = vmatprep.subr.mxu0 0.0
    %1092 = vmatpush1.msra.mxu0 0.0
    %1093 = vmatprep.subr.mxu0 0.0
    %1094 = vmatpush1.msra.mxu0 0.0
    %1095 = vmatprep.subr.mxu0 0.0
    %1096 = vmatpush1.msra.mxu0 0.0
    %1097 = vmatprep.subr.mxu0 0.0
    %1098 = vmatpush1.msra.mxu0 0.0
    %1099 = vmatprep.subr.mxu0 0.0
    %1100 = vmatpush1.msra.mxu0 0.0
    %1101 = vmatprep.subr.mxu0 0.0
    %1102 = vmatpush1.msra.mxu0 0.0
    %1103 = vmatprep.subr.mxu0 0.0
    %1104 = vmatpush1.msra.mxu0 0.0
    %1105 = vmatprep.subr.mxu0 0.0
    %1106 = vmatpush1.msra.mxu0 0.0
    %1107 = vmatprep.subr.mxu0 0.0
    %1108 = vmatpush1.msra.mxu0 0.0
    %1109 = vmatprep.subr.mxu0 0.0
    %1110 = vmatpush1.msra.mxu0 0.0
    %1111 = vmatprep.mubr.f32.mxu0 0.0
    %1112 = vmatmul.mubr.f32.gmra.mrb[0].mxu0 %v241
    %v1113 = vpop.f32.mrb[0].mxu0
    %v1114 = vadd.f32 %v1045, %v1113
    %v1115 = vpop.f32.mrb[0].mxu0
    %1116 = vdwg.mxu0
    %v1117 = vxor.u32 %v1114, 2147483648
    %v1118 = vmul.f32 %v1117, 1.442695
    %v1119 = vpow.pop %v1118
    %v1120 = vadd.f32 %v1119, 1.0
    %v1121 = vrcp.pop %v1120
    %v1122 = vmul.f32 1.0, %v1121
    %v1123 = vtanh.pop %v1114
    %v1124 = vmul.f32 %v1122, 0.0
    %1126 = vrot.lane.b32.xlu0 %v1123, 64
    %v1127 = vpop.permute.xlu0 %1126
    %v1129 = vmul.f32 %v1122, %v1127
    %1131 = vrot.lane.b32.xlu0 %v1129, 32
    %v1132 = vpop.permute.xlu0 %1131
    %v1134 = vadd.f32 %v1124, %v1132
    %v1135 = vtanh.pop %v1134
    %1137 = vrot.lane.b32.xlu0 %v1135, 64
    %v1138 = vpop.permute.xlu0 %1137
    %v1140 = vmul.f32 %v1122, %v1138
    %1142 = vrot.lane.b32.xlu0 %v1140, 32
    %v1143 = vpop.permute.xlu0 %1142
    %v1144 = vrot.slane %v236, 4
    %v1146 = vsel %vm239, %v1143, 0
    %1148 = vmatprep.subr.mxu0 0.0
    %1149 = vmatpush1.msra.mxu0 %v65
    %1150 = vmatprep.subr.mxu0 0.0
    %1151 = vmatpush1.msra.mxu0 %v66
    %1152 = vmatprep.subr.mxu0 0.0
    %1153 = vmatpush1.msra.mxu0 %v67
    %1154 = vmatprep.subr.mxu0 0.0
    %1155 = vmatpush1.msra.mxu0 %v68
    %1156 = vmatprep.subr.mxu0 0.0
    %1157 = vmatpush1.msra.mxu0 0.0
    %1158 = vmatprep.subr.mxu0 0.0
    %1159 = vmatpush1.msra.mxu0 0.0
    %1160 = vmatprep.subr.mxu0 0.0
    %1161 = vmatpush1.msra.mxu0 0.0
    %1162 = vmatprep.subr.mxu0 0.0
    %1163 = vmatpush1.msra.mxu0 0.0
    %1164 = vmatprep.subr.mxu0 0.0
    %1165 = vmatpush1.msra.mxu0 0.0
    %1166 = vmatprep.subr.mxu0 0.0
    %1167 = vmatpush1.msra.mxu0 0.0
    %1168 = vmatprep.subr.mxu0 0.0
    %1169 = vmatpush1.msra.mxu0 0.0
    %1170 = vmatprep.subr.mxu0 0.0
    %1171 = vmatpush1.msra.mxu0 0.0
    %1172 = vmatprep.subr.mxu0 0.0
    %1173 = vmatpush1.msra.mxu0 0.0
    %1174 = vmatprep.subr.mxu0 0.0
    %1175 = vmatpush1.msra.mxu0 0.0
    %1176 = vmatprep.subr.mxu0 0.0
    %1177 = vmatpush1.msra.mxu0 0.0
    %1178 = vmatprep.subr.mxu0 0.0
    %1179 = vmatpush1.msra.mxu0 0.0
    %1180 = vmatprep.subr.mxu0 0.0
    %1181 = vmatpush1.msra.mxu0 0.0
    %1182 = vmatprep.subr.mxu0 0.0
    %1183 = vmatpush1.msra.mxu0 0.0
    %1184 = vmatprep.subr.mxu0 0.0
    %1185 = vmatpush1.msra.mxu0 0.0
    %1186 = vmatprep.subr.mxu0 0.0
    %1187 = vmatpush1.msra.mxu0 0.0
    %1188 = vmatprep.subr.mxu0 0.0
    %1189 = vmatpush1.msra.mxu0 0.0
    %1190 = vmatprep.subr.mxu0 0.0
    %1191 = vmatpush1.msra.mxu0 0.0
    %1192 = vmatprep.subr.mxu0 0.0
    %1193 = vmatpush1.msra.mxu0 0.0
    %1194 = vmatprep.subr.mxu0 0.0
    %1195 = vmatpush1.msra.mxu0 0.0
    %1196 = vmatprep.subr.mxu0 0.0
    %1197 = vmatpush1.msra.mxu0 0.0
    %1198 = vmatprep.subr.mxu0 0.0
    %1199 = vmatpush1.msra.mxu0 0.0
    %1200 = vmatprep.subr.mxu0 0.0
    %1201 = vmatpush1.msra.mxu0 0.0
    %1202 = vmatprep.subr.mxu0 0.0
    %1203 = vmatpush1.msra.mxu0 0.0
    %1204 = vmatprep.subr.mxu0 0.0
    %1205 = vmatpush1.msra.mxu0 0.0
    %1206 = vmatprep.subr.mxu0 0.0
    %1207 = vmatpush1.msra.mxu0 0.0
    %1208 = vmatprep.subr.mxu0 0.0
    %1209 = vmatpush1.msra.mxu0 0.0
    %1210 = vmatprep.subr.mxu0 0.0
    %1211 = vmatpush1.msra.mxu0 0.0
    %1212 = vmatprep.mubr.f32.mxu0 0.0
    %1213 = vmatmul.mubr.f32.gmra.mrb[0].mxu0 %v1146
    %v1214 = vpop.f32.mrb[0].mxu0
    %v1215 = vadd.f32 %v1144, %v1214
    %v1216 = vpop.f32.mrb[0].mxu0
    %1217 = vdwg.mxu0
    %v1218 = vxor.u32 %v1215, 2147483648
    %v1219 = vmul.f32 %v1218, 1.442695
    %v1220 = vpow.pop %v1219
    %v1221 = vadd.f32 %v1220, 1.0
    %v1222 = vrcp.pop %v1221
    %v1223 = vmul.f32 1.0, %v1222
    %v1224 = vtanh.pop %v1215
    %v1225 = vmul.f32 %v1223, %v1134
    %1227 = vrot.lane.b32.xlu0 %v1224, 64
    %v1228 = vpop.permute.xlu0 %1227
    %v1230 = vmul.f32 %v1223, %v1228
    %1232 = vrot.lane.b32.xlu0 %v1230, 32
    %v1233 = vpop.permute.xlu0 %1232
    %v1235 = vadd.f32 %v1225, %v1233
    %v1236 = vtanh.pop %v1235
    %1238 = vrot.lane.b32.xlu0 %v1236, 64
    %v1239 = vpop.permute.xlu0 %1238
    %v1241 = vmul.f32 %v1223, %v1239
    %1243 = vrot.lane.b32.xlu0 %v1241, 32
    %v1244 = vpop.permute.xlu0 %1243
    %v1245 = vrot.slane %v236, 2
    %v1247 = vsel %vm239, %v1244, 0
    %1249 = vmatprep.subr.mxu0 0.0
    %1250 = vmatpush1.msra.mxu0 %v65
    %1251 = vmatprep.subr.mxu0 0.0
    %1252 = vmatpush1.msra.mxu0 %v66
    %1253 = vmatprep.subr.mxu0 0.0
    %1254 = vmatpush1.msra.mxu0 %v67
    %1255 = vmatprep.subr.mxu0 0.0
    %1256 = vmatpush1.msra.mxu0 %v68
    %1257 = vmatprep.subr.mxu0 0.0
    %1258 = vmatpush1.msra.mxu0 0.0
    %1259 = vmatprep.subr.mxu0 0.0
    %1260 = vmatpush1.msra.mxu0 0.0
    %1261 = vmatprep.subr.mxu0 0.0
    %1262 = vmatpush1.msra.mxu0 0.0
    %1263 = vmatprep.subr.mxu0 0.0
    %1264 = vmatpush1.msra.mxu0 0.0
    %1265 = vmatprep.subr.mxu0 0.0
    %1266 = vmatpush1.msra.mxu0 0.0
    %1267 = vmatprep.subr.mxu0 0.0
    %1268 = vmatpush1.msra.mxu0 0.0
    %1269 = vmatprep.subr.mxu0 0.0
    %1270 = vmatpush1.msra.mxu0 0.0
    %1271 = vmatprep.subr.mxu0 0.0
    %1272 = vmatpush1.msra.mxu0 0.0
    %1273 = vmatprep.subr.mxu0 0.0
    %1274 = vmatpush1.msra.mxu0 0.0
    %1275 = vmatprep.subr.mxu0 0.0
    %1276 = vmatpush1.msra.mxu0 0.0
    %1277 = vmatprep.subr.mxu0 0.0
    %1278 = vmatpush1.msra.mxu0 0.0
    %1279 = vmatprep.subr.mxu0 0.0
    %1280 = vmatpush1.msra.mxu0 0.0
    %1281 = vmatprep.subr.mxu0 0.0
    %1282 = vmatpush1.msra.mxu0 0.0
    %1283 = vmatprep.subr.mxu0 0.0
    %1284 = vmatpush1.msra.mxu0 0.0
    %1285 = vmatprep.subr.mxu0 0.0
    %1286 = vmatpush1.msra.mxu0 0.0
    %1287 = vmatprep.subr.mxu0 0.0
    %1288 = vmatpush1.msra.mxu0 0.0
    %1289 = vmatprep.subr.mxu0 0.0
    %1290 = vmatpush1.msra.mxu0 0.0
    %1291 = vmatprep.subr.mxu0 0.0
    %1292 = vmatpush1.msra.mxu0 0.0
    %1293 = vmatprep.subr.mxu0 0.0
    %1294 = vmatpush1.msra.mxu0 0.0
    %1295 = vmatprep.subr.mxu0 0.0
    %1296 = vmatpush1.msra.mxu0 0.0
    %1297 = vmatprep.subr.mxu0 0.0
    %1298 = vmatpush1.msra.mxu0 0.0
    %1299 = vmatprep.subr.mxu0 0.0
    %1300 = vmatpush1.msra.mxu0 0.0
    %1301 = vmatprep.subr.mxu0 0.0
    %1302 = vmatpush1.msra.mxu0 0.0
    %1303 = vmatprep.subr.mxu0 0.0
    %1304 = vmatpush1.msra.mxu0 0.0
    %1305 = vmatprep.subr.mxu0 0.0
    %1306 = vmatpush1.msra.mxu0 0.0
    %1307 = vmatprep.subr.mxu0 0.0
    %1308 = vmatpush1.msra.mxu0 0.0
    %1309 = vmatprep.subr.mxu0 0.0
    %1310 = vmatpush1.msra.mxu0 0.0
    %1311 = vmatprep.subr.mxu0 0.0
    %1312 = vmatpush1.msra.mxu0 0.0
    %1313 = vmatprep.mubr.f32.mxu0 0.0
    %1314 = vmatmul.mubr.f32.gmra.mrb[0].mxu0 %v1247
    %v1315 = vpop.f32.mrb[0].mxu0
    %v1316 = vadd.f32 %v1245, %v1315
    %v1317 = vpop.f32.mrb[0].mxu0
    %1318 = vdwg.mxu0
    %v1319 = vxor.u32 %v1316, 2147483648
    %v1320 = vmul.f32 %v1319, 1.442695
    %v1321 = vpow.pop %v1320
    %v1322 = vadd.f32 %v1321, 1.0
    %v1323 = vrcp.pop %v1322
    %v1324 = vmul.f32 1.0, %v1323
    %v1325 = vtanh.pop %v1316
    %v1326 = vmul.f32 %v1324, %v1235
    %1328 = vrot.lane.b32.xlu0 %v1325, 64
    %v1329 = vpop.permute.xlu0 %1328
    %v1331 = vmul.f32 %v1324, %v1329
    %1333 = vrot.lane.b32.xlu0 %v1331, 32
    %v1334 = vpop.permute.xlu0 %1333
    %v1336 = vadd.f32 %v1326, %v1334
    %v1337 = vtanh.pop %v1336
    %1339 = vrot.lane.b32.xlu0 %v1337, 64
    %v1340 = vpop.permute.xlu0 %1339
    %v1342 = vmul.f32 %v1324, %v1340
    %1344 = vrot.lane.b32.xlu0 %v1342, 32
    %v1345 = vpop.permute.xlu0 %1344
    %v1346 = vsel %vm239, %v1345, 0
    %1348 = vmatprep.subr.mxu0 0.0
    %1349 = vmatpush1.msra.mxu0 %v65
    %1350 = vmatprep.subr.mxu0 0.0
    %1351 = vmatpush1.msra.mxu0 %v66
    %1352 = vmatprep.subr.mxu0 0.0
    %1353 = vmatpush1.msra.mxu0 %v67
    %1354 = vmatprep.subr.mxu0 0.0
    %1355 = vmatpush1.msra.mxu0 %v68
    %1356 = vmatprep.subr.mxu0 0.0
    %1357 = vmatpush1.msra.mxu0 0.0
    %1358 = vmatprep.subr.mxu0 0.0
    %1359 = vmatpush1.msra.mxu0 0.0
    %1360 = vmatprep.subr.mxu0 0.0
    %1361 = vmatpush1.msra.mxu0 0.0
    %1362 = vmatprep.subr.mxu0 0.0
    %1363 = vmatpush1.msra.mxu0 0.0
    %1364 = vmatprep.subr.mxu0 0.0
    %1365 = vmatpush1.msra.mxu0 0.0
    %1366 = vmatprep.subr.mxu0 0.0
    %1367 = vmatpush1.msra.mxu0 0.0
    %1368 = vmatprep.subr.mxu0 0.0
    %1369 = vmatpush1.msra.mxu0 0.0
    %1370 = vmatprep.subr.mxu0 0.0
    %1371 = vmatpush1.msra.mxu0 0.0
    %1372 = vmatprep.subr.mxu0 0.0
    %1373 = vmatpush1.msra.mxu0 0.0
    %1374 = vmatprep.subr.mxu0 0.0
    %1375 = vmatpush1.msra.mxu0 0.0
    %1376 = vmatprep.subr.mxu0 0.0
    %1377 = vmatpush1.msra.mxu0 0.0
    %1378 = vmatprep.subr.mxu0 0.0
    %1379 = vmatpush1.msra.mxu0 0.0
    %1380 = vmatprep.subr.mxu0 0.0
    %1381 = vmatpush1.msra.mxu0 0.0
    %1382 = vmatprep.subr.mxu0 0.0
    %1383 = vmatpush1.msra.mxu0 0.0
    %1384 = vmatprep.subr.mxu0 0.0
    %1385 = vmatpush1.msra.mxu0 0.0
    %1386 = vmatprep.subr.mxu0 0.0
    %1387 = vmatpush1.msra.mxu0 0.0
    %1388 = vmatprep.subr.mxu0 0.0
    %1389 = vmatpush1.msra.mxu0 0.0
    %1390 = vmatprep.subr.mxu0 0.0
    %1391 = vmatpush1.msra.mxu0 0.0
    %1392 = vmatprep.subr.mxu0 0.0
    %1393 = vmatpush1.msra.mxu0 0.0
    %1394 = vmatprep.subr.mxu0 0.0
    %1395 = vmatpush1.msra.mxu0 0.0
    %1396 = vmatprep.subr.mxu0 0.0
    %1397 = vmatpush1.msra.mxu0 0.0
    %1398 = vmatprep.subr.mxu0 0.0
    %1399 = vmatpush1.msra.mxu0 0.0
    %1400 = vmatprep.subr.mxu0 0.0
    %1401 = vmatpush1.msra.mxu0 0.0
    %1402 = vmatprep.subr.mxu0 0.0
    %1403 = vmatpush1.msra.mxu0 0.0
    %1404 = vmatprep.subr.mxu0 0.0
    %1405 = vmatpush1.msra.mxu0 0.0
    %1406 = vmatprep.subr.mxu0 0.0
    %1407 = vmatpush1.msra.mxu0 0.0
    %1408 = vmatprep.subr.mxu0 0.0
    %1409 = vmatpush1.msra.mxu0 0.0
    %1410 = vmatprep.subr.mxu0 0.0
    %1411 = vmatpush1.msra.mxu0 0.0
    %1412 = vmatprep.mubr.f32.mxu0 0.0
    %1413 = vmatmul.mubr.f32.gmra.mrb[0].mxu0 %v1346
    %v1414 = vpop.f32.mrb[0].mxu0
    %v1415 = vadd.f32 %v236, %v1414
    %v1416 = vpop.f32.mrb[0].mxu0
    %1417 = vdwg.mxu0
    %v1418 = vxor.u32 %v1415, 2147483648
    %v1419 = vmul.f32 %v1418, 1.442695
    %v1420 = vpow.pop %v1419
    %v1421 = vadd.f32 %v1420, 1.0
    %v1422 = vrcp.pop %v1421
    %v1423 = vmul.f32 1.0, %v1422
    %v1424 = vtanh.pop %v1415
    %v1425 = vmul.f32 %v1423, %v1336
    %1427 = vrot.lane.b32.xlu0 %v1424, 64
    %v1428 = vpop.permute.xlu0 %1427
    %v1430 = vmul.f32 %v1423, %v1428
    %1432 = vrot.lane.b32.xlu0 %v1430, 32
    %v1433 = vpop.permute.xlu0 %1432
    %v1435 = vadd.f32 %v1425, %v1433
    %v1436 = vtanh.pop %v1435
    %1438 = vrot.lane.b32.xlu0 %v1436, 64
    %v1439 = vpop.permute.xlu0 %1438
    %v1441 = vmul.f32 %v1423, %v1439
    %1443 = vrot.lane.b32.xlu0 %v1441, 32
    %v1444 = vpop.permute.xlu0 %1443
    %v1446 = vrot.slane %v231, 6
    %v1448 = vsel %vm239, %v1444, 0
    %1450 = vmatprep.subr.mxu0 0.0
    %1451 = vmatpush1.msra.mxu0 %v65
    %1452 = vmatprep.subr.mxu0 0.0
    %1453 = vmatpush1.msra.mxu0 %v66
    %1454 = vmatprep.subr.mxu0 0.0
    %1455 = vmatpush1.msra.mxu0 %v67
    %1456 = vmatprep.subr.mxu0 0.0
    %1457 = vmatpush1.msra.mxu0 %v68
    %1458 = vmatprep.subr.mxu0 0.0
    %1459 = vmatpush1.msra.mxu0 0.0
    %1460 = vmatprep.subr.mxu0 0.0
    %1461 = vmatpush1.msra.mxu0 0.0
    %1462 = vmatprep.subr.mxu0 0.0
    %1463 = vmatpush1.msra.mxu0 0.0
    %1464 = vmatprep.subr.mxu0 0.0
    %1465 = vmatpush1.msra.mxu0 0.0
    %1466 = vmatprep.subr.mxu0 0.0
    %1467 = vmatpush1.msra.mxu0 0.0
    %1468 = vmatprep.subr.mxu0 0.0
    %1469 = vmatpush1.msra.mxu0 0.0
    %1470 = vmatprep.subr.mxu0 0.0
    %1471 = vmatpush1.msra.mxu0 0.0
    %1472 = vmatprep.subr.mxu0 0.0
    %1473 = vmatpush1.msra.mxu0 0.0
    %1474 = vmatprep.subr.mxu0 0.0
    %1475 = vmatpush1.msra.mxu0 0.0
    %1476 = vmatprep.subr.mxu0 0.0
    %1477 = vmatpush1.msra.mxu0 0.0
    %1478 = vmatprep.subr.mxu0 0.0
    %1479 = vmatpush1.msra.mxu0 0.0
    %1480 = vmatprep.subr.mxu0 0.0
    %1481 = vmatpush1.msra.mxu0 0.0
    %1482 = vmatprep.subr.mxu0 0.0
    %1483 = vmatpush1.msra.mxu0 0.0
    %1484 = vmatprep.subr.mxu0 0.0
    %1485 = vmatpush1.msra.mxu0 0.0
    %1486 = vmatprep.subr.mxu0 0.0
    %1487 = vmatpush1.msra.mxu0 0.0
    %1488 = vmatprep.subr.mxu0 0.0
    %1489 = vmatpush1.msra.mxu0 0.0
    %1490 = vmatprep.subr.mxu0 0.0
    %1491 = vmatpush1.msra.mxu0 0.0
    %1492 = vmatprep.subr.mxu0 0.0
    %1493 = vmatpush1.msra.mxu0 0.0
    %1494 = vmatprep.subr.mxu0 0.0
    %1495 = vmatpush1.msra.mxu0 0.0
    %1496 = vmatprep.subr.mxu0 0.0
    %1497 = vmatpush1.msra.mxu0 0.0
    %1498 = vmatprep.subr.mxu0 0.0
    %1499 = vmatpush1.msra.mxu0 0.0
    %1500 = vmatprep.subr.mxu0 0.0
    %1501 = vmatpush1.msra.mxu0 0.0
    %1502 = vmatprep.subr.mxu0 0.0
    %1503 = vmatpush1.msra.mxu0 0.0
    %1504 = vmatprep.subr.mxu0 0.0
    %1505 = vmatpush1.msra.mxu0 0.0
    %1506 = vmatprep.subr.mxu0 0.0
    %1507 = vmatpush1.msra.mxu0 0.0
    %1508 = vmatprep.subr.mxu0 0.0
    %1509 = vmatpush1.msra.mxu0 0.0
    %1510 = vmatprep.subr.mxu0 0.0
    %1511 = vmatpush1.msra.mxu0 0.0
    %1512 = vmatprep.subr.mxu0 0.0
    %1513 = vmatpush1.msra.mxu0 0.0
    %1514 = vmatprep.mubr.f32.mxu0 0.0
    %1515 = vmatmul.mubr.f32.gmra.mrb[0].mxu0 %v1448
    %v1516 = vpop.f32.mrb[0].mxu0
    %v1517 = vadd.f32 %v1446, %v1516
    %v1518 = vpop.f32.mrb[0].mxu0
    %1519 = vdwg.mxu0
    %v1520 = vxor.u32 %v1517, 2147483648
    %v1521 = vmul.f32 %v1520, 1.442695
    %v1522 = vpow.pop %v1521
    %v1523 = vadd.f32 %v1522, 1.0
    %v1524 = vrcp.pop %v1523
    %v1525 = vmul.f32 1.0, %v1524
    %v1526 = vtanh.pop %v1517
    %v1527 = vmul.f32 %v1525, %v1435
    %1529 = vrot.lane.b32.xlu0 %v1526, 64
    %v1530 = vpop.permute.xlu0 %1529
    %v1532 = vmul.f32 %v1525, %v1530
    %1534 = vrot.lane.b32.xlu0 %v1532, 32
    %v1535 = vpop.permute.xlu0 %1534
    %v1537 = vadd.f32 %v1527, %v1535
    %v1538 = vtanh.pop %v1537
    %1540 = vrot.lane.b32.xlu0 %v1538, 64
    %v1541 = vpop.permute.xlu0 %1540
    %v1543 = vmul.f32 %v1525, %v1541
    %1545 = vrot.lane.b32.xlu0 %v1543, 32
    %v1546 = vpop.permute.xlu0 %1545
    %v1547 = vrot.slane %v231, 4
    %v1549 = vsel %vm239, %v1546, 0
    %1551 = vmatprep.subr.mxu0 0.0
    %1552 = vmatpush1.msra.mxu0 %v65
    %1553 = vmatprep.subr.mxu0 0.0
    %1554 = vmatpush1.msra.mxu0 %v66
    %1555 = vmatprep.subr.mxu0 0.0
    %1556 = vmatpush1.msra.mxu0 %v67
    %1557 = vmatprep.subr.mxu0 0.0
    %1558 = vmatpush1.msra.mxu0 %v68
    %1559 = vmatprep.subr.mxu0 0.0
    %1560 = vmatpush1.msra.mxu0 0.0
    %1561 = vmatprep.subr.mxu0 0.0
    %1562 = vmatpush1.msra.mxu0 0.0
    %1563 = vmatprep.subr.mxu0 0.0
    %1564 = vmatpush1.msra.mxu0 0.0
    %1565 = vmatprep.subr.mxu0 0.0
    %1566 = vmatpush1.msra.mxu0 0.0
    %1567 = vmatprep.subr.mxu0 0.0
    %1568 = vmatpush1.msra.mxu0 0.0
    %1569 = vmatprep.subr.mxu0 0.0
    %1570 = vmatpush1.msra.mxu0 0.0
    %1571 = vmatprep.subr.mxu0 0.0
    %1572 = vmatpush1.msra.mxu0 0.0
    %1573 = vmatprep.subr.mxu0 0.0
    %1574 = vmatpush1.msra.mxu0 0.0
    %1575 = vmatprep.subr.mxu0 0.0
    %1576 = vmatpush1.msra.mxu0 0.0
    %1577 = vmatprep.subr.mxu0 0.0
    %1578 = vmatpush1.msra.mxu0 0.0
    %1579 = vmatprep.subr.mxu0 0.0
    %1580 = vmatpush1.msra.mxu0 0.0
    %1581 = vmatprep.subr.mxu0 0.0
    %1582 = vmatpush1.msra.mxu0 0.0
    %1583 = vmatprep.subr.mxu0 0.0
    %1584 = vmatpush1.msra.mxu0 0.0
    %1585 = vmatprep.subr.mxu0 0.0
    %1586 = vmatpush1.msra.mxu0 0.0
    %1587 = vmatprep.subr.mxu0 0.0
    %1588 = vmatpush1.msra.mxu0 0.0
    %1589 = vmatprep.subr.mxu0 0.0
    %1590 = vmatpush1.msra.mxu0 0.0
    %1591 = vmatprep.subr.mxu0 0.0
    %1592 = vmatpush1.msra.mxu0 0.0
    %1593 = vmatprep.subr.mxu0 0.0
    %1594 = vmatpush1.msra.mxu0 0.0
    %1595 = vmatprep.subr.mxu0 0.0
    %1596 = vmatpush1.msra.mxu0 0.0
    %1597 = vmatprep.subr.mxu0 0.0
    %1598 = vmatpush1.msra.mxu0 0.0
    %1599 = vmatprep.subr.mxu0 0.0
    %1600 = vmatpush1.msra.mxu0 0.0
    %1601 = vmatprep.subr.mxu0 0.0
    %1602 = vmatpush1.msra.mxu0 0.0
    %1603 = vmatprep.subr.mxu0 0.0
    %1604 = vmatpush1.msra.mxu0 0.0
    %1605 = vmatprep.subr.mxu0 0.0
    %1606 = vmatpush1.msra.mxu0 0.0
    %1607 = vmatprep.subr.mxu0 0.0
    %1608 = vmatpush1.msra.mxu0 0.0
    %1609 = vmatprep.subr.mxu0 0.0
    %1610 = vmatpush1.msra.mxu0 0.0
    %1611 = vmatprep.subr.mxu0 0.0
    %1612 = vmatpush1.msra.mxu0 0.0
    %1613 = vmatprep.subr.mxu0 0.0
    %1614 = vmatpush1.msra.mxu0 0.0
    %1615 = vmatprep.mubr.f32.mxu0 0.0
    %1616 = vmatmul.mubr.f32.gmra.mrb[0].mxu0 %v1549
    %v1617 = vpop.f32.mrb[0].mxu0
    %v1618 = vadd.f32 %v1547, %v1617
    %v1619 = vpop.f32.mrb[0].mxu0
    %1620 = vdwg.mxu0
    %v1621 = vxor.u32 %v1618, 2147483648
    %v1622 = vmul.f32 %v1621, 1.442695
    %v1623 = vpow.pop %v1622
    %v1624 = vadd.f32 %v1623, 1.0
    %v1625 = vrcp.pop %v1624
    %v1626 = vmul.f32 1.0, %v1625
    %v1627 = vtanh.pop %v1618
    %v1628 = vmul.f32 %v1626, %v1537
    %1630 = vrot.lane.b32.xlu0 %v1627, 64
    %v1631 = vpop.permute.xlu0 %1630
    %v1633 = vmul.f32 %v1626, %v1631
    %1635 = vrot.lane.b32.xlu0 %v1633, 32
    %v1636 = vpop.permute.xlu0 %1635
    %v1638 = vadd.f32 %v1628, %v1636
    %v1639 = vtanh.pop %v1638
    %1641 = vrot.lane.b32.xlu0 %v1639, 64
    %v1642 = vpop.permute.xlu0 %1641
    %v1644 = vmul.f32 %v1626, %v1642
    %1646 = vrot.lane.b32.xlu0 %v1644, 32
    %v1647 = vpop.permute.xlu0 %1646
    %v1648 = vrot.slane %v231, 2
    %v1650 = vsel %vm239, %v1647, 0
    %1652 = vmatprep.subr.mxu0 0.0
    %1653 = vmatpush1.msra.mxu0 %v65
    %1654 = vmatprep.subr.mxu0 0.0
    %1655 = vmatpush1.msra.mxu0 %v66
    %1656 = vmatprep.subr.mxu0 0.0
    %1657 = vmatpush1.msra.mxu0 %v67
    %1658 = vmatprep.subr.mxu0 0.0
    %1659 = vmatpush1.msra.mxu0 %v68
    %1660 = vmatprep.subr.mxu0 0.0
    %1661 = vmatpush1.msra.mxu0 0.0
    %1662 = vmatprep.subr.mxu0 0.0
    %1663 = vmatpush1.msra.mxu0 0.0
    %1664 = vmatprep.subr.mxu0 0.0
    %1665 = vmatpush1.msra.mxu0 0.0
    %1666 = vmatprep.subr.mxu0 0.0
    %1667 = vmatpush1.msra.mxu0 0.0
    %1668 = vmatprep.subr.mxu0 0.0
    %1669 = vmatpush1.msra.mxu0 0.0
    %1670 = vmatprep.subr.mxu0 0.0
    %1671 = vmatpush1.msra.mxu0 0.0
    %1672 = vmatprep.subr.mxu0 0.0
    %1673 = vmatpush1.msra.mxu0 0.0
    %1674 = vmatprep.subr.mxu0 0.0
    %1675 = vmatpush1.msra.mxu0 0.0
    %1676 = vmatprep.subr.mxu0 0.0
    %1677 = vmatpush1.msra.mxu0 0.0
    %1678 = vmatprep.subr.mxu0 0.0
    %1679 = vmatpush1.msra.mxu0 0.0
    %1680 = vmatprep.subr.mxu0 0.0
    %1681 = vmatpush1.msra.mxu0 0.0
    %1682 = vmatprep.subr.mxu0 0.0
    %1683 = vmatpush1.msra.mxu0 0.0
    %1684 = vmatprep.subr.mxu0 0.0
    %1685 = vmatpush1.msra.mxu0 0.0
    %1686 = vmatprep.subr.mxu0 0.0
    %1687 = vmatpush1.msra.mxu0 0.0
    %1688 = vmatprep.subr.mxu0 0.0
    %1689 = vmatpush1.msra.mxu0 0.0
    %1690 = vmatprep.subr.mxu0 0.0
    %1691 = vmatpush1.msra.mxu0 0.0
    %1692 = vmatprep.subr.mxu0 0.0
    %1693 = vmatpush1.msra.mxu0 0.0
    %1694 = vmatprep.subr.mxu0 0.0
    %1695 = vmatpush1.msra.mxu0 0.0
    %1696 = vmatprep.subr.mxu0 0.0
    %1697 = vmatpush1.msra.mxu0 0.0
    %1698 = vmatprep.subr.mxu0 0.0
    %1699 = vmatpush1.msra.mxu0 0.0
    %1700 = vmatprep.subr.mxu0 0.0
    %1701 = vmatpush1.msra.mxu0 0.0
    %1702 = vmatprep.subr.mxu0 0.0
    %1703 = vmatpush1.msra.mxu0 0.0
    %1704 = vmatprep.subr.mxu0 0.0
    %1705 = vmatpush1.msra.mxu0 0.0
    %1706 = vmatprep.subr.mxu0 0.0
    %1707 = vmatpush1.msra.mxu0 0.0
    %1708 = vmatprep.subr.mxu0 0.0
    %1709 = vmatpush1.msra.mxu0 0.0
    %1710 = vmatprep.subr.mxu0 0.0
    %1711 = vmatpush1.msra.mxu0 0.0
    %1712 = vmatprep.subr.mxu0 0.0
    %1713 = vmatpush1.msra.mxu0 0.0
    %1714 = vmatprep.subr.mxu0 0.0
    %1715 = vmatpush1.msra.mxu0 0.0
    %1716 = vmatprep.mubr.f32.mxu0 0.0
    %1717 = vmatmul.mubr.f32.gmra.mrb[0].mxu0 %v1650
    %v1718 = vpop.f32.mrb[0].mxu0
    %v1719 = vadd.f32 %v1648, %v1718
    %v1720 = vpop.f32.mrb[0].mxu0
    %1721 = vdwg.mxu0
    %v1722 = vxor.u32 %v1719, 2147483648
    %v1723 = vmul.f32 %v1722, 1.442695
    %v1724 = vpow.pop %v1723
    %v1725 = vadd.f32 %v1724, 1.0
    %v1726 = vrcp.pop %v1725
    %v1727 = vmul.f32 1.0, %v1726
    %v1728 = vtanh.pop %v1719
    %v1729 = vmul.f32 %v1727, %v1638
    %1731 = vrot.lane.b32.xlu0 %v1728, 64
    %v1732 = vpop.permute.xlu0 %1731
    %v1734 = vmul.f32 %v1727, %v1732
    %1736 = vrot.lane.b32.xlu0 %v1734, 32
    %v1737 = vpop.permute.xlu0 %1736
    %v1739 = vadd.f32 %v1729, %v1737
    %v1740 = vtanh.pop %v1739
    %1742 = vrot.lane.b32.xlu0 %v1740, 64
    %v1743 = vpop.permute.xlu0 %1742
    %v1745 = vmul.f32 %v1727, %v1743
    %1747 = vrot.lane.b32.xlu0 %v1745, 32
    %v1748 = vpop.permute.xlu0 %1747
    %v1749 = vsel %vm239, %v1748, 0
    %1751 = vmatprep.subr.mxu0 0.0
    %1752 = vmatpush1.msra.mxu0 %v65
    %1753 = vmatprep.subr.mxu0 0.0
    %1754 = vmatpush1.msra.mxu0 %v66
    %1755 = vmatprep.subr.mxu0 0.0
    %1756 = vmatpush1.msra.mxu0 %v67
    %1757 = vmatprep.subr.mxu0 0.0
    %1758 = vmatpush1.msra.mxu0 %v68
    %1759 = vmatprep.subr.mxu0 0.0
    %1760 = vmatpush1.msra.mxu0 0.0
    %1761 = vmatprep.subr.mxu0 0.0
    %1762 = vmatpush1.msra.mxu0 0.0
    %1763 = vmatprep.subr.mxu0 0.0
    %1764 = vmatpush1.msra.mxu0 0.0
    %1765 = vmatprep.subr.mxu0 0.0
    %1766 = vmatpush1.msra.mxu0 0.0
    %1767 = vmatprep.subr.mxu0 0.0
    %1768 = vmatpush1.msra.mxu0 0.0
    %1769 = vmatprep.subr.mxu0 0.0
    %1770 = vmatpush1.msra.mxu0 0.0
    %1771 = vmatprep.subr.mxu0 0.0
    %1772 = vmatpush1.msra.mxu0 0.0
    %1773 = vmatprep.subr.mxu0 0.0
    %1774 = vmatpush1.msra.mxu0 0.0
    %1775 = vmatprep.subr.mxu0 0.0
    %1776 = vmatpush1.msra.mxu0 0.0
    %1777 = vmatprep.subr.mxu0 0.0
    %1778 = vmatpush1.msra.mxu0 0.0
    %1779 = vmatprep.subr.mxu0 0.0
    %1780 = vmatpush1.msra.mxu0 0.0
    %1781 = vmatprep.subr.mxu0 0.0
    %1782 = vmatpush1.msra.mxu0 0.0
    %1783 = vmatprep.subr.mxu0 0.0
    %1784 = vmatpush1.msra.mxu0 0.0
    %1785 = vmatprep.subr.mxu0 0.0
    %1786 = vmatpush1.msra.mxu0 0.0
    %1787 = vmatprep.subr.mxu0 0.0
    %1788 = vmatpush1.msra.mxu0 0.0
    %1789 = vmatprep.subr.mxu0 0.0
    %1790 = vmatpush1.msra.mxu0 0.0
    %1791 = vmatprep.subr.mxu0 0.0
    %1792 = vmatpush1.msra.mxu0 0.0
    %1793 = vmatprep.subr.mxu0 0.0
    %1794 = vmatpush1.msra.mxu0 0.0
    %1795 = vmatprep.subr.mxu0 0.0
    %1796 = vmatpush1.msra.mxu0 0.0
    %1797 = vmatprep.subr.mxu0 0.0
    %1798 = vmatpush1.msra.mxu0 0.0
    %1799 = vmatprep.subr.mxu0 0.0
    %1800 = vmatpush1.msra.mxu0 0.0
    %1801 = vmatprep.subr.mxu0 0.0
    %1802 = vmatpush1.msra.mxu0 0.0
    %1803 = vmatprep.subr.mxu0 0.0
    %1804 = vmatpush1.msra.mxu0 0.0
    %1805 = vmatprep.subr.mxu0 0.0
    %1806 = vmatpush1.msra.mxu0 0.0
    %1807 = vmatprep.subr.mxu0 0.0
    %1808 = vmatpush1.msra.mxu0 0.0
    %1809 = vmatprep.subr.mxu0 0.0
    %1810 = vmatpush1.msra.mxu0 0.0
    %1811 = vmatprep.subr.mxu0 0.0
    %1812 = vmatpush1.msra.mxu0 0.0
    %1813 = vmatprep.subr.mxu0 0.0
    %1814 = vmatpush1.msra.mxu0 0.0
    %1815 = vmatprep.mubr.f32.mxu0 0.0
    %1816 = vmatmul.mubr.f32.gmra.mrb[0].mxu0 %v1749
    %v1817 = vpop.f32.mrb[0].mxu0
    %v1818 = vadd.f32 %v231, %v1817
    %v1819 = vpop.f32.mrb[0].mxu0
    %1820 = vdwg.mxu0
    %v1821 = vxor.u32 %v1818, 2147483648
    %v1822 = vmul.f32 %v1821, 1.442695
    %v1823 = vpow.pop %v1822
    %v1824 = vadd.f32 %v1823, 1.0
    %v1825 = vrcp.pop %v1824
    %v1826 = vmul.f32 1.0, %v1825
    %v1827 = vtanh.pop %v1818
    %v1828 = vmul.f32 %v1826, %v1739
    %1830 = vrot.lane.b32.xlu0 %v1827, 64
    %v1831 = vpop.permute.xlu0 %1830
    %v1833 = vmul.f32 %v1826, %v1831
    %1835 = vrot.lane.b32.xlu0 %v1833, 32
    %v1836 = vpop.permute.xlu0 %1835
    %v1838 = vadd.f32 %v1828, %v1836
    %v1839 = vtanh.pop %v1838
    %1841 = vrot.lane.b32.xlu0 %v1839, 64
    %v1842 = vpop.permute.xlu0 %1841
    %v1844 = vmul.f32 %v1826, %v1842
    %v1845 = vrot.slane %v438, 6
    %v1847 = vrot.slane %v539, 4
    %v1849 = vrot.slane %v640, 2
    %v1851 = vrot.slane %v841, 6
    %v1853 = vrot.slane %v942, 4
    %v1856 = vrot.slane %v1043, 2
    %vm1858 = vcmask 1041408
    %v1859 = vsel %vm1858, %v336, %v1845
    %vm1860 = vcmask 1043456
    %v1861 = vsel %vm1860, %v1859, %v1847
    %vm1862 = vcmask 1045504
    %v1863 = vsel %vm1862, %v1861, %v1849
    %v1864 = vsel %vm1858, %v739, %v1851
    %v1865 = vsel %vm1860, %v1864, %v1853
    %v1866 = vsel %vm1862, %v1865, %v1856
    %v1867 = vrot.slane %v1745, 6
    %v1869 = vrot.slane %v1644, 4
    %v1871 = vrot.slane %v1543, 2
    %v1873 = vrot.slane %v1342, 6
    %v1875 = vrot.slane %v1241, 4
    %v1877 = vrot.slane %v1140, 2
    %v1879 = vsel %vm1858, %v1844, %v1867
    %v1880 = vsel %vm1860, %v1879, %v1869
    %v1881 = vsel %vm1862, %v1880, %v1871
    %v1882 = vsel %vm1858, %v1441, %v1873
    %v1883 = vsel %vm1860, %v1882, %v1875
    %v1884 = vsel %vm1862, %v1883, %v1877
    %v1885 = vld [vmem:[%s7] sm:$0xff]
    %v1886 = vld [vmem:[%s7 + $0x8] sm:$0xff]
    %v1887 = vld [vmem:[%s7 + $0x10] sm:$0xff]
    %v1888 = vld [vmem:[%s7 + $0x18] sm:$0xff]
    %v1889 = vld [vmem:[%s7 + $0x20] sm:$0xff]
    %v1890 = vld [vmem:[%s7 + $0x28] sm:$0xff]
    %v1891 = vld [vmem:[%s7 + $0x30] sm:$0xff]
    %v1892 = vld [vmem:[%s7 + $0x38] sm:$0xff]
    %v1893 = vld [vmem:[%s8] sm:$0xff]
    %v1894 = vld [vmem:[%s8 + $0x8] sm:$0xff]
    %v1895 = vld [vmem:[%s8 + $0x10] sm:$0xff]
    %v1896 = vld [vmem:[%s8 + $0x18] sm:$0xff]
    %v1897 = vld [vmem:[%s9] sm:$0x1]
    %v1898 = vld [vmem:[%s10] sm:$0xff]
    %v1899 = vld [vmem:[%s10 + $0x8] sm:$0xff]
    %v1900 = vld [vmem:[%s10 + $0x10] sm:$0xff]
    %v1901 = vld [vmem:[%s10 + $0x18] sm:$0xff]
    %v1902 = vld [vmem:[%s10 + $0x20] sm:$0xff]
    %v1903 = vld [vmem:[%s10 + $0x28] sm:$0xff]
    %v1904 = vld [vmem:[%s10 + $0x30] sm:$0xff]
    %v1905 = vld [vmem:[%s10 + $0x38] sm:$0xff]
    %v1906 = vld [vmem:[%s11] sm:$0xff]
    %v1907 = vld [vmem:[%s11 + $0x8] sm:$0xff]
    %v1908 = vld [vmem:[%s11 + $0x10] sm:$0xff]
    %v1909 = vld [vmem:[%s11 + $0x18] sm:$0xff]
    %v1910 = vld [vmem:[%s12] sm:$0x1]
    %1913 = vrot.lane.b32.xlu0 %v1881, 32
    %v1914 = vpop.permute.xlu0 %1913
    %1915 = vrot.lane.b32.xlu0 %v1884, 32
    %v1916 = vpop.permute.xlu0 %1915
    %v1917 = vsel %vm239, %v1914, 0
    %v1919 = vsel %vm239, %v1916, 0
    %1921 = vmatprep.subr.mxu0 0.0
    %1922 = vmatpush1.msra.mxu0 %v1889
    %1923 = vmatprep.subr.mxu0 0.0
    %1924 = vmatpush1.msra.mxu0 %v1890
    %1925 = vmatprep.subr.mxu0 0.0
    %1926 = vmatpush1.msra.mxu0 %v1891
    %1927 = vmatprep.subr.mxu0 0.0
    %1928 = vmatpush1.msra.mxu0 %v1892
    %1929 = vmatprep.subr.mxu0 0.0
    %1930 = vmatpush1.msra.mxu0 0.0
    %1931 = vmatprep.subr.mxu0 0.0
    %1932 = vmatpush1.msra.mxu0 0.0
    %1933 = vmatprep.subr.mxu0 0.0
    %1934 = vmatpush1.msra.mxu0 0.0
    %1935 = vmatprep.subr.mxu0 0.0
    %1936 = vmatpush1.msra.mxu0 0.0
    %1937 = vmatprep.subr.mxu0 0.0
    %1938 = vmatpush1.msra.mxu0 0.0
    %1939 = vmatprep.subr.mxu0 0.0
    %1940 = vmatpush1.msra.mxu0 0.0
    %1941 = vmatprep.subr.mxu0 0.0
    %1942 = vmatpush1.msra.mxu0 0.0
    %1943 = vmatprep.subr.mxu0 0.0
    %1944 = vmatpush1.msra.mxu0 0.0
    %1945 = vmatprep.subr.mxu0 0.0
    %1946 = vmatpush1.msra.mxu0 0.0
    %1947 = vmatprep.subr.mxu0 0.0
    %1948 = vmatpush1.msra.mxu0 0.0
    %1949 = vmatprep.subr.mxu0 0.0
    %1950 = vmatpush1.msra.mxu0 0.0
    %1951 = vmatprep.subr.mxu0 0.0
    %1952 = vmatpush1.msra.mxu0 0.0
    %1953 = vmatprep.subr.mxu0 0.0
    %1954 = vmatpush1.msra.mxu0 0.0
    %1955 = vmatprep.subr.mxu0 0.0
    %1956 = vmatpush1.msra.mxu0 0.0
    %1957 = vmatprep.subr.mxu0 0.0
    %1958 = vmatpush1.msra.mxu0 0.0
    %1959 = vmatprep.subr.mxu0 0.0
    %1960 = vmatpush1.msra.mxu0 0.0
    %1961 = vmatprep.subr.mxu0 0.0
    %1962 = vmatpush1.msra.mxu0 0.0
    %1963 = vmatprep.subr.mxu0 0.0
    %1964 = vmatpush1.msra.mxu0 0.0
    %1965 = vmatprep.subr.mxu0 0.0
    %1966 = vmatpush1.msra.mxu0 0.0
    %1967 = vmatprep.subr.mxu0 0.0
    %1968 = vmatpush1.msra.mxu0 0.0
    %1969 = vmatprep.subr.mxu0 0.0
    %1970 = vmatpush1.msra.mxu0 0.0
    %1971 = vmatprep.subr.mxu0 0.0
    %1972 = vmatpush1.msra.mxu0 0.0
    %1973 = vmatprep.subr.mxu0 0.0
    %1974 = vmatpush1.msra.mxu0 0.0
    %1975 = vmatprep.subr.mxu0 0.0
    %1976 = vmatpush1.msra.mxu0 0.0
    %1977 = vmatprep.subr.mxu0 0.0
    %1978 = vmatpush1.msra.mxu0 0.0
    %1979 = vmatprep.subr.mxu0 0.0
    %1980 = vmatpush1.msra.mxu0 0.0
    %1981 = vmatprep.subr.mxu0 0.0
    %1982 = vmatpush1.msra.mxu0 0.0
    %1983 = vmatprep.subr.mxu0 0.0
    %1984 = vmatpush1.msra.mxu0 0.0
    %1985 = vmatprep.mubr.f32.mxu0 0.0
    %1986 = vmatmul.mubr.f32.gmra.mrb[0].mxu0 %v1917
    %v1987 = vpop.f32.mrb[0].mxu0
    %v1988 = vadd.f32 0.0, %v1987
    %v1989 = vpop.f32.mrb[0].mxu0
    %1990 = vmatprep.mubr.f32.mxu0 0.0
    %1991 = vmatmul.mubr.f32.gmra.mrb[0].mxu0 %v1919
    %v1992 = vpop.f32.mrb[0].mxu0
    %v1993 = vadd.f32 0.0, %v1992
    %v1994 = vpop.f32.mrb[0].mxu0
    %1995 = vdwg.mxu0
    %1998 = vrot.lane.b32.xlu0 %v1863, 32
    %v1999 = vpop.permute.xlu0 %1998
    %2000 = vrot.lane.b32.xlu0 %v1866, 32
    %v2001 = vpop.permute.xlu0 %2000
    %v2002 = vsel %vm239, %v1999, 0
    %v2004 = vsel %vm239, %v2001, 0
    %2006 = vmatprep.subr.mxu0 0.0
    %2007 = vmatpush1.msra.mxu0 %v1885
    %2008 = vmatprep.subr.mxu0 0.0
    %2009 = vmatpush1.msra.mxu0 %v1886
    %2010 = vmatprep.subr.mxu0 0.0
    %2011 = vmatpush1.msra.mxu0 %v1887
    %2012 = vmatprep.subr.mxu0 0.0
    %2013 = vmatpush1.msra.mxu0 %v1888
    %2014 = vmatprep.subr.mxu0 0.0
    %2015 = vmatpush1.msra.mxu0 0.0
    %2016 = vmatprep.subr.mxu0 0.0
    %2017 = vmatpush1.msra.mxu0 0.0
    %2018 = vmatprep.subr.mxu0 0.0
    %2019 = vmatpush1.msra.mxu0 0.0
    %2020 = vmatprep.subr.mxu0 0.0
    %2021 = vmatpush1.msra.mxu0 0.0
    %2022 = vmatprep.subr.mxu0 0.0
    %2023 = vmatpush1.msra.mxu0 0.0
    %2024 = vmatprep.subr.mxu0 0.0
    %2025 = vmatpush1.msra.mxu0 0.0
    %2026 = vmatprep.subr.mxu0 0.0
    %2027 = vmatpush1.msra.mxu0 0.0
    %2028 = vmatprep.subr.mxu0 0.0
    %2029 = vmatpush1.msra.mxu0 0.0
    %2030 = vmatprep.subr.mxu0 0.0
    %2031 = vmatpush1.msra.mxu0 0.0
    %2032 = vmatprep.subr.mxu0 0.0
    %2033 = vmatpush1.msra.mxu0 0.0
    %2034 = vmatprep.subr.mxu0 0.0
    %2035 = vmatpush1.msra.mxu0 0.0
    %2036 = vmatprep.subr.mxu0 0.0
    %2037 = vmatpush1.msra.mxu0 0.0
    %2038 = vmatprep.subr.mxu0 0.0
    %2039 = vmatpush1.msra.mxu0 0.0
    %2040 = vmatprep.subr.mxu0 0.0
    %2041 = vmatpush1.msra.mxu0 0.0
    %2042 = vmatprep.subr.mxu0 0.0
    %2043 = vmatpush1.msra.mxu0 0.0
    %2044 = vmatprep.subr.mxu0 0.0
    %2045 = vmatpush1.msra.mxu0 0.0
    %2046 = vmatprep.subr.mxu0 0.0
    %2047 = vmatpush1.msra.mxu0 0.0
    %2048 = vmatprep.subr.mxu0 0.0
    %2049 = vmatpush1.msra.mxu0 0.0
    %2050 = vmatprep.subr.mxu0 0.0
    %2051 = vmatpush1.msra.mxu0 0.0
    %2052 = vmatprep.subr.mxu0 0.0
    %2053 = vmatpush1.msra.mxu0 0.0
    %2054 = vmatprep.subr.mxu0 0.0
    %2055 = vmatpush1.msra.mxu0 0.0
    %2056 = vmatprep.subr.mxu0 0.0
    %2057 = vmatpush1.msra.mxu0 0.0
    %2058 = vmatprep.subr.mxu0 0.0
    %2059 = vmatpush1.msra.mxu0 0.0
    %2060 = vmatprep.subr.mxu0 0.0
    %2061 = vmatpush1.msra.mxu0 0.0
    %2062 = vmatprep.subr.mxu0 0.0
    %2063 = vmatpush1.msra.mxu0 0.0
    %2064 = vmatprep.subr.mxu0 0.0
    %2065 = vmatpush1.msra.mxu0 0.0
    %2066 = vmatprep.subr.mxu0 0.0
    %2067 = vmatpush1.msra.mxu0 0.0
    %2068 = vmatprep.subr.mxu0 0.0
    %2069 = vmatpush1.msra.mxu0 0.0
    %2070 = vmatprep.mubr.f32.mxu0 0.0
    %2071 = vmatmul.mubr.f32.gmra.mrb[0].mxu0 %v2002
    %v2072 = vpop.f32.mrb[0].mxu0
    %v2073 = vadd.f32 %v1988, %v2072
    %v2074 = vpop.f32.mrb[0].mxu0
    %2075 = vmatprep.mubr.f32.mxu0 0.0
    %2076 = vmatmul.mubr.f32.gmra.mrb[0].mxu0 %v2004
    %v2077 = vpop.f32.mrb[0].mxu0
    %v2078 = vadd.f32 %v1993, %v2077
    %v2079 = vpop.f32.mrb[0].mxu0
    %2080 = vdwg.mxu0
    %v2082 = vlaneseq
    %v2083 = vshrl.u32 %v2082, 7
    %v2084 = vsub.s32 0, %v2083
    %v2085 = vrot.slane %v1897, %v2084
    %v2087 = vadd.f32 %v2073, %v2085
    %v2088 = vadd.f32 %v2078, %v2085
    %2089 = vmatprep.subr.mxu0 0.0
    %2090 = vmatpush1.msra.mxu0 %v1902
    %2091 = vmatprep.subr.mxu0 0.0
    %2092 = vmatpush1.msra.mxu0 %v1903
    %2093 = vmatprep.subr.mxu0 0.0
    %2094 = vmatpush1.msra.mxu0 %v1904
    %2095 = vmatprep.subr.mxu0 0.0
    %2096 = vmatpush1.msra.mxu0 %v1905
    %2097 = vmatprep.subr.mxu0 0.0
    %2098 = vmatpush1.msra.mxu0 0.0
    %2099 = vmatprep.subr.mxu0 0.0
    %2100 = vmatpush1.msra.mxu0 0.0
    %2101 = vmatprep.subr.mxu0 0.0
    %2102 = vmatpush1.msra.mxu0 0.0
    %2103 = vmatprep.subr.mxu0 0.0
    %2104 = vmatpush1.msra.mxu0 0.0
    %2105 = vmatprep.subr.mxu0 0.0
    %2106 = vmatpush1.msra.mxu0 0.0
    %2107 = vmatprep.subr.mxu0 0.0
    %2108 = vmatpush1.msra.mxu0 0.0
    %2109 = vmatprep.subr.mxu0 0.0
    %2110 = vmatpush1.msra.mxu0 0.0
    %2111 = vmatprep.subr.mxu0 0.0
    %2112 = vmatpush1.msra.mxu0 0.0
    %2113 = vmatprep.subr.mxu0 0.0
    %2114 = vmatpush1.msra.mxu0 0.0
    %2115 = vmatprep.subr.mxu0 0.0
    %2116 = vmatpush1.msra.mxu0 0.0
    %2117 = vmatprep.subr.mxu0 0.0
    %2118 = vmatpush1.msra.mxu0 0.0
    %2119 = vmatprep.subr.mxu0 0.0
    %2120 = vmatpush1.msra.mxu0 0.0
    %2121 = vmatprep.subr.mxu0 0.0
    %2122 = vmatpush1.msra.mxu0 0.0
    %2123 = vmatprep.subr.mxu0 0.0
    %2124 = vmatpush1.msra.mxu0 0.0
    %2125 = vmatprep.subr.mxu0 0.0
    %2126 = vmatpush1.msra.mxu0 0.0
    %2127 = vmatprep.subr.mxu0 0.0
    %2128 = vmatpush1.msra.mxu0 0.0
    %2129 = vmatprep.subr.mxu0 0.0
    %2130 = vmatpush1.msra.mxu0 0.0
    %2131 = vmatprep.subr.mxu0 0.0
    %2132 = vmatpush1.msra.mxu0 0.0
    %2133 = vmatprep.subr.mxu0 0.0
    %2134 = vmatpush1.msra.mxu0 0.0
    %2135 = vmatprep.subr.mxu0 0.0
    %2136 = vmatpush1.msra.mxu0 0.0
    %2137 = vmatprep.subr.mxu0 0.0
    %2138 = vmatpush1.msra.mxu0 0.0
    %2139 = vmatprep.subr.mxu0 0.0
    %2140 = vmatpush1.msra.mxu0 0.0
    %2141 = vmatprep.subr.mxu0 0.0
    %2142 = vmatpush1.msra.mxu0 0.0
    %2143 = vmatprep.subr.mxu0 0.0
    %2144 = vmatpush1.msra.mxu0 0.0
    %2145 = vmatprep.subr.mxu0 0.0
    %2146 = vmatpush1.msra.mxu0 0.0
    %2147 = vmatprep.subr.mxu0 0.0
    %2148 = vmatpush1.msra.mxu0 0.0
    %2149 = vmatprep.subr.mxu0 0.0
    %2150 = vmatpush1.msra.mxu0 0.0
    %2151 = vmatprep.subr.mxu0 0.0
    %2152 = vmatpush1.msra.mxu0 0.0
    %2153 = vmatprep.mubr.f32.mxu0 0.0
    %2154 = vmatmul.mubr.f32.gmra.mrb[0].mxu0 %v1917
    %v2155 = vpop.f32.mrb[0].mxu0
    %v2156 = vadd.f32 0.0, %v2155
    %v2157 = vpop.f32.mrb[0].mxu0
    %2158 = vmatprep.mubr.f32.mxu0 0.0
    %2159 = vmatmul.mubr.f32.gmra.mrb[0].mxu0 %v1919
    %v2160 = vpop.f32.mrb[0].mxu0
    %v2161 = vadd.f32 0.0, %v2160
    %v2162 = vpop.f32.mrb[0].mxu0
    %2163 = vdwg.mxu0
    %2164 = vmatprep.subr.mxu0 0.0
    %2165 = vmatpush1.msra.mxu0 %v1898
    %2166 = vmatprep.subr.mxu0 0.0
    %2167 = vmatpush1.msra.mxu0 %v1899
    %2168 = vmatprep.subr.mxu0 0.0
    %2169 = vmatpush1.msra.mxu0 %v1900
    %2170 = vmatprep.subr.mxu0 0.0
    %2171 = vmatpush1.msra.mxu0 %v1901
    %2172 = vmatprep.subr.mxu0 0.0
    %2173 = vmatpush1.msra.mxu0 0.0
    %2174 = vmatprep.subr.mxu0 0.0
    %2175 = vmatpush1.msra.mxu0 0.0
    %2176 = vmatprep.subr.mxu0 0.0
    %2177 = vmatpush1.msra.mxu0 0.0
    %2178 = vmatprep.subr.mxu0 0.0
    %2179 = vmatpush1.msra.mxu0 0.0
    %2180 = vmatprep.subr.mxu0 0.0
    %2181 = vmatpush1.msra.mxu0 0.0
    %2182 = vmatprep.subr.mxu0 0.0
    %2183 = vmatpush1.msra.mxu0 0.0
    %2184 = vmatprep.subr.mxu0 0.0
    %2185 = vmatpush1.msra.mxu0 0.0
    %2186 = vmatprep.subr.mxu0 0.0
    %2187 = vmatpush1.msra.mxu0 0.0
    %2188 = vmatprep.subr.mxu0 0.0
    %2189 = vmatpush1.msra.mxu0 0.0
    %2190 = vmatprep.subr.mxu0 0.0
    %2191 = vmatpush1.msra.mxu0 0.0
    %2192 = vmatprep.subr.mxu0 0.0
    %2193 = vmatpush1.msra.mxu0 0.0
    %2194 = vmatprep.subr.mxu0 0.0
    %2195 = vmatpush1.msra.mxu0 0.0
    %2196 = vmatprep.subr.mxu0 0.0
    %2197 = vmatpush1.msra.mxu0 0.0
    %2198 = vmatprep.subr.mxu0 0.0
    %2199 = vmatpush1.msra.mxu0 0.0
    %2200 = vmatprep.subr.mxu0 0.0
    %2201 = vmatpush1.msra.mxu0 0.0
    %2202 = vmatprep.subr.mxu0 0.0
    %2203 = vmatpush1.msra.mxu0 0.0
    %2204 = vmatprep.subr.mxu0 0.0
    %2205 = vmatpush1.msra.mxu0 0.0
    %2206 = vmatprep.subr.mxu0 0.0
    %2207 = vmatpush1.msra.mxu0 0.0
    %2208 = vmatprep.subr.mxu0 0.0
    %2209 = vmatpush1.msra.mxu0 0.0
    %2210 = vmatprep.subr.mxu0 0.0
    %2211 = vmatpush1.msra.mxu0 0.0
    %2212 = vmatprep.subr.mxu0 0.0
    %2213 = vmatpush1.msra.mxu0 0.0
    %2214 = vmatprep.subr.mxu0 0.0
    %2215 = vmatpush1.msra.mxu0 0.0
    %2216 = vmatprep.subr.mxu0 0.0
    %2217 = vmatpush1.msra.mxu0 0.0
    %2218 = vmatprep.subr.mxu0 0.0
    %2219 = vmatpush1.msra.mxu0 0.0
    %2220 = vmatprep.subr.mxu0 0.0
    %2221 = vmatpush1.msra.mxu0 0.0
    %2222 = vmatprep.subr.mxu0 0.0
    %2223 = vmatpush1.msra.mxu0 0.0
    %2224 = vmatprep.subr.mxu0 0.0
    %2225 = vmatpush1.msra.mxu0 0.0
    %2226 = vmatprep.subr.mxu0 0.0
    %2227 = vmatpush1.msra.mxu0 0.0
    %2228 = vmatprep.mubr.f32.mxu0 0.0
    %2229 = vmatmul.mubr.f32.gmra.mrb[0].mxu0 %v2002
    %v2230 = vpop.f32.mrb[0].mxu0
    %v2231 = vadd.f32 %v2156, %v2230
    %v2232 = vpop.f32.mrb[0].mxu0
    %2233 = vmatprep.mubr.f32.mxu0 0.0
    %2234 = vmatmul.mubr.f32.gmra.mrb[0].mxu0 %v2004
    %v2235 = vpop.f32.mrb[0].mxu0
    %v2236 = vadd.f32 %v2161, %v2235
    %v2237 = vpop.f32.mrb[0].mxu0
    %2238 = vdwg.mxu0
    %v2240 = vlaneseq
    %v2241 = vshrl.u32 %v2240, 7
    %v2242 = vsub.s32 0, %v2241
    %v2243 = vrot.slane %v1910, %v2242
    %v2245 = vadd.f32 %v2231, %v2243
    %v2246 = vadd.f32 %v2236, %v2243
    %2247 = vmatprep.subr.mxu0 0.0
    %2248 = vmatpush1.msra.mxu0 %v1893
    %2249 = vmatprep.subr.mxu0 0.0
    %2250 = vmatpush1.msra.mxu0 %v1894
    %2251 = vmatprep.subr.mxu0 0.0
    %2252 = vmatpush1.msra.mxu0 %v1895
    %2253 = vmatprep.subr.mxu0 0.0
    %2254 = vmatpush1.msra.mxu0 %v1896
    %2255 = vmatprep.subr.mxu0 0.0
    %2256 = vmatpush1.msra.mxu0 0.0
    %2257 = vmatprep.subr.mxu0 0.0
    %2258 = vmatpush1.msra.mxu0 0.0
    %2259 = vmatprep.subr.mxu0 0.0
    %2260 = vmatpush1.msra.mxu0 0.0
    %2261 = vmatprep.subr.mxu0 0.0
    %2262 = vmatpush1.msra.mxu0 0.0
    %2263 = vmatprep.subr.mxu0 0.0
    %2264 = vmatpush1.msra.mxu0 0.0
    %2265 = vmatprep.subr.mxu0 0.0
    %2266 = vmatpush1.msra.mxu0 0.0
    %2267 = vmatprep.subr.mxu0 0.0
    %2268 = vmatpush1.msra.mxu0 0.0
    %2269 = vmatprep.subr.mxu0 0.0
    %2270 = vmatpush1.msra.mxu0 0.0
    %2271 = vmatprep.subr.mxu0 0.0
    %2272 = vmatpush1.msra.mxu0 0.0
    %2273 = vmatprep.subr.mxu0 0.0
    %2274 = vmatpush1.msra.mxu0 0.0
    %2275 = vmatprep.subr.mxu0 0.0
    %2276 = vmatpush1.msra.mxu0 0.0
    %2277 = vmatprep.subr.mxu0 0.0
    %2278 = vmatpush1.msra.mxu0 0.0
    %2279 = vmatprep.subr.mxu0 0.0
    %2280 = vmatpush1.msra.mxu0 0.0
    %2281 = vmatprep.subr.mxu0 0.0
    %2282 = vmatpush1.msra.mxu0 0.0
    %2283 = vmatprep.subr.mxu0 0.0
    %2284 = vmatpush1.msra.mxu0 0.0
    %2285 = vmatprep.subr.mxu0 0.0
    %2286 = vmatpush1.msra.mxu0 0.0
    %2287 = vmatprep.subr.mxu0 0.0
    %2288 = vmatpush1.msra.mxu0 0.0
    %2289 = vmatprep.subr.mxu0 0.0
    %2290 = vmatpush1.msra.mxu0 0.0
    %2291 = vmatprep.subr.mxu0 0.0
    %2292 = vmatpush1.msra.mxu0 0.0
    %2293 = vmatprep.subr.mxu0 0.0
    %2294 = vmatpush1.msra.mxu0 0.0
    %2295 = vmatprep.subr.mxu0 0.0
    %2296 = vmatpush1.msra.mxu0 0.0
    %2297 = vmatprep.subr.mxu0 0.0
    %2298 = vmatpush1.msra.mxu0 0.0
    %2299 = vmatprep.subr.mxu0 0.0
    %2300 = vmatpush1.msra.mxu0 0.0
    %2301 = vmatprep.subr.mxu0 0.0
    %2302 = vmatpush1.msra.mxu0 0.0
    %2303 = vmatprep.subr.mxu0 0.0
    %2304 = vmatpush1.msra.mxu0 0.0
    %2305 = vmatprep.subr.mxu0 0.0
    %2306 = vmatpush1.msra.mxu0 0.0
    %2307 = vmatprep.subr.mxu0 0.0
    %2308 = vmatpush1.msra.mxu0 0.0
    %2309 = vmatprep.subr.mxu0 0.0
    %2310 = vmatpush1.msra.mxu0 0.0
    %2311 = vmatprep.mubr.f32.mxu0 0.0
    %2312 = vmatmul.mubr.f32.gmra.mrb[0].mxu0 %v241
    %v2313 = vpop.f32.mrb[0].mxu0
    %v2314 = vadd.f32 %v2087, %v2313
    %v2315 = vpop.f32.mrb[0].mxu0
    %2316 = vdwg.mxu0
    %v2317 = vxor.u32 %v2314, 2147483648
    %v2318 = vmul.f32 %v2317, 1.442695
    %v2319 = vpow.pop %v2318
    %v2320 = vadd.f32 %v2319, 1.0
    %v2321 = vrcp.pop %v2320
    %v2322 = vmul.f32 1.0, %v2321
    %v2323 = vtanh.pop %v2314
    %v2324 = vmul.f32 %v2322, 0.0
    %2326 = vrot.lane.b32.xlu0 %v2323, 64
    %v2327 = vpop.permute.xlu0 %2326
    %v2329 = vmul.f32 %v2322, %v2327
    %2331 = vrot.lane.b32.xlu0 %v2329, 32
    %v2332 = vpop.permute.xlu0 %2331
    %v2334 = vadd.f32 %v2324, %v2332
    %v2335 = vtanh.pop %v2334
    %2337 = vrot.lane.b32.xlu0 %v2335, 64
    %v2338 = vpop.permute.xlu0 %2337
    %v2340 = vmul.f32 %v2322, %v2338
    %2342 = vrot.lane.b32.xlu0 %v2340, 32
    %v2343 = vpop.permute.xlu0 %2342
    %v2345 = vrot.slane %v2087, 2
    %v2347 = vsel %vm239, %v2343, 0
    %2349 = vmatprep.subr.mxu0 0.0
    %2350 = vmatpush1.msra.mxu0 %v1893
    %2351 = vmatprep.subr.mxu0 0.0
    %2352 = vmatpush1.msra.mxu0 %v1894
    %2353 = vmatprep.subr.mxu0 0.0
    %2354 = vmatpush1.msra.mxu0 %v1895
    %2355 = vmatprep.subr.mxu0 0.0
    %2356 = vmatpush1.msra.mxu0 %v1896
    %2357 = vmatprep.subr.mxu0 0.0
    %2358 = vmatpush1.msra.mxu0 0.0
    %2359 = vmatprep.subr.mxu0 0.0
    %2360 = vmatpush1.msra.mxu0 0.0
    %2361 = vmatprep.subr.mxu0 0.0
    %2362 = vmatpush1.msra.mxu0 0.0
    %2363 = vmatprep.subr.mxu0 0.0
    %2364 = vmatpush1.msra.mxu0 0.0
    %2365 = vmatprep.subr.mxu0 0.0
    %2366 = vmatpush1.msra.mxu0 0.0
    %2367 = vmatprep.subr.mxu0 0.0
    %2368 = vmatpush1.msra.mxu0 0.0
    %2369 = vmatprep.subr.mxu0 0.0
    %2370 = vmatpush1.msra.mxu0 0.0
    %2371 = vmatprep.subr.mxu0 0.0
    %2372 = vmatpush1.msra.mxu0 0.0
    %2373 = vmatprep.subr.mxu0 0.0
    %2374 = vmatpush1.msra.mxu0 0.0
    %2375 = vmatprep.subr.mxu0 0.0
    %2376 = vmatpush1.msra.mxu0 0.0
    %2377 = vmatprep.subr.mxu0 0.0
    %2378 = vmatpush1.msra.mxu0 0.0
    %2379 = vmatprep.subr.mxu0 0.0
    %2380 = vmatpush1.msra.mxu0 0.0
    %2381 = vmatprep.subr.mxu0 0.0
    %2382 = vmatpush1.msra.mxu0 0.0
    %2383 = vmatprep.subr.mxu0 0.0
    %2384 = vmatpush1.msra.mxu0 0.0
    %2385 = vmatprep.subr.mxu0 0.0
    %2386 = vmatpush1.msra.mxu0 0.0
    %2387 = vmatprep.subr.mxu0 0.0
    %2388 = vmatpush1.msra.mxu0 0.0
    %2389 = vmatprep.subr.mxu0 0.0
    %2390 = vmatpush1.msra.mxu0 0.0
    %2391 = vmatprep.subr.mxu0 0.0
    %2392 = vmatpush1.msra.mxu0 0.0
    %2393 = vmatprep.subr.mxu0 0.0
    %2394 = vmatpush1.msra.mxu0 0.0
    %2395 = vmatprep.subr.mxu0 0.0
    %2396 = vmatpush1.msra.mxu0 0.0
    %2397 = vmatprep.subr.mxu0 0.0
    %2398 = vmatpush1.msra.mxu0 0.0
    %2399 = vmatprep.subr.mxu0 0.0
    %2400 = vmatpush1.msra.mxu0 0.0
    %2401 = vmatprep.subr.mxu0 0.0
    %2402 = vmatpush1.msra.mxu0 0.0
    %2403 = vmatprep.subr.mxu0 0.0
    %2404 = vmatpush1.msra.mxu0 0.0
    %2405 = vmatprep.subr.mxu0 0.0
    %2406 = vmatpush1.msra.mxu0 0.0
    %2407 = vmatprep.subr.mxu0 0.0
    %2408 = vmatpush1.msra.mxu0 0.0
    %2409 = vmatprep.subr.mxu0 0.0
    %2410 = vmatpush1.msra.mxu0 0.0
    %2411 = vmatprep.subr.mxu0 0.0
    %2412 = vmatpush1.msra.mxu0 0.0
    %2413 = vmatprep.mubr.f32.mxu0 0.0
    %2414 = vmatmul.mubr.f32.gmra.mrb[0].mxu0 %v2347
    %v2415 = vpop.f32.mrb[0].mxu0
    %v2416 = vadd.f32 %v2345, %v2415
    %v2417 = vpop.f32.mrb[0].mxu0
    %2418 = vdwg.mxu0
    %v2419 = vxor.u32 %v2416, 2147483648
    %v2420 = vmul.f32 %v2419, 1.442695
    %v2421 = vpow.pop %v2420
    %v2422 = vadd.f32 %v2421, 1.0
    %v2423 = vrcp.pop %v2422
    %v2424 = vmul.f32 1.0, %v2423
    %v2425 = vtanh.pop %v2416
    %v2426 = vmul.f32 %v2424, %v2334
    %2428 = vrot.lane.b32.xlu0 %v2425, 64
    %v2429 = vpop.permute.xlu0 %2428
    %v2431 = vmul.f32 %v2424, %v2429
    %2433 = vrot.lane.b32.xlu0 %v2431, 32
    %v2434 = vpop.permute.xlu0 %2433
    %v2436 = vadd.f32 %v2426, %v2434
    %v2437 = vtanh.pop %v2436
    %2439 = vrot.lane.b32.xlu0 %v2437, 64
    %v2440 = vpop.permute.xlu0 %2439
    %v2442 = vmul.f32 %v2424, %v2440
    %2444 = vrot.lane.b32.xlu0 %v2442, 32
    %v2445 = vpop.permute.xlu0 %2444
    %v2446 = vrot.slane %v2087, 4
    %v2448 = vsel %vm239, %v2445, 0
    %2450 = vmatprep.subr.mxu0 0.0
    %2451 = vmatpush1.msra.mxu0 %v1893
    %2452 = vmatprep.subr.mxu0 0.0
    %2453 = vmatpush1.msra.mxu0 %v1894
    %2454 = vmatprep.subr.mxu0 0.0
    %2455 = vmatpush1.msra.mxu0 %v1895
    %2456 = vmatprep.subr.mxu0 0.0
    %2457 = vmatpush1.msra.mxu0 %v1896
    %2458 = vmatprep.subr.mxu0 0.0
    %2459 = vmatpush1.msra.mxu0 0.0
    %2460 = vmatprep.subr.mxu0 0.0
    %2461 = vmatpush1.msra.mxu0 0.0
    %2462 = vmatprep.subr.mxu0 0.0
    %2463 = vmatpush1.msra.mxu0 0.0
    %2464 = vmatprep.subr.mxu0 0.0
    %2465 = vmatpush1.msra.mxu0 0.0
    %2466 = vmatprep.subr.mxu0 0.0
    %2467 = vmatpush1.msra.mxu0 0.0
    %2468 = vmatprep.subr.mxu0 0.0
    %2469 = vmatpush1.msra.mxu0 0.0
    %2470 = vmatprep.subr.mxu0 0.0
    %2471 = vmatpush1.msra.mxu0 0.0
    %2472 = vmatprep.subr.mxu0 0.0
    %2473 = vmatpush1.msra.mxu0 0.0
    %2474 = vmatprep.subr.mxu0 0.0
    %2475 = vmatpush1.msra.mxu0 0.0
    %2476 = vmatprep.subr.mxu0 0.0
    %2477 = vmatpush1.msra.mxu0 0.0
    %2478 = vmatprep.subr.mxu0 0.0
    %2479 = vmatpush1.msra.mxu0 0.0
    %2480 = vmatprep.subr.mxu0 0.0
    %2481 = vmatpush1.msra.mxu0 0.0
    %2482 = vmatprep.subr.mxu0 0.0
    %2483 = vmatpush1.msra.mxu0 0.0
    %2484 = vmatprep.subr.mxu0 0.0
    %2485 = vmatpush1.msra.mxu0 0.0
    %2486 = vmatprep.subr.mxu0 0.0
    %2487 = vmatpush1.msra.mxu0 0.0
    %2488 = vmatprep.subr.mxu0 0.0
    %2489 = vmatpush1.msra.mxu0 0.0
    %2490 = vmatprep.subr.mxu0 0.0
    %2491 = vmatpush1.msra.mxu0 0.0
    %2492 = vmatprep.subr.mxu0 0.0
    %2493 = vmatpush1.msra.mxu0 0.0
    %2494 = vmatprep.subr.mxu0 0.0
    %2495 = vmatpush1.msra.mxu0 0.0
    %2496 = vmatprep.subr.mxu0 0.0
    %2497 = vmatpush1.msra.mxu0 0.0
    %2498 = vmatprep.subr.mxu0 0.0
    %2499 = vmatpush1.msra.mxu0 0.0
    %2500 = vmatprep.subr.mxu0 0.0
    %2501 = vmatpush1.msra.mxu0 0.0
    %2502 = vmatprep.subr.mxu0 0.0
    %2503 = vmatpush1.msra.mxu0 0.0
    %2504 = vmatprep.subr.mxu0 0.0
    %2505 = vmatpush1.msra.mxu0 0.0
    %2506 = vmatprep.subr.mxu0 0.0
    %2507 = vmatpush1.msra.mxu0 0.0
    %2508 = vmatprep.subr.mxu0 0.0
    %2509 = vmatpush1.msra.mxu0 0.0
    %2510 = vmatprep.subr.mxu0 0.0
    %2511 = vmatpush1.msra.mxu0 0.0
    %2512 = vmatprep.subr.mxu0 0.0
    %2513 = vmatpush1.msra.mxu0 0.0
    %2514 = vmatprep.mubr.f32.mxu0 0.0
    %2515 = vmatmul.mubr.f32.gmra.mrb[0].mxu0 %v2448
    %v2516 = vpop.f32.mrb[0].mxu0
    %v2517 = vadd.f32 %v2446, %v2516
    %v2518 = vpop.f32.mrb[0].mxu0
    %2519 = vdwg.mxu0
    %v2520 = vxor.u32 %v2517, 2147483648
    %v2521 = vmul.f32 %v2520, 1.442695
    %v2522 = vpow.pop %v2521
    %v2523 = vadd.f32 %v2522, 1.0
    %v2524 = vrcp.pop %v2523
    %v2525 = vmul.f32 1.0, %v2524
    %v2526 = vtanh.pop %v2517
    %v2527 = vmul.f32 %v2525, %v2436
    %2529 = vrot.lane.b32.xlu0 %v2526, 64
    %v2530 = vpop.permute.xlu0 %2529
    %v2532 = vmul.f32 %v2525, %v2530
    %2534 = vrot.lane.b32.xlu0 %v2532, 32
    %v2535 = vpop.permute.xlu0 %2534
    %v2537 = vadd.f32 %v2527, %v2535
    %v2538 = vtanh.pop %v2537
    %2540 = vrot.lane.b32.xlu0 %v2538, 64
    %v2541 = vpop.permute.xlu0 %2540
    %v2543 = vmul.f32 %v2525, %v2541
    %2545 = vrot.lane.b32.xlu0 %v2543, 32
    %v2546 = vpop.permute.xlu0 %2545
    %v2547 = vrot.slane %v2087, 6
    %v2549 = vsel %vm239, %v2546, 0
    %2551 = vmatprep.subr.mxu0 0.0
    %2552 = vmatpush1.msra.mxu0 %v1893
    %2553 = vmatprep.subr.mxu0 0.0
    %2554 = vmatpush1.msra.mxu0 %v1894
    %2555 = vmatprep.subr.mxu0 0.0
    %2556 = vmatpush1.msra.mxu0 %v1895
    %2557 = vmatprep.subr.mxu0 0.0
    %2558 = vmatpush1.msra.mxu0 %v1896
    %2559 = vmatprep.subr.mxu0 0.0
    %2560 = vmatpush1.msra.mxu0 0.0
    %2561 = vmatprep.subr.mxu0 0.0
    %2562 = vmatpush1.msra.mxu0 0.0
    %2563 = vmatprep.subr.mxu0 0.0
    %2564 = vmatpush1.msra.mxu0 0.0
    %2565 = vmatprep.subr.mxu0 0.0
    %2566 = vmatpush1.msra.mxu0 0.0
    %2567 = vmatprep.subr.mxu0 0.0
    %2568 = vmatpush1.msra.mxu0 0.0
    %2569 = vmatprep.subr.mxu0 0.0
    %2570 = vmatpush1.msra.mxu0 0.0
    %2571 = vmatprep.subr.mxu0 0.0
    %2572 = vmatpush1.msra.mxu0 0.0
    %2573 = vmatprep.subr.mxu0 0.0
    %2574 = vmatpush1.msra.mxu0 0.0
    %2575 = vmatprep.subr.mxu0 0.0
    %2576 = vmatpush1.msra.mxu0 0.0
    %2577 = vmatprep.subr.mxu0 0.0
    %2578 = vmatpush1.msra.mxu0 0.0
    %2579 = vmatprep.subr.mxu0 0.0
    %2580 = vmatpush1.msra.mxu0 0.0
    %2581 = vmatprep.subr.mxu0 0.0
    %2582 = vmatpush1.msra.mxu0 0.0
    %2583 = vmatprep.subr.mxu0 0.0
    %2584 = vmatpush1.msra.mxu0 0.0
    %2585 = vmatprep.subr.mxu0 0.0
    %2586 = vmatpush1.msra.mxu0 0.0
    %2587 = vmatprep.subr.mxu0 0.0
    %2588 = vmatpush1.msra.mxu0 0.0
    %2589 = vmatprep.subr.mxu0 0.0
    %2590 = vmatpush1.msra.mxu0 0.0
    %2591 = vmatprep.subr.mxu0 0.0
    %2592 = vmatpush1.msra.mxu0 0.0
    %2593 = vmatprep.subr.mxu0 0.0
    %2594 = vmatpush1.msra.mxu0 0.0
    %2595 = vmatprep.subr.mxu0 0.0
    %2596 = vmatpush1.msra.mxu0 0.0
    %2597 = vmatprep.subr.mxu0 0.0
    %2598 = vmatpush1.msra.mxu0 0.0
    %2599 = vmatprep.subr.mxu0 0.0
    %2600 = vmatpush1.msra.mxu0 0.0
    %2601 = vmatprep.subr.mxu0 0.0
    %2602 = vmatpush1.msra.mxu0 0.0
    %2603 = vmatprep.subr.mxu0 0.0
    %2604 = vmatpush1.msra.mxu0 0.0
    %2605 = vmatprep.subr.mxu0 0.0
    %2606 = vmatpush1.msra.mxu0 0.0
    %2607 = vmatprep.subr.mxu0 0.0
    %2608 = vmatpush1.msra.mxu0 0.0
    %2609 = vmatprep.subr.mxu0 0.0
    %2610 = vmatpush1.msra.mxu0 0.0
    %2611 = vmatprep.subr.mxu0 0.0
    %2612 = vmatpush1.msra.mxu0 0.0
    %2613 = vmatprep.subr.mxu0 0.0
    %2614 = vmatpush1.msra.mxu0 0.0
    %2615 = vmatprep.mubr.f32.mxu0 0.0
    %2616 = vmatmul.mubr.f32.gmra.mrb[0].mxu0 %v2549
    %v2617 = vpop.f32.mrb[0].mxu0
    %v2618 = vadd.f32 %v2547, %v2617
    %v2619 = vpop.f32.mrb[0].mxu0
    %2620 = vdwg.mxu0
    %v2621 = vxor.u32 %v2618, 2147483648
    %v2622 = vmul.f32 %v2621, 1.442695
    %v2623 = vpow.pop %v2622
    %v2624 = vadd.f32 %v2623, 1.0
    %v2625 = vrcp.pop %v2624
    %v2626 = vmul.f32 1.0, %v2625
    %v2627 = vtanh.pop %v2618
    %v2628 = vmul.f32 %v2626, %v2537
    %2630 = vrot.lane.b32.xlu0 %v2627, 64
    %v2631 = vpop.permute.xlu0 %2630
    %v2633 = vmul.f32 %v2626, %v2631
    %2635 = vrot.lane.b32.xlu0 %v2633, 32
    %v2636 = vpop.permute.xlu0 %2635
    %v2638 = vadd.f32 %v2628, %v2636
    %v2639 = vtanh.pop %v2638
    %2641 = vrot.lane.b32.xlu0 %v2639, 64
    %v2642 = vpop.permute.xlu0 %2641
    %v2644 = vmul.f32 %v2626, %v2642
    %2646 = vrot.lane.b32.xlu0 %v2644, 32
    %v2647 = vpop.permute.xlu0 %2646
    %v2648 = vsel %vm239, %v2647, 0
    %2650 = vmatprep.subr.mxu0 0.0
    %2651 = vmatpush1.msra.mxu0 %v1893
    %2652 = vmatprep.subr.mxu0 0.0
    %2653 = vmatpush1.msra.mxu0 %v1894
    %2654 = vmatprep.subr.mxu0 0.0
    %2655 = vmatpush1.msra.mxu0 %v1895
    %2656 = vmatprep.subr.mxu0 0.0
    %2657 = vmatpush1.msra.mxu0 %v1896
    %2658 = vmatprep.subr.mxu0 0.0
    %2659 = vmatpush1.msra.mxu0 0.0
    %2660 = vmatprep.subr.mxu0 0.0
    %2661 = vmatpush1.msra.mxu0 0.0
    %2662 = vmatprep.subr.mxu0 0.0
    %2663 = vmatpush1.msra.mxu0 0.0
    %2664 = vmatprep.subr.mxu0 0.0
    %2665 = vmatpush1.msra.mxu0 0.0
    %2666 = vmatprep.subr.mxu0 0.0
    %2667 = vmatpush1.msra.mxu0 0.0
    %2668 = vmatprep.subr.mxu0 0.0
    %2669 = vmatpush1.msra.mxu0 0.0
    %2670 = vmatprep.subr.mxu0 0.0
    %2671 = vmatpush1.msra.mxu0 0.0
    %2672 = vmatprep.subr.mxu0 0.0
    %2673 = vmatpush1.msra.mxu0 0.0
    %2674 = vmatprep.subr.mxu0 0.0
    %2675 = vmatpush1.msra.mxu0 0.0
    %2676 = vmatprep.subr.mxu0 0.0
    %2677 = vmatpush1.msra.mxu0 0.0
    %2678 = vmatprep.subr.mxu0 0.0
    %2679 = vmatpush1.msra.mxu0 0.0
    %2680 = vmatprep.subr.mxu0 0.0
    %2681 = vmatpush1.msra.mxu0 0.0
    %2682 = vmatprep.subr.mxu0 0.0
    %2683 = vmatpush1.msra.mxu0 0.0
    %2684 = vmatprep.subr.mxu0 0.0
    %2685 = vmatpush1.msra.mxu0 0.0
    %2686 = vmatprep.subr.mxu0 0.0
    %2687 = vmatpush1.msra.mxu0 0.0
    %2688 = vmatprep.subr.mxu0 0.0
    %2689 = vmatpush1.msra.mxu0 0.0
    %2690 = vmatprep.subr.mxu0 0.0
    %2691 = vmatpush1.msra.mxu0 0.0
    %2692 = vmatprep.subr.mxu0 0.0
    %2693 = vmatpush1.msra.mxu0 0.0
    %2694 = vmatprep.subr.mxu0 0.0
    %2695 = vmatpush1.msra.mxu0 0.0
    %2696 = vmatprep.subr.mxu0 0.0
    %2697 = vmatpush1.msra.mxu0 0.0
    %2698 = vmatprep.subr.mxu0 0.0
    %2699 = vmatpush1.msra.mxu0 0.0
    %2700 = vmatprep.subr.mxu0 0.0
    %2701 = vmatpush1.msra.mxu0 0.0
    %2702 = vmatprep.subr.mxu0 0.0
    %2703 = vmatpush1.msra.mxu0 0.0
    %2704 = vmatprep.subr.mxu0 0.0
    %2705 = vmatpush1.msra.mxu0 0.0
    %2706 = vmatprep.subr.mxu0 0.0
    %2707 = vmatpush1.msra.mxu0 0.0
    %2708 = vmatprep.subr.mxu0 0.0
    %2709 = vmatpush1.msra.mxu0 0.0
    %2710 = vmatprep.subr.mxu0 0.0
    %2711 = vmatpush1.msra.mxu0 0.0
    %2712 = vmatprep.subr.mxu0 0.0
    %2713 = vmatpush1.msra.mxu0 0.0
    %2714 = vmatprep.mubr.f32.mxu0 0.0
    %2715 = vmatmul.mubr.f32.gmra.mrb[0].mxu0 %v2648
    %v2716 = vpop.f32.mrb[0].mxu0
    %v2717 = vadd.f32 %v2088, %v2716
    %v2718 = vpop.f32.mrb[0].mxu0
    %2719 = vdwg.mxu0
    %v2720 = vxor.u32 %v2717, 2147483648
    %v2721 = vmul.f32 %v2720, 1.442695
    %v2722 = vpow.pop %v2721
    %v2723 = vadd.f32 %v2722, 1.0
    %v2724 = vrcp.pop %v2723
    %v2725 = vmul.f32 1.0, %v2724
    %v2726 = vtanh.pop %v2717
    %v2727 = vmul.f32 %v2725, %v2638
    %2729 = vrot.lane.b32.xlu0 %v2726, 64
    %v2730 = vpop.permute.xlu0 %2729
    %v2732 = vmul.f32 %v2725, %v2730
    %2734 = vrot.lane.b32.xlu0 %v2732, 32
    %v2735 = vpop.permute.xlu0 %2734
    %v2737 = vadd.f32 %v2727, %v2735
    %v2738 = vtanh.pop %v2737
    %2740 = vrot.lane.b32.xlu0 %v2738, 64
    %v2741 = vpop.permute.xlu0 %2740
    %v2743 = vmul.f32 %v2725, %v2741
    %2745 = vrot.lane.b32.xlu0 %v2743, 32
    %v2746 = vpop.permute.xlu0 %2745
    %v2748 = vrot.slane %v2088, 2
    %v2750 = vsel %vm239, %v2746, 0
    %2752 = vmatprep.subr.mxu0 0.0
    %2753 = vmatpush1.msra.mxu0 %v1893
    %2754 = vmatprep.subr.mxu0 0.0
    %2755 = vmatpush1.msra.mxu0 %v1894
    %2756 = vmatprep.subr.mxu0 0.0
    %2757 = vmatpush1.msra.mxu0 %v1895
    %2758 = vmatprep.subr.mxu0 0.0
    %2759 = vmatpush1.msra.mxu0 %v1896
    %2760 = vmatprep.subr.mxu0 0.0
    %2761 = vmatpush1.msra.mxu0 0.0
    %2762 = vmatprep.subr.mxu0 0.0
    %2763 = vmatpush1.msra.mxu0 0.0
    %2764 = vmatprep.subr.mxu0 0.0
    %2765 = vmatpush1.msra.mxu0 0.0
    %2766 = vmatprep.subr.mxu0 0.0
    %2767 = vmatpush1.msra.mxu0 0.0
    %2768 = vmatprep.subr.mxu0 0.0
    %2769 = vmatpush1.msra.mxu0 0.0
    %2770 = vmatprep.subr.mxu0 0.0
    %2771 = vmatpush1.msra.mxu0 0.0
    %2772 = vmatprep.subr.mxu0 0.0
    %2773 = vmatpush1.msra.mxu0 0.0
    %2774 = vmatprep.subr.mxu0 0.0
    %2775 = vmatpush1.msra.mxu0 0.0
    %2776 = vmatprep.subr.mxu0 0.0
    %2777 = vmatpush1.msra.mxu0 0.0
    %2778 = vmatprep.subr.mxu0 0.0
    %2779 = vmatpush1.msra.mxu0 0.0
    %2780 = vmatprep.subr.mxu0 0.0
    %2781 = vmatpush1.msra.mxu0 0.0
    %2782 = vmatprep.subr.mxu0 0.0
    %2783 = vmatpush1.msra.mxu0 0.0
    %2784 = vmatprep.subr.mxu0 0.0
    %2785 = vmatpush1.msra.mxu0 0.0
    %2786 = vmatprep.subr.mxu0 0.0
    %2787 = vmatpush1.msra.mxu0 0.0
    %2788 = vmatprep.subr.mxu0 0.0
    %2789 = vmatpush1.msra.mxu0 0.0
    %2790 = vmatprep.subr.mxu0 0.0
    %2791 = vmatpush1.msra.mxu0 0.0
    %2792 = vmatprep.subr.mxu0 0.0
    %2793 = vmatpush1.msra.mxu0 0.0
    %2794 = vmatprep.subr.mxu0 0.0
    %2795 = vmatpush1.msra.mxu0 0.0
    %2796 = vmatprep.subr.mxu0 0.0
    %2797 = vmatpush1.msra.mxu0 0.0
    %2798 = vmatprep.subr.mxu0 0.0
    %2799 = vmatpush1.msra.mxu0 0.0
    %2800 = vmatprep.subr.mxu0 0.0
    %2801 = vmatpush1.msra.mxu0 0.0
    %2802 = vmatprep.subr.mxu0 0.0
    %2803 = vmatpush1.msra.mxu0 0.0
    %2804 = vmatprep.subr.mxu0 0.0
    %2805 = vmatpush1.msra.mxu0 0.0
    %2806 = vmatprep.subr.mxu0 0.0
    %2807 = vmatpush1.msra.mxu0 0.0
    %2808 = vmatprep.subr.mxu0 0.0
    %2809 = vmatpush1.msra.mxu0 0.0
    %2810 = vmatprep.subr.mxu0 0.0
    %2811 = vmatpush1.msra.mxu0 0.0
    %2812 = vmatprep.subr.mxu0 0.0
    %2813 = vmatpush1.msra.mxu0 0.0
    %2814 = vmatprep.subr.mxu0 0.0
    %2815 = vmatpush1.msra.mxu0 0.0
    %2816 = vmatprep.mubr.f32.mxu0 0.0
    %2817 = vmatmul.mubr.f32.gmra.mrb[0].mxu0 %v2750
    %v2818 = vpop.f32.mrb[0].mxu0
    %v2819 = vadd.f32 %v2748, %v2818
    %v2820 = vpop.f32.mrb[0].mxu0
    %2821 = vdwg.mxu0
    %v2822 = vxor.u32 %v2819, 2147483648
    %v2823 = vmul.f32 %v2822, 1.442695
    %v2824 = vpow.pop %v2823
    %v2825 = vadd.f32 %v2824, 1.0
    %v2826 = vrcp.pop %v2825
    %v2827 = vmul.f32 1.0, %v2826
    %v2828 = vtanh.pop %v2819
    %v2829 = vmul.f32 %v2827, %v2737
    %2831 = vrot.lane.b32.xlu0 %v2828, 64
    %v2832 = vpop.permute.xlu0 %2831
    %v2834 = vmul.f32 %v2827, %v2832
    %2836 = vrot.lane.b32.xlu0 %v2834, 32
    %v2837 = vpop.permute.xlu0 %2836
    %v2839 = vadd.f32 %v2829, %v2837
    %v2840 = vtanh.pop %v2839
    %2842 = vrot.lane.b32.xlu0 %v2840, 64
    %v2843 = vpop.permute.xlu0 %2842
    %v2845 = vmul.f32 %v2827, %v2843
    %2847 = vrot.lane.b32.xlu0 %v2845, 32
    %v2848 = vpop.permute.xlu0 %2847
    %v2849 = vrot.slane %v2088, 4
    %v2851 = vsel %vm239, %v2848, 0
    %2853 = vmatprep.subr.mxu0 0.0
    %2854 = vmatpush1.msra.mxu0 %v1893
    %2855 = vmatprep.subr.mxu0 0.0
    %2856 = vmatpush1.msra.mxu0 %v1894
    %2857 = vmatprep.subr.mxu0 0.0
    %2858 = vmatpush1.msra.mxu0 %v1895
    %2859 = vmatprep.subr.mxu0 0.0
    %2860 = vmatpush1.msra.mxu0 %v1896
    %2861 = vmatprep.subr.mxu0 0.0
    %2862 = vmatpush1.msra.mxu0 0.0
    %2863 = vmatprep.subr.mxu0 0.0
    %2864 = vmatpush1.msra.mxu0 0.0
    %2865 = vmatprep.subr.mxu0 0.0
    %2866 = vmatpush1.msra.mxu0 0.0
    %2867 = vmatprep.subr.mxu0 0.0
    %2868 = vmatpush1.msra.mxu0 0.0
    %2869 = vmatprep.subr.mxu0 0.0
    %2870 = vmatpush1.msra.mxu0 0.0
    %2871 = vmatprep.subr.mxu0 0.0
    %2872 = vmatpush1.msra.mxu0 0.0
    %2873 = vmatprep.subr.mxu0 0.0
    %2874 = vmatpush1.msra.mxu0 0.0
    %2875 = vmatprep.subr.mxu0 0.0
    %2876 = vmatpush1.msra.mxu0 0.0
    %2877 = vmatprep.subr.mxu0 0.0
    %2878 = vmatpush1.msra.mxu0 0.0
    %2879 = vmatprep.subr.mxu0 0.0
    %2880 = vmatpush1.msra.mxu0 0.0
    %2881 = vmatprep.subr.mxu0 0.0
    %2882 = vmatpush1.msra.mxu0 0.0
    %2883 = vmatprep.subr.mxu0 0.0
    %2884 = vmatpush1.msra.mxu0 0.0
    %2885 = vmatprep.subr.mxu0 0.0
    %2886 = vmatpush1.msra.mxu0 0.0
    %2887 = vmatprep.subr.mxu0 0.0
    %2888 = vmatpush1.msra.mxu0 0.0
    %2889 = vmatprep.subr.mxu0 0.0
    %2890 = vmatpush1.msra.mxu0 0.0
    %2891 = vmatprep.subr.mxu0 0.0
    %2892 = vmatpush1.msra.mxu0 0.0
    %2893 = vmatprep.subr.mxu0 0.0
    %2894 = vmatpush1.msra.mxu0 0.0
    %2895 = vmatprep.subr.mxu0 0.0
    %2896 = vmatpush1.msra.mxu0 0.0
    %2897 = vmatprep.subr.mxu0 0.0
    %2898 = vmatpush1.msra.mxu0 0.0
    %2899 = vmatprep.subr.mxu0 0.0
    %2900 = vmatpush1.msra.mxu0 0.0
    %2901 = vmatprep.subr.mxu0 0.0
    %2902 = vmatpush1.msra.mxu0 0.0
    %2903 = vmatprep.subr.mxu0 0.0
    %2904 = vmatpush1.msra.mxu0 0.0
    %2905 = vmatprep.subr.mxu0 0.0
    %2906 = vmatpush1.msra.mxu0 0.0
    %2907 = vmatprep.subr.mxu0 0.0
    %2908 = vmatpush1.msra.mxu0 0.0
    %2909 = vmatprep.subr.mxu0 0.0
    %2910 = vmatpush1.msra.mxu0 0.0
    %2911 = vmatprep.subr.mxu0 0.0
    %2912 = vmatpush1.msra.mxu0 0.0
    %2913 = vmatprep.subr.mxu0 0.0
    %2914 = vmatpush1.msra.mxu0 0.0
    %2915 = vmatprep.subr.mxu0 0.0
    %2916 = vmatpush1.msra.mxu0 0.0
    %2917 = vmatprep.mubr.f32.mxu0 0.0
    %2918 = vmatmul.mubr.f32.gmra.mrb[0].mxu0 %v2851
    %v2919 = vpop.f32.mrb[0].mxu0
    %v2920 = vadd.f32 %v2849, %v2919
    %v2921 = vpop.f32.mrb[0].mxu0
    %2922 = vdwg.mxu0
    %v2923 = vxor.u32 %v2920, 2147483648
    %v2924 = vmul.f32 %v2923, 1.442695
    %v2925 = vpow.pop %v2924
    %v2926 = vadd.f32 %v2925, 1.0
    %v2927 = vrcp.pop %v2926
    %v2928 = vmul.f32 1.0, %v2927
    %v2929 = vtanh.pop %v2920
    %v2930 = vmul.f32 %v2928, %v2839
    %2932 = vrot.lane.b32.xlu0 %v2929, 64
    %v2933 = vpop.permute.xlu0 %2932
    %v2935 = vmul.f32 %v2928, %v2933
    %2937 = vrot.lane.b32.xlu0 %v2935, 32
    %v2938 = vpop.permute.xlu0 %2937
    %v2940 = vadd.f32 %v2930, %v2938
    %v2941 = vtanh.pop %v2940
    %2943 = vrot.lane.b32.xlu0 %v2941, 64
    %v2944 = vpop.permute.xlu0 %2943
    %v2946 = vmul.f32 %v2928, %v2944
    %2948 = vrot.lane.b32.xlu0 %v2946, 32
    %v2949 = vpop.permute.xlu0 %2948
    %v2950 = vrot.slane %v2088, 6
    %v2952 = vsel %vm239, %v2949, 0
    %2954 = vmatprep.subr.mxu0 0.0
    %2955 = vmatpush1.msra.mxu0 %v1893
    %2956 = vmatprep.subr.mxu0 0.0
    %2957 = vmatpush1.msra.mxu0 %v1894
    %2958 = vmatprep.subr.mxu0 0.0
    %2959 = vmatpush1.msra.mxu0 %v1895
    %2960 = vmatprep.subr.mxu0 0.0
    %2961 = vmatpush1.msra.mxu0 %v1896
    %2962 = vmatprep.subr.mxu0 0.0
    %2963 = vmatpush1.msra.mxu0 0.0
    %2964 = vmatprep.subr.mxu0 0.0
    %2965 = vmatpush1.msra.mxu0 0.0
    %2966 = vmatprep.subr.mxu0 0.0
    %2967 = vmatpush1.msra.mxu0 0.0
    %2968 = vmatprep.subr.mxu0 0.0
    %2969 = vmatpush1.msra.mxu0 0.0
    %2970 = vmatprep.subr.mxu0 0.0
    %2971 = vmatpush1.msra.mxu0 0.0
    %2972 = vmatprep.subr.mxu0 0.0
    %2973 = vmatpush1.msra.mxu0 0.0
    %2974 = vmatprep.subr.mxu0 0.0
    %2975 = vmatpush1.msra.mxu0 0.0
    %2976 = vmatprep.subr.mxu0 0.0
    %2977 = vmatpush1.msra.mxu0 0.0
    %2978 = vmatprep.subr.mxu0 0.0
    %2979 = vmatpush1.msra.mxu0 0.0
    %2980 = vmatprep.subr.mxu0 0.0
    %2981 = vmatpush1.msra.mxu0 0.0
    %2982 = vmatprep.subr.mxu0 0.0
    %2983 = vmatpush1.msra.mxu0 0.0
    %2984 = vmatprep.subr.mxu0 0.0
    %2985 = vmatpush1.msra.mxu0 0.0
    %2986 = vmatprep.subr.mxu0 0.0
    %2987 = vmatpush1.msra.mxu0 0.0
    %2988 = vmatprep.subr.mxu0 0.0
    %2989 = vmatpush1.msra.mxu0 0.0
    %2990 = vmatprep.subr.mxu0 0.0
    %2991 = vmatpush1.msra.mxu0 0.0
    %2992 = vmatprep.subr.mxu0 0.0
    %2993 = vmatpush1.msra.mxu0 0.0
    %2994 = vmatprep.subr.mxu0 0.0
    %2995 = vmatpush1.msra.mxu0 0.0
    %2996 = vmatprep.subr.mxu0 0.0
    %2997 = vmatpush1.msra.mxu0 0.0
    %2998 = vmatprep.subr.mxu0 0.0
    %2999 = vmatpush1.msra.mxu0 0.0
    %3000 = vmatprep.subr.mxu0 0.0
    %3001 = vmatpush1.msra.mxu0 0.0
    %3002 = vmatprep.subr.mxu0 0.0
    %3003 = vmatpush1.msra.mxu0 0.0
    %3004 = vmatprep.subr.mxu0 0.0
    %3005 = vmatpush1.msra.mxu0 0.0
    %3006 = vmatprep.subr.mxu0 0.0
    %3007 = vmatpush1.msra.mxu0 0.0
    %3008 = vmatprep.subr.mxu0 0.0
    %3009 = vmatpush1.msra.mxu0 0.0
    %3010 = vmatprep.subr.mxu0 0.0
    %3011 = vmatpush1.msra.mxu0 0.0
    %3012 = vmatprep.subr.mxu0 0.0
    %3013 = vmatpush1.msra.mxu0 0.0
    %3014 = vmatprep.subr.mxu0 0.0
    %3015 = vmatpush1.msra.mxu0 0.0
    %3016 = vmatprep.subr.mxu0 0.0
    %3017 = vmatpush1.msra.mxu0 0.0
    %3018 = vmatprep.mubr.f32.mxu0 0.0
    %3019 = vmatmul.mubr.f32.gmra.mrb[0].mxu0 %v2952
    %v3020 = vpop.f32.mrb[0].mxu0
    %v3021 = vadd.f32 %v2950, %v3020
    %v3022 = vpop.f32.mrb[0].mxu0
    %3023 = vdwg.mxu0
    %v3024 = vxor.u32 %v3021, 2147483648
    %v3025 = vmul.f32 %v3024, 1.442695
    %v3026 = vpow.pop %v3025
    %v3027 = vadd.f32 %v3026, 1.0
    %v3028 = vrcp.pop %v3027
    %v3029 = vmul.f32 1.0, %v3028
    %v3030 = vtanh.pop %v3021
    %v3031 = vmul.f32 %v3029, %v2940
    %3033 = vrot.lane.b32.xlu0 %v3030, 64
    %v3034 = vpop.permute.xlu0 %3033
    %v3036 = vmul.f32 %v3029, %v3034
    %3038 = vrot.lane.b32.xlu0 %v3036, 32
    %v3039 = vpop.permute.xlu0 %3038
    %v3041 = vadd.f32 %v3031, %v3039
    %v3042 = vtanh.pop %v3041
    %3044 = vrot.lane.b32.xlu0 %v3042, 64
    %v3045 = vpop.permute.xlu0 %3044
    %v3047 = vmul.f32 %v3029, %v3045
    %v3049 = vrot.slane %v2246, 6
    %3051 = vmatprep.subr.mxu0 0.0
    %3052 = vmatpush1.msra.mxu0 %v1906
    %3053 = vmatprep.subr.mxu0 0.0
    %3054 = vmatpush1.msra.mxu0 %v1907
    %3055 = vmatprep.subr.mxu0 0.0
    %3056 = vmatpush1.msra.mxu0 %v1908
    %3057 = vmatprep.subr.mxu0 0.0
    %3058 = vmatpush1.msra.mxu0 %v1909
    %3059 = vmatprep.subr.mxu0 0.0
    %3060 = vmatpush1.msra.mxu0 0.0
    %3061 = vmatprep.subr.mxu0 0.0
    %3062 = vmatpush1.msra.mxu0 0.0
    %3063 = vmatprep.subr.mxu0 0.0
    %3064 = vmatpush1.msra.mxu0 0.0
    %3065 = vmatprep.subr.mxu0 0.0
    %3066 = vmatpush1.msra.mxu0 0.0
    %3067 = vmatprep.subr.mxu0 0.0
    %3068 = vmatpush1.msra.mxu0 0.0
    %3069 = vmatprep.subr.mxu0 0.0
    %3070 = vmatpush1.msra.mxu0 0.0
    %3071 = vmatprep.subr.mxu0 0.0
    %3072 = vmatpush1.msra.mxu0 0.0
    %3073 = vmatprep.subr.mxu0 0.0
    %3074 = vmatpush1.msra.mxu0 0.0
    %3075 = vmatprep.subr.mxu0 0.0
    %3076 = vmatpush1.msra.mxu0 0.0
    %3077 = vmatprep.subr.mxu0 0.0
    %3078 = vmatpush1.msra.mxu0 0.0
    %3079 = vmatprep.subr.mxu0 0.0
    %3080 = vmatpush1.msra.mxu0 0.0
    %3081 = vmatprep.subr.mxu0 0.0
    %3082 = vmatpush1.msra.mxu0 0.0
    %3083 = vmatprep.subr.mxu0 0.0
    %3084 = vmatpush1.msra.mxu0 0.0
    %3085 = vmatprep.subr.mxu0 0.0
    %3086 = vmatpush1.msra.mxu0 0.0
    %3087 = vmatprep.subr.mxu0 0.0
    %3088 = vmatpush1.msra.mxu0 0.0
    %3089 = vmatprep.subr.mxu0 0.0
    %3090 = vmatpush1.msra.mxu0 0.0
    %3091 = vmatprep.subr.mxu0 0.0
    %3092 = vmatpush1.msra.mxu0 0.0
    %3093 = vmatprep.subr.mxu0 0.0
    %3094 = vmatpush1.msra.mxu0 0.0
    %3095 = vmatprep.subr.mxu0 0.0
    %3096 = vmatpush1.msra.mxu0 0.0
    %3097 = vmatprep.subr.mxu0 0.0
    %3098 = vmatpush1.msra.mxu0 0.0
    %3099 = vmatprep.subr.mxu0 0.0
    %3100 = vmatpush1.msra.mxu0 0.0
    %3101 = vmatprep.subr.mxu0 0.0
    %3102 = vmatpush1.msra.mxu0 0.0
    %3103 = vmatprep.subr.mxu0 0.0
    %3104 = vmatpush1.msra.mxu0 0.0
    %3105 = vmatprep.subr.mxu0 0.0
    %3106 = vmatpush1.msra.mxu0 0.0
    %3107 = vmatprep.subr.mxu0 0.0
    %3108 = vmatpush1.msra.mxu0 0.0
    %3109 = vmatprep.subr.mxu0 0.0
    %3110 = vmatpush1.msra.mxu0 0.0
    %3111 = vmatprep.subr.mxu0 0.0
    %3112 = vmatpush1.msra.mxu0 0.0
    %3113 = vmatprep.subr.mxu0 0.0
    %3114 = vmatpush1.msra.mxu0 0.0
    %3115 = vmatprep.mubr.f32.mxu0 0.0
    %3116 = vmatmul.mubr.f32.gmra.mrb[0].mxu0 %v241
    %v3117 = vpop.f32.mrb[0].mxu0
    %v3118 = vadd.f32 %v3049, %v3117
    %v3119 = vpop.f32.mrb[0].mxu0
    %3120 = vdwg.mxu0
    %v3121 = vxor.u32 %v3118, 2147483648
    %v3122 = vmul.f32 %v3121, 1.442695
    %v3123 = vpow.pop %v3122
    %v3124 = vadd.f32 %v3123, 1.0
    %v3125 = vrcp.pop %v3124
    %v3126 = vmul.f32 1.0, %v3125
    %v3127 = vtanh.pop %v3118
    %v3128 = vmul.f32 %v3126, 0.0
    %3130 = vrot.lane.b32.xlu0 %v3127, 64
    %v3131 = vpop.permute.xlu0 %3130
    %v3133 = vmul.f32 %v3126, %v3131
    %3135 = vrot.lane.b32.xlu0 %v3133, 32
    %v3136 = vpop.permute.xlu0 %3135
    %v3138 = vadd.f32 %v3128, %v3136
    %v3139 = vtanh.pop %v3138
    %3141 = vrot.lane.b32.xlu0 %v3139, 64
    %v3142 = vpop.permute.xlu0 %3141
    %v3144 = vmul.f32 %v3126, %v3142
    %3146 = vrot.lane.b32.xlu0 %v3144, 32
    %v3147 = vpop.permute.xlu0 %3146
    %v3148 = vrot.slane %v2246, 4
    %v3150 = vsel %vm239, %v3147, 0
    %3152 = vmatprep.subr.mxu0 0.0
    %3153 = vmatpush1.msra.mxu0 %v1906
    %3154 = vmatprep.subr.mxu0 0.0
    %3155 = vmatpush1.msra.mxu0 %v1907
    %3156 = vmatprep.subr.mxu0 0.0
    %3157 = vmatpush1.msra.mxu0 %v1908
    %3158 = vmatprep.subr.mxu0 0.0
    %3159 = vmatpush1.msra.mxu0 %v1909
    %3160 = vmatprep.subr.mxu0 0.0
    %3161 = vmatpush1.msra.mxu0 0.0
    %3162 = vmatprep.subr.mxu0 0.0
    %3163 = vmatpush1.msra.mxu0 0.0
    %3164 = vmatprep.subr.mxu0 0.0
    %3165 = vmatpush1.msra.mxu0 0.0
    %3166 = vmatprep.subr.mxu0 0.0
    %3167 = vmatpush1.msra.mxu0 0.0
    %3168 = vmatprep.subr.mxu0 0.0
    %3169 = vmatpush1.msra.mxu0 0.0
    %3170 = vmatprep.subr.mxu0 0.0
    %3171 = vmatpush1.msra.mxu0 0.0
    %3172 = vmatprep.subr.mxu0 0.0
    %3173 = vmatpush1.msra.mxu0 0.0
    %3174 = vmatprep.subr.mxu0 0.0
    %3175 = vmatpush1.msra.mxu0 0.0
    %3176 = vmatprep.subr.mxu0 0.0
    %3177 = vmatpush1.msra.mxu0 0.0
    %3178 = vmatprep.subr.mxu0 0.0
    %3179 = vmatpush1.msra.mxu0 0.0
    %3180 = vmatprep.subr.mxu0 0.0
    %3181 = vmatpush1.msra.mxu0 0.0
    %3182 = vmatprep.subr.mxu0 0.0
    %3183 = vmatpush1.msra.mxu0 0.0
    %3184 = vmatprep.subr.mxu0 0.0
    %3185 = vmatpush1.msra.mxu0 0.0
    %3186 = vmatprep.subr.mxu0 0.0
    %3187 = vmatpush1.msra.mxu0 0.0
    %3188 = vmatprep.subr.mxu0 0.0
    %3189 = vmatpush1.msra.mxu0 0.0
    %3190 = vmatprep.subr.mxu0 0.0
    %3191 = vmatpush1.msra.mxu0 0.0
    %3192 = vmatprep.subr.mxu0 0.0
    %3193 = vmatpush1.msra.mxu0 0.0
    %3194 = vmatprep.subr.mxu0 0.0
    %3195 = vmatpush1.msra.mxu0 0.0
    %3196 = vmatprep.subr.mxu0 0.0
    %3197 = vmatpush1.msra.mxu0 0.0
    %3198 = vmatprep.subr.mxu0 0.0
    %3199 = vmatpush1.msra.mxu0 0.0
    %3200 = vmatprep.subr.mxu0 0.0
    %3201 = vmatpush1.msra.mxu0 0.0
    %3202 = vmatprep.subr.mxu0 0.0
    %3203 = vmatpush1.msra.mxu0 0.0
    %3204 = vmatprep.subr.mxu0 0.0
    %3205 = vmatpush1.msra.mxu0 0.0
    %3206 = vmatprep.subr.mxu0 0.0
    %3207 = vmatpush1.msra.mxu0 0.0
    %3208 = vmatprep.subr.mxu0 0.0
    %3209 = vmatpush1.msra.mxu0 0.0
    %3210 = vmatprep.subr.mxu0 0.0
    %3211 = vmatpush1.msra.mxu0 0.0
    %3212 = vmatprep.subr.mxu0 0.0
    %3213 = vmatpush1.msra.mxu0 0.0
    %3214 = vmatprep.subr.mxu0 0.0
    %3215 = vmatpush1.msra.mxu0 0.0
    %3216 = vmatprep.mubr.f32.mxu0 0.0
    %3217 = vmatmul.mubr.f32.gmra.mrb[0].mxu0 %v3150
    %v3218 = vpop.f32.mrb[0].mxu0
    %v3219 = vadd.f32 %v3148, %v3218
    %v3220 = vpop.f32.mrb[0].mxu0
    %3221 = vdwg.mxu0
    %v3222 = vxor.u32 %v3219, 2147483648
    %v3223 = vmul.f32 %v3222, 1.442695
    %v3224 = vpow.pop %v3223
    %v3225 = vadd.f32 %v3224, 1.0
    %v3226 = vrcp.pop %v3225
    %v3227 = vmul.f32 1.0, %v3226
    %v3228 = vtanh.pop %v3219
    %v3229 = vmul.f32 %v3227, %v3138
    %3231 = vrot.lane.b32.xlu0 %v3228, 64
    %v3232 = vpop.permute.xlu0 %3231
    %v3234 = vmul.f32 %v3227, %v3232
    %3236 = vrot.lane.b32.xlu0 %v3234, 32
    %v3237 = vpop.permute.xlu0 %3236
    %v3239 = vadd.f32 %v3229, %v3237
    %v3240 = vtanh.pop %v3239
    %3242 = vrot.lane.b32.xlu0 %v3240, 64
    %v3243 = vpop.permute.xlu0 %3242
    %v3245 = vmul.f32 %v3227, %v3243
    %3247 = vrot.lane.b32.xlu0 %v3245, 32
    %v3248 = vpop.permute.xlu0 %3247
    %v3249 = vrot.slane %v2246, 2
    %v3251 = vsel %vm239, %v3248, 0
    %3253 = vmatprep.subr.mxu0 0.0
    %3254 = vmatpush1.msra.mxu0 %v1906
    %3255 = vmatprep.subr.mxu0 0.0
    %3256 = vmatpush1.msra.mxu0 %v1907
    %3257 = vmatprep.subr.mxu0 0.0
    %3258 = vmatpush1.msra.mxu0 %v1908
    %3259 = vmatprep.subr.mxu0 0.0
    %3260 = vmatpush1.msra.mxu0 %v1909
    %3261 = vmatprep.subr.mxu0 0.0
    %3262 = vmatpush1.msra.mxu0 0.0
    %3263 = vmatprep.subr.mxu0 0.0
    %3264 = vmatpush1.msra.mxu0 0.0
    %3265 = vmatprep.subr.mxu0 0.0
    %3266 = vmatpush1.msra.mxu0 0.0
    %3267 = vmatprep.subr.mxu0 0.0
    %3268 = vmatpush1.msra.mxu0 0.0
    %3269 = vmatprep.subr.mxu0 0.0
    %3270 = vmatpush1.msra.mxu0 0.0
    %3271 = vmatprep.subr.mxu0 0.0
    %3272 = vmatpush1.msra.mxu0 0.0
    %3273 = vmatprep.subr.mxu0 0.0
    %3274 = vmatpush1.msra.mxu0 0.0
    %3275 = vmatprep.subr.mxu0 0.0
    %3276 = vmatpush1.msra.mxu0 0.0
    %3277 = vmatprep.subr.mxu0 0.0
    %3278 = vmatpush1.msra.mxu0 0.0
    %3279 = vmatprep.subr.mxu0 0.0
    %3280 = vmatpush1.msra.mxu0 0.0
    %3281 = vmatprep.subr.mxu0 0.0
    %3282 = vmatpush1.msra.mxu0 0.0
    %3283 = vmatprep.subr.mxu0 0.0
    %3284 = vmatpush1.msra.mxu0 0.0
    %3285 = vmatprep.subr.mxu0 0.0
    %3286 = vmatpush1.msra.mxu0 0.0
    %3287 = vmatprep.subr.mxu0 0.0
    %3288 = vmatpush1.msra.mxu0 0.0
    %3289 = vmatprep.subr.mxu0 0.0
    %3290 = vmatpush1.msra.mxu0 0.0
    %3291 = vmatprep.subr.mxu0 0.0
    %3292 = vmatpush1.msra.mxu0 0.0
    %3293 = vmatprep.subr.mxu0 0.0
    %3294 = vmatpush1.msra.mxu0 0.0
    %3295 = vmatprep.subr.mxu0 0.0
    %3296 = vmatpush1.msra.mxu0 0.0
    %3297 = vmatprep.subr.mxu0 0.0
    %3298 = vmatpush1.msra.mxu0 0.0
    %3299 = vmatprep.subr.mxu0 0.0
    %3300 = vmatpush1.msra.mxu0 0.0
    %3301 = vmatprep.subr.mxu0 0.0
    %3302 = vmatpush1.msra.mxu0 0.0
    %3303 = vmatprep.subr.mxu0 0.0
    %3304 = vmatpush1.msra.mxu0 0.0
    %3305 = vmatprep.subr.mxu0 0.0
    %3306 = vmatpush1.msra.mxu0 0.0
    %3307 = vmatprep.subr.mxu0 0.0
    %3308 = vmatpush1.msra.mxu0 0.0
    %3309 = vmatprep.subr.mxu0 0.0
    %3310 = vmatpush1.msra.mxu0 0.0
    %3311 = vmatprep.subr.mxu0 0.0
    %3312 = vmatpush1.msra.mxu0 0.0
    %3313 = vmatprep.subr.mxu0 0.0
    %3314 = vmatpush1.msra.mxu0 0.0
    %3315 = vmatprep.subr.mxu0 0.0
    %3316 = vmatpush1.msra.mxu0 0.0
    %3317 = vmatprep.mubr.f32.mxu0 0.0
    %3318 = vmatmul.mubr.f32.gmra.mrb[0].mxu0 %v3251
    %v3319 = vpop.f32.mrb[0].mxu0
    %v3320 = vadd.f32 %v3249, %v3319
    %v3321 = vpop.f32.mrb[0].mxu0
    %3322 = vdwg.mxu0
    %v3323 = vxor.u32 %v3320, 2147483648
    %v3324 = vmul.f32 %v3323, 1.442695
    %v3325 = vpow.pop %v3324
    %v3326 = vadd.f32 %v3325, 1.0
    %v3327 = vrcp.pop %v3326
    %v3328 = vmul.f32 1.0, %v3327
    %v3329 = vtanh.pop %v3320
    %v3330 = vmul.f32 %v3328, %v3239
    %3332 = vrot.lane.b32.xlu0 %v3329, 64
    %v3333 = vpop.permute.xlu0 %3332
    %v3335 = vmul.f32 %v3328, %v3333
    %3337 = vrot.lane.b32.xlu0 %v3335, 32
    %v3338 = vpop.permute.xlu0 %3337
    %v3340 = vadd.f32 %v3330, %v3338
    %v3341 = vtanh.pop %v3340
    %3343 = vrot.lane.b32.xlu0 %v3341, 64
    %v3344 = vpop.permute.xlu0 %3343
    %v3346 = vmul.f32 %v3328, %v3344
    %3348 = vrot.lane.b32.xlu0 %v3346, 32
    %v3349 = vpop.permute.xlu0 %3348
    %v3350 = vsel %vm239, %v3349, 0
    %3352 = vmatprep.subr.mxu0 0.0
    %3353 = vmatpush1.msra.mxu0 %v1906
    %3354 = vmatprep.subr.mxu0 0.0
    %3355 = vmatpush1.msra.mxu0 %v1907
    %3356 = vmatprep.subr.mxu0 0.0
    %3357 = vmatpush1.msra.mxu0 %v1908
    %3358 = vmatprep.subr.mxu0 0.0
    %3359 = vmatpush1.msra.mxu0 %v1909
    %3360 = vmatprep.subr.mxu0 0.0
    %3361 = vmatpush1.msra.mxu0 0.0
    %3362 = vmatprep.subr.mxu0 0.0
    %3363 = vmatpush1.msra.mxu0 0.0
    %3364 = vmatprep.subr.mxu0 0.0
    %3365 = vmatpush1.msra.mxu0 0.0
    %3366 = vmatprep.subr.mxu0 0.0
    %3367 = vmatpush1.msra.mxu0 0.0
    %3368 = vmatprep.subr.mxu0 0.0
    %3369 = vmatpush1.msra.mxu0 0.0
    %3370 = vmatprep.subr.mxu0 0.0
    %3371 = vmatpush1.msra.mxu0 0.0
    %3372 = vmatprep.subr.mxu0 0.0
    %3373 = vmatpush1.msra.mxu0 0.0
    %3374 = vmatprep.subr.mxu0 0.0
    %3375 = vmatpush1.msra.mxu0 0.0
    %3376 = vmatprep.subr.mxu0 0.0
    %3377 = vmatpush1.msra.mxu0 0.0
    %3378 = vmatprep.subr.mxu0 0.0
    %3379 = vmatpush1.msra.mxu0 0.0
    %3380 = vmatprep.subr.mxu0 0.0
    %3381 = vmatpush1.msra.mxu0 0.0
    %3382 = vmatprep.subr.mxu0 0.0
    %3383 = vmatpush1.msra.mxu0 0.0
    %3384 = vmatprep.subr.mxu0 0.0
    %3385 = vmatpush1.msra.mxu0 0.0
    %3386 = vmatprep.subr.mxu0 0.0
    %3387 = vmatpush1.msra.mxu0 0.0
    %3388 = vmatprep.subr.mxu0 0.0
    %3389 = vmatpush1.msra.mxu0 0.0
    %3390 = vmatprep.subr.mxu0 0.0
    %3391 = vmatpush1.msra.mxu0 0.0
    %3392 = vmatprep.subr.mxu0 0.0
    %3393 = vmatpush1.msra.mxu0 0.0
    %3394 = vmatprep.subr.mxu0 0.0
    %3395 = vmatpush1.msra.mxu0 0.0
    %3396 = vmatprep.subr.mxu0 0.0
    %3397 = vmatpush1.msra.mxu0 0.0
    %3398 = vmatprep.subr.mxu0 0.0
    %3399 = vmatpush1.msra.mxu0 0.0
    %3400 = vmatprep.subr.mxu0 0.0
    %3401 = vmatpush1.msra.mxu0 0.0
    %3402 = vmatprep.subr.mxu0 0.0
    %3403 = vmatpush1.msra.mxu0 0.0
    %3404 = vmatprep.subr.mxu0 0.0
    %3405 = vmatpush1.msra.mxu0 0.0
    %3406 = vmatprep.subr.mxu0 0.0
    %3407 = vmatpush1.msra.mxu0 0.0
    %3408 = vmatprep.subr.mxu0 0.0
    %3409 = vmatpush1.msra.mxu0 0.0
    %3410 = vmatprep.subr.mxu0 0.0
    %3411 = vmatpush1.msra.mxu0 0.0
    %3412 = vmatprep.subr.mxu0 0.0
    %3413 = vmatpush1.msra.mxu0 0.0
    %3414 = vmatprep.subr.mxu0 0.0
    %3415 = vmatpush1.msra.mxu0 0.0
    %3416 = vmatprep.mubr.f32.mxu0 0.0
    %3417 = vmatmul.mubr.f32.gmra.mrb[0].mxu0 %v3350
    %v3418 = vpop.f32.mrb[0].mxu0
    %v3419 = vadd.f32 %v2246, %v3418
    %v3420 = vpop.f32.mrb[0].mxu0
    %3421 = vdwg.mxu0
    %v3422 = vxor.u32 %v3419, 2147483648
    %v3423 = vmul.f32 %v3422, 1.442695
    %v3424 = vpow.pop %v3423
    %v3425 = vadd.f32 %v3424, 1.0
    %v3426 = vrcp.pop %v3425
    %v3427 = vmul.f32 1.0, %v3426
    %v3428 = vtanh.pop %v3419
    %v3429 = vmul.f32 %v3427, %v3340
    %3431 = vrot.lane.b32.xlu0 %v3428, 64
    %v3432 = vpop.permute.xlu0 %3431
    %v3434 = vmul.f32 %v3427, %v3432
    %3436 = vrot.lane.b32.xlu0 %v3434, 32
    %v3437 = vpop.permute.xlu0 %3436
    %v3439 = vadd.f32 %v3429, %v3437
    %v3440 = vtanh.pop %v3439
    %3442 = vrot.lane.b32.xlu0 %v3440, 64
    %v3443 = vpop.permute.xlu0 %3442
    %v3445 = vmul.f32 %v3427, %v3443
    %3447 = vrot.lane.b32.xlu0 %v3445, 32
    %v3448 = vpop.permute.xlu0 %3447
    %v3450 = vrot.slane %v2245, 6
    %v3452 = vsel %vm239, %v3448, 0
    %3454 = vmatprep.subr.mxu0 0.0
    %3455 = vmatpush1.msra.mxu0 %v1906
    %3456 = vmatprep.subr.mxu0 0.0
    %3457 = vmatpush1.msra.mxu0 %v1907
    %3458 = vmatprep.subr.mxu0 0.0
    %3459 = vmatpush1.msra.mxu0 %v1908
    %3460 = vmatprep.subr.mxu0 0.0
    %3461 = vmatpush1.msra.mxu0 %v1909
    %3462 = vmatprep.subr.mxu0 0.0
    %3463 = vmatpush1.msra.mxu0 0.0
    %3464 = vmatprep.subr.mxu0 0.0
    %3465 = vmatpush1.msra.mxu0 0.0
    %3466 = vmatprep.subr.mxu0 0.0
    %3467 = vmatpush1.msra.mxu0 0.0
    %3468 = vmatprep.subr.mxu0 0.0
    %3469 = vmatpush1.msra.mxu0 0.0
    %3470 = vmatprep.subr.mxu0 0.0
    %3471 = vmatpush1.msra.mxu0 0.0
    %3472 = vmatprep.subr.mxu0 0.0
    %3473 = vmatpush1.msra.mxu0 0.0
    %3474 = vmatprep.subr.mxu0 0.0
    %3475 = vmatpush1.msra.mxu0 0.0
    %3476 = vmatprep.subr.mxu0 0.0
    %3477 = vmatpush1.msra.mxu0 0.0
    %3478 = vmatprep.subr.mxu0 0.0
    %3479 = vmatpush1.msra.mxu0 0.0
    %3480 = vmatprep.subr.mxu0 0.0
    %3481 = vmatpush1.msra.mxu0 0.0
    %3482 = vmatprep.subr.mxu0 0.0
    %3483 = vmatpush1.msra.mxu0 0.0
    %3484 = vmatprep.subr.mxu0 0.0
    %3485 = vmatpush1.msra.mxu0 0.0
    %3486 = vmatprep.subr.mxu0 0.0
    %3487 = vmatpush1.msra.mxu0 0.0
    %3488 = vmatprep.subr.mxu0 0.0
    %3489 = vmatpush1.msra.mxu0 0.0
    %3490 = vmatprep.subr.mxu0 0.0
    %3491 = vmatpush1.msra.mxu0 0.0
    %3492 = vmatprep.subr.mxu0 0.0
    %3493 = vmatpush1.msra.mxu0 0.0
    %3494 = vmatprep.subr.mxu0 0.0
    %3495 = vmatpush1.msra.mxu0 0.0
    %3496 = vmatprep.subr.mxu0 0.0
    %3497 = vmatpush1.msra.mxu0 0.0
    %3498 = vmatprep.subr.mxu0 0.0
    %3499 = vmatpush1.msra.mxu0 0.0
    %3500 = vmatprep.subr.mxu0 0.0
    %3501 = vmatpush1.msra.mxu0 0.0
    %3502 = vmatprep.subr.mxu0 0.0
    %3503 = vmatpush1.msra.mxu0 0.0
    %3504 = vmatprep.subr.mxu0 0.0
    %3505 = vmatpush1.msra.mxu0 0.0
    %3506 = vmatprep.subr.mxu0 0.0
    %3507 = vmatpush1.msra.mxu0 0.0
    %3508 = vmatprep.subr.mxu0 0.0
    %3509 = vmatpush1.msra.mxu0 0.0
    %3510 = vmatprep.subr.mxu0 0.0
    %3511 = vmatpush1.msra.mxu0 0.0
    %3512 = vmatprep.subr.mxu0 0.0
    %3513 = vmatpush1.msra.mxu0 0.0
    %3514 = vmatprep.subr.mxu0 0.0
    %3515 = vmatpush1.msra.mxu0 0.0
    %3516 = vmatprep.subr.mxu0 0.0
    %3517 = vmatpush1.msra.mxu0 0.0
    %3518 = vmatprep.mubr.f32.mxu0 0.0
    %3519 = vmatmul.mubr.f32.gmra.mrb[0].mxu0 %v3452
    %v3520 = vpop.f32.mrb[0].mxu0
    %v3521 = vadd.f32 %v3450, %v3520
    %v3522 = vpop.f32.mrb[0].mxu0
    %3523 = vdwg.mxu0
    %v3524 = vxor.u32 %v3521, 2147483648
    %v3525 = vmul.f32 %v3524, 1.442695
    %v3526 = vpow.pop %v3525
    %v3527 = vadd.f32 %v3526, 1.0
    %v3528 = vrcp.pop %v3527
    %v3529 = vmul.f32 1.0, %v3528
    %v3530 = vtanh.pop %v3521
    %v3531 = vmul.f32 %v3529, %v3439
    %3533 = vrot.lane.b32.xlu0 %v3530, 64
    %v3534 = vpop.permute.xlu0 %3533
    %v3536 = vmul.f32 %v3529, %v3534
    %3538 = vrot.lane.b32.xlu0 %v3536, 32
    %v3539 = vpop.permute.xlu0 %3538
    %v3541 = vadd.f32 %v3531, %v3539
    %v3542 = vtanh.pop %v3541
    %3544 = vrot.lane.b32.xlu0 %v3542, 64
    %v3545 = vpop.permute.xlu0 %3544
    %v3547 = vmul.f32 %v3529, %v3545
    %3549 = vrot.lane.b32.xlu0 %v3547, 32
    %v3550 = vpop.permute.xlu0 %3549
    %v3551 = vrot.slane %v2245, 4
    %v3553 = vsel %vm239, %v3550, 0
    %3555 = vmatprep.subr.mxu0 0.0
    %3556 = vmatpush1.msra.mxu0 %v1906
    %3557 = vmatprep.subr.mxu0 0.0
    %3558 = vmatpush1.msra.mxu0 %v1907
    %3559 = vmatprep.subr.mxu0 0.0
    %3560 = vmatpush1.msra.mxu0 %v1908
    %3561 = vmatprep.subr.mxu0 0.0
    %3562 = vmatpush1.msra.mxu0 %v1909
    %3563 = vmatprep.subr.mxu0 0.0
    %3564 = vmatpush1.msra.mxu0 0.0
    %3565 = vmatprep.subr.mxu0 0.0
    %3566 = vmatpush1.msra.mxu0 0.0
    %3567 = vmatprep.subr.mxu0 0.0
    %3568 = vmatpush1.msra.mxu0 0.0
    %3569 = vmatprep.subr.mxu0 0.0
    %3570 = vmatpush1.msra.mxu0 0.0
    %3571 = vmatprep.subr.mxu0 0.0
    %3572 = vmatpush1.msra.mxu0 0.0
    %3573 = vmatprep.subr.mxu0 0.0
    %3574 = vmatpush1.msra.mxu0 0.0
    %3575 = vmatprep.subr.mxu0 0.0
    %3576 = vmatpush1.msra.mxu0 0.0
    %3577 = vmatprep.subr.mxu0 0.0
    %3578 = vmatpush1.msra.mxu0 0.0
    %3579 = vmatprep.subr.mxu0 0.0
    %3580 = vmatpush1.msra.mxu0 0.0
    %3581 = vmatprep.subr.mxu0 0.0
    %3582 = vmatpush1.msra.mxu0 0.0
    %3583 = vmatprep.subr.mxu0 0.0
    %3584 = vmatpush1.msra.mxu0 0.0
    %3585 = vmatprep.subr.mxu0 0.0
    %3586 = vmatpush1.msra.mxu0 0.0
    %3587 = vmatprep.subr.mxu0 0.0
    %3588 = vmatpush1.msra.mxu0 0.0
    %3589 = vmatprep.subr.mxu0 0.0
    %3590 = vmatpush1.msra.mxu0 0.0
    %3591 = vmatprep.subr.mxu0 0.0
    %3592 = vmatpush1.msra.mxu0 0.0
    %3593 = vmatprep.subr.mxu0 0.0
    %3594 = vmatpush1.msra.mxu0 0.0
    %3595 = vmatprep.subr.mxu0 0.0
    %3596 = vmatpush1.msra.mxu0 0.0
    %3597 = vmatprep.subr.mxu0 0.0
    %3598 = vmatpush1.msra.mxu0 0.0
    %3599 = vmatprep.subr.mxu0 0.0
    %3600 = vmatpush1.msra.mxu0 0.0
    %3601 = vmatprep.subr.mxu0 0.0
    %3602 = vmatpush1.msra.mxu0 0.0
    %3603 = vmatprep.subr.mxu0 0.0
    %3604 = vmatpush1.msra.mxu0 0.0
    %3605 = vmatprep.subr.mxu0 0.0
    %3606 = vmatpush1.msra.mxu0 0.0
    %3607 = vmatprep.subr.mxu0 0.0
    %3608 = vmatpush1.msra.mxu0 0.0
    %3609 = vmatprep.subr.mxu0 0.0
    %3610 = vmatpush1.msra.mxu0 0.0
    %3611 = vmatprep.subr.mxu0 0.0
    %3612 = vmatpush1.msra.mxu0 0.0
    %3613 = vmatprep.subr.mxu0 0.0
    %3614 = vmatpush1.msra.mxu0 0.0
    %3615 = vmatprep.subr.mxu0 0.0
    %3616 = vmatpush1.msra.mxu0 0.0
    %3617 = vmatprep.subr.mxu0 0.0
    %3618 = vmatpush1.msra.mxu0 0.0
    %3619 = vmatprep.mubr.f32.mxu0 0.0
    %3620 = vmatmul.mubr.f32.gmra.mrb[0].mxu0 %v3553
    %v3621 = vpop.f32.mrb[0].mxu0
    %v3622 = vadd.f32 %v3551, %v3621
    %v3623 = vpop.f32.mrb[0].mxu0
    %3624 = vdwg.mxu0
    %v3625 = vxor.u32 %v3622, 2147483648
    %v3626 = vmul.f32 %v3625, 1.442695
    %v3627 = vpow.pop %v3626
    %v3628 = vadd.f32 %v3627, 1.0
    %v3629 = vrcp.pop %v3628
    %v3630 = vmul.f32 1.0, %v3629
    %v3631 = vtanh.pop %v3622
    %v3632 = vmul.f32 %v3630, %v3541
    %3634 = vrot.lane.b32.xlu0 %v3631, 64
    %v3635 = vpop.permute.xlu0 %3634
    %v3637 = vmul.f32 %v3630, %v3635
    %3639 = vrot.lane.b32.xlu0 %v3637, 32
    %v3640 = vpop.permute.xlu0 %3639
    %v3642 = vadd.f32 %v3632, %v3640
    %v3643 = vtanh.pop %v3642
    %3645 = vrot.lane.b32.xlu0 %v3643, 64
    %v3646 = vpop.permute.xlu0 %3645
    %v3648 = vmul.f32 %v3630, %v3646
    %3650 = vrot.lane.b32.xlu0 %v3648, 32
    %v3651 = vpop.permute.xlu0 %3650
    %v3652 = vrot.slane %v2245, 2
    %v3654 = vsel %vm239, %v3651, 0
    %3656 = vmatprep.subr.mxu0 0.0
    %3657 = vmatpush1.msra.mxu0 %v1906
    %3658 = vmatprep.subr.mxu0 0.0
    %3659 = vmatpush1.msra.mxu0 %v1907
    %3660 = vmatprep.subr.mxu0 0.0
    %3661 = vmatpush1.msra.mxu0 %v1908
    %3662 = vmatprep.subr.mxu0 0.0
    %3663 = vmatpush1.msra.mxu0 %v1909
    %3664 = vmatprep.subr.mxu0 0.0
    %3665 = vmatpush1.msra.mxu0 0.0
    %3666 = vmatprep.subr.mxu0 0.0
    %3667 = vmatpush1.msra.mxu0 0.0
    %3668 = vmatprep.subr.mxu0 0.0
    %3669 = vmatpush1.msra.mxu0 0.0
    %3670 = vmatprep.subr.mxu0 0.0
    %3671 = vmatpush1.msra.mxu0 0.0
    %3672 = vmatprep.subr.mxu0 0.0
    %3673 = vmatpush1.msra.mxu0 0.0
    %3674 = vmatprep.subr.mxu0 0.0
    %3675 = vmatpush1.msra.mxu0 0.0
    %3676 = vmatprep.subr.mxu0 0.0
    %3677 = vmatpush1.msra.mxu0 0.0
    %3678 = vmatprep.subr.mxu0 0.0
    %3679 = vmatpush1.msra.mxu0 0.0
    %3680 = vmatprep.subr.mxu0 0.0
    %3681 = vmatpush1.msra.mxu0 0.0
    %3682 = vmatprep.subr.mxu0 0.0
    %3683 = vmatpush1.msra.mxu0 0.0
    %3684 = vmatprep.subr.mxu0 0.0
    %3685 = vmatpush1.msra.mxu0 0.0
    %3686 = vmatprep.subr.mxu0 0.0
    %3687 = vmatpush1.msra.mxu0 0.0
    %3688 = vmatprep.subr.mxu0 0.0
    %3689 = vmatpush1.msra.mxu0 0.0
    %3690 = vmatprep.subr.mxu0 0.0
    %3691 = vmatpush1.msra.mxu0 0.0
    %3692 = vmatprep.subr.mxu0 0.0
    %3693 = vmatpush1.msra.mxu0 0.0
    %3694 = vmatprep.subr.mxu0 0.0
    %3695 = vmatpush1.msra.mxu0 0.0
    %3696 = vmatprep.subr.mxu0 0.0
    %3697 = vmatpush1.msra.mxu0 0.0
    %3698 = vmatprep.subr.mxu0 0.0
    %3699 = vmatpush1.msra.mxu0 0.0
    %3700 = vmatprep.subr.mxu0 0.0
    %3701 = vmatpush1.msra.mxu0 0.0
    %3702 = vmatprep.subr.mxu0 0.0
    %3703 = vmatpush1.msra.mxu0 0.0
    %3704 = vmatprep.subr.mxu0 0.0
    %3705 = vmatpush1.msra.mxu0 0.0
    %3706 = vmatprep.subr.mxu0 0.0
    %3707 = vmatpush1.msra.mxu0 0.0
    %3708 = vmatprep.subr.mxu0 0.0
    %3709 = vmatpush1.msra.mxu0 0.0
    %3710 = vmatprep.subr.mxu0 0.0
    %3711 = vmatpush1.msra.mxu0 0.0
    %3712 = vmatprep.subr.mxu0 0.0
    %3713 = vmatpush1.msra.mxu0 0.0
    %3714 = vmatprep.subr.mxu0 0.0
    %3715 = vmatpush1.msra.mxu0 0.0
    %3716 = vmatprep.subr.mxu0 0.0
    %3717 = vmatpush1.msra.mxu0 0.0
    %3718 = vmatprep.subr.mxu0 0.0
    %3719 = vmatpush1.msra.mxu0 0.0
    %3720 = vmatprep.mubr.f32.mxu0 0.0
    %3721 = vmatmul.mubr.f32.gmra.mrb[0].mxu0 %v3654
    %v3722 = vpop.f32.mrb[0].mxu0
    %v3723 = vadd.f32 %v3652, %v3722
    %v3724 = vpop.f32.mrb[0].mxu0
    %3725 = vdwg.mxu0
    %v3726 = vxor.u32 %v3723, 2147483648
    %v3727 = vmul.f32 %v3726, 1.442695
    %v3728 = vpow.pop %v3727
    %v3729 = vadd.f32 %v3728, 1.0
    %v3730 = vrcp.pop %v3729
    %v3731 = vmul.f32 1.0, %v3730
    %v3732 = vtanh.pop %v3723
    %v3733 = vmul.f32 %v3731, %v3642
    %3735 = vrot.lane.b32.xlu0 %v3732, 64
    %v3736 = vpop.permute.xlu0 %3735
    %v3738 = vmul.f32 %v3731, %v3736
    %3740 = vrot.lane.b32.xlu0 %v3738, 32
    %v3741 = vpop.permute.xlu0 %3740
    %v3743 = vadd.f32 %v3733, %v3741
    %v3744 = vtanh.pop %v3743
    %3746 = vrot.lane.b32.xlu0 %v3744, 64
    %v3747 = vpop.permute.xlu0 %3746
    %v3749 = vmul.f32 %v3731, %v3747
    %3751 = vrot.lane.b32.xlu0 %v3749, 32
    %v3752 = vpop.permute.xlu0 %3751
    %v3753 = vsel %vm239, %v3752, 0
    %3755 = vmatprep.subr.mxu0 0.0
    %3756 = vmatpush1.msra.mxu0 %v1906
    %3757 = vmatprep.subr.mxu0 0.0
    %3758 = vmatpush1.msra.mxu0 %v1907
    %3759 = vmatprep.subr.mxu0 0.0
    %3760 = vmatpush1.msra.mxu0 %v1908
    %3761 = vmatprep.subr.mxu0 0.0
    %3762 = vmatpush1.msra.mxu0 %v1909
    %3763 = vmatprep.subr.mxu0 0.0
    %3764 = vmatpush1.msra.mxu0 0.0
    %3765 = vmatprep.subr.mxu0 0.0
    %3766 = vmatpush1.msra.mxu0 0.0
    %3767 = vmatprep.subr.mxu0 0.0
    %3768 = vmatpush1.msra.mxu0 0.0
    %3769 = vmatprep.subr.mxu0 0.0
    %3770 = vmatpush1.msra.mxu0 0.0
    %3771 = vmatprep.subr.mxu0 0.0
    %3772 = vmatpush1.msra.mxu0 0.0
    %3773 = vmatprep.subr.mxu0 0.0
    %3774 = vmatpush1.msra.mxu0 0.0
    %3775 = vmatprep.subr.mxu0 0.0
    %3776 = vmatpush1.msra.mxu0 0.0
    %3777 = vmatprep.subr.mxu0 0.0
    %3778 = vmatpush1.msra.mxu0 0.0
    %3779 = vmatprep.subr.mxu0 0.0
    %3780 = vmatpush1.msra.mxu0 0.0
    %3781 = vmatprep.subr.mxu0 0.0
    %3782 = vmatpush1.msra.mxu0 0.0
    %3783 = vmatprep.subr.mxu0 0.0
    %3784 = vmatpush1.msra.mxu0 0.0
    %3785 = vmatprep.subr.mxu0 0.0
    %3786 = vmatpush1.msra.mxu0 0.0
    %3787 = vmatprep.subr.mxu0 0.0
    %3788 = vmatpush1.msra.mxu0 0.0
    %3789 = vmatprep.subr.mxu0 0.0
    %3790 = vmatpush1.msra.mxu0 0.0
    %3791 = vmatprep.subr.mxu0 0.0
    %3792 = vmatpush1.msra.mxu0 0.0
    %3793 = vmatprep.subr.mxu0 0.0
    %3794 = vmatpush1.msra.mxu0 0.0
    %3795 = vmatprep.subr.mxu0 0.0
    %3796 = vmatpush1.msra.mxu0 0.0
    %3797 = vmatprep.subr.mxu0 0.0
    %3798 = vmatpush1.msra.mxu0 0.0
    %3799 = vmatprep.subr.mxu0 0.0
    %3800 = vmatpush1.msra.mxu0 0.0
    %3801 = vmatprep.subr.mxu0 0.0
    %3802 = vmatpush1.msra.mxu0 0.0
    %3803 = vmatprep.subr.mxu0 0.0
    %3804 = vmatpush1.msra.mxu0 0.0
    %3805 = vmatprep.subr.mxu0 0.0
    %3806 = vmatpush1.msra.mxu0 0.0
    %3807 = vmatprep.subr.mxu0 0.0
    %3808 = vmatpush1.msra.mxu0 0.0
    %3809 = vmatprep.subr.mxu0 0.0
    %3810 = vmatpush1.msra.mxu0 0.0
    %3811 = vmatprep.subr.mxu0 0.0
    %3812 = vmatpush1.msra.mxu0 0.0
    %3813 = vmatprep.subr.mxu0 0.0
    %3814 = vmatpush1.msra.mxu0 0.0
    %3815 = vmatprep.subr.mxu0 0.0
    %3816 = vmatpush1.msra.mxu0 0.0
    %3817 = vmatprep.subr.mxu0 0.0
    %3818 = vmatpush1.msra.mxu0 0.0
    %3819 = vmatprep.mubr.f32.mxu0 0.0
    %3820 = vmatmul.mubr.f32.gmra.mrb[0].mxu0 %v3753
    %v3821 = vpop.f32.mrb[0].mxu0
    %v3822 = vadd.f32 %v2245, %v3821
    %v3823 = vpop.f32.mrb[0].mxu0
    %3824 = vdwg.mxu0
    %v3825 = vxor.u32 %v3822, 2147483648
    %v3826 = vmul.f32 %v3825, 1.442695
    %v3827 = vpow.pop %v3826
    %v3828 = vadd.f32 %v3827, 1.0
    %v3829 = vrcp.pop %v3828
    %v3830 = vmul.f32 1.0, %v3829
    %v3831 = vtanh.pop %v3822
    %v3832 = vmul.f32 %v3830, %v3743
    %3834 = vrot.lane.b32.xlu0 %v3831, 64
    %v3835 = vpop.permute.xlu0 %3834
    %v3837 = vmul.f32 %v3830, %v3835
    %3839 = vrot.lane.b32.xlu0 %v3837, 32
    %v3840 = vpop.permute.xlu0 %3839
    %v3842 = vadd.f32 %v3832, %v3840
    %v3843 = vtanh.pop %v3842
    %3845 = vrot.lane.b32.xlu0 %v3843, 64
    %v3846 = vpop.permute.xlu0 %3845
    %v3848 = vmul.f32 %v3830, %v3846
    %v3849 = vld [vmem:[%s13] sm:$0xff]
    %v3850 = vld [vmem:[%s13 + $0x8] sm:$0xff]
    %v3851 = vld [vmem:[%s13 + $0x10] sm:$0xff]
    %v3852 = vld [vmem:[%s13 + $0x18] sm:$0xff]
    %v3853 = vld [vmem:[%s14] sm:$0xff]
    %v3854 = vld [vmem:[%s14 + $0x8] sm:$0xff]
    %v3855 = vld [vmem:[%s14 + $0x10] sm:$0xff]
    %v3856 = vld [vmem:[%s14 + $0x18] sm:$0xff]
    %3858 = vrot.lane.b32.xlu0 %v3848, 32
    %v3859 = vpop.permute.xlu0 %3858
    %v3860 = vsel %vm239, %v3859, 0
    %3862 = vmatprep.subr.mxu0 0.0
    %3863 = vmatpush1.msra.mxu0 %v3853
    %3864 = vmatprep.subr.mxu0 0.0
    %3865 = vmatpush1.msra.mxu0 %v3854
    %3866 = vmatprep.subr.mxu0 0.0
    %3867 = vmatpush1.msra.mxu0 %v3855
    %3868 = vmatprep.subr.mxu0 0.0
    %3869 = vmatpush1.msra.mxu0 %v3856
    %3870 = vmatprep.subr.mxu0 0.0
    %3871 = vmatpush1.msra.mxu0 0.0
    %3872 = vmatprep.subr.mxu0 0.0
    %3873 = vmatpush1.msra.mxu0 0.0
    %3874 = vmatprep.subr.mxu0 0.0
    %3875 = vmatpush1.msra.mxu0 0.0
    %3876 = vmatprep.subr.mxu0 0.0
    %3877 = vmatpush1.msra.mxu0 0.0
    %3878 = vmatprep.subr.mxu0 0.0
    %3879 = vmatpush1.msra.mxu0 0.0
    %3880 = vmatprep.subr.mxu0 0.0
    %3881 = vmatpush1.msra.mxu0 0.0
    %3882 = vmatprep.subr.mxu0 0.0
    %3883 = vmatpush1.msra.mxu0 0.0
    %3884 = vmatprep.subr.mxu0 0.0
    %3885 = vmatpush1.msra.mxu0 0.0
    %3886 = vmatprep.subr.mxu0 0.0
    %3887 = vmatpush1.msra.mxu0 0.0
    %3888 = vmatprep.subr.mxu0 0.0
    %3889 = vmatpush1.msra.mxu0 0.0
    %3890 = vmatprep.subr.mxu0 0.0
    %3891 = vmatpush1.msra.mxu0 0.0
    %3892 = vmatprep.subr.mxu0 0.0
    %3893 = vmatpush1.msra.mxu0 0.0
    %3894 = vmatprep.subr.mxu0 0.0
    %3895 = vmatpush1.msra.mxu0 0.0
    %3896 = vmatprep.subr.mxu0 0.0
    %3897 = vmatpush1.msra.mxu0 0.0
    %3898 = vmatprep.subr.mxu0 0.0
    %3899 = vmatpush1.msra.mxu0 0.0
    %3900 = vmatprep.subr.mxu0 0.0
    %3901 = vmatpush1.msra.mxu0 0.0
    %3902 = vmatprep.subr.mxu0 0.0
    %3903 = vmatpush1.msra.mxu0 0.0
    %3904 = vmatprep.subr.mxu0 0.0
    %3905 = vmatpush1.msra.mxu0 0.0
    %3906 = vmatprep.subr.mxu0 0.0
    %3907 = vmatpush1.msra.mxu0 0.0
    %3908 = vmatprep.subr.mxu0 0.0
    %3909 = vmatpush1.msra.mxu0 0.0
    %3910 = vmatprep.subr.mxu0 0.0
    %3911 = vmatpush1.msra.mxu0 0.0
    %3912 = vmatprep.subr.mxu0 0.0
    %3913 = vmatpush1.msra.mxu0 0.0
    %3914 = vmatprep.subr.mxu0 0.0
    %3915 = vmatpush1.msra.mxu0 0.0
    %3916 = vmatprep.subr.mxu0 0.0
    %3917 = vmatpush1.msra.mxu0 0.0
    %3918 = vmatprep.subr.mxu0 0.0
    %3919 = vmatpush1.msra.mxu0 0.0
    %3920 = vmatprep.subr.mxu0 0.0
    %3921 = vmatpush1.msra.mxu0 0.0
    %3922 = vmatprep.subr.mxu0 0.0
    %3923 = vmatpush1.msra.mxu0 0.0
    %3924 = vmatprep.subr.mxu0 0.0
    %3925 = vmatpush1.msra.mxu0 0.0
    %3926 = vmatprep.mubr.f32.mxu0 0.0
    %3927 = vmatmul.mubr.f32.gmra.mrb[0].mxu0 %v3860
    %v3928 = vpop.f32.mrb[0].mxu0
    %v3929 = vadd.f32 0.0, %v3928
    %v3930 = vpop.f32.mrb[0].mxu0
    %3931 = vdwg.mxu0
    %3933 = vrot.lane.b32.xlu0 %v3047, 32
    %v3934 = vpop.permute.xlu0 %3933
    %v3935 = vsel %vm239, %v3934, 0
    %3937 = vmatprep.subr.mxu0 0.0
    %3938 = vmatpush1.msra.mxu0 %v3849
    %3939 = vmatprep.subr.mxu0 0.0
    %3940 = vmatpush1.msra.mxu0 %v3850
    %3941 = vmatprep.subr.mxu0 0.0
    %3942 = vmatpush1.msra.mxu0 %v3851
    %3943 = vmatprep.subr.mxu0 0.0
    %3944 = vmatpush1.msra.mxu0 %v3852
    %3945 = vmatprep.subr.mxu0 0.0
    %3946 = vmatpush1.msra.mxu0 0.0
    %3947 = vmatprep.subr.mxu0 0.0
    %3948 = vmatpush1.msra.mxu0 0.0
    %3949 = vmatprep.subr.mxu0 0.0
    %3950 = vmatpush1.msra.mxu0 0.0
    %3951 = vmatprep.subr.mxu0 0.0
    %3952 = vmatpush1.msra.mxu0 0.0
    %3953 = vmatprep.subr.mxu0 0.0
    %3954 = vmatpush1.msra.mxu0 0.0
    %3955 = vmatprep.subr.mxu0 0.0
    %3956 = vmatpush1.msra.mxu0 0.0
    %3957 = vmatprep.subr.mxu0 0.0
    %3958 = vmatpush1.msra.mxu0 0.0
    %3959 = vmatprep.subr.mxu0 0.0
    %3960 = vmatpush1.msra.mxu0 0.0
    %3961 = vmatprep.subr.mxu0 0.0
    %3962 = vmatpush1.msra.mxu0 0.0
    %3963 = vmatprep.subr.mxu0 0.0
    %3964 = vmatpush1.msra.mxu0 0.0
    %3965 = vmatprep.subr.mxu0 0.0
    %3966 = vmatpush1.msra.mxu0 0.0
    %3967 = vmatprep.subr.mxu0 0.0
    %3968 = vmatpush1.msra.mxu0 0.0
    %3969 = vmatprep.subr.mxu0 0.0
    %3970 = vmatpush1.msra.mxu0 0.0
    %3971 = vmatprep.subr.mxu0 0.0
    %3972 = vmatpush1.msra.mxu0 0.0
    %3973 = vmatprep.subr.mxu0 0.0
    %3974 = vmatpush1.msra.mxu0 0.0
    %3975 = vmatprep.subr.mxu0 0.0
    %3976 = vmatpush1.msra.mxu0 0.0
    %3977 = vmatprep.subr.mxu0 0.0
    %3978 = vmatpush1.msra.mxu0 0.0
    %3979 = vmatprep.subr.mxu0 0.0
    %3980 = vmatpush1.msra.mxu0 0.0
    %3981 = vmatprep.subr.mxu0 0.0
    %3982 = vmatpush1.msra.mxu0 0.0
    %3983 = vmatprep.subr.mxu0 0.0
    %3984 = vmatpush1.msra.mxu0 0.0
    %3985 = vmatprep.subr.mxu0 0.0
    %3986 = vmatpush1.msra.mxu0 0.0
    %3987 = vmatprep.subr.mxu0 0.0
    %3988 = vmatpush1.msra.mxu0 0.0
    %3989 = vmatprep.subr.mxu0 0.0
    %3990 = vmatpush1.msra.mxu0 0.0
    %3991 = vmatprep.subr.mxu0 0.0
    %3992 = vmatpush1.msra.mxu0 0.0
    %3993 = vmatprep.subr.mxu0 0.0
    %3994 = vmatpush1.msra.mxu0 0.0
    %3995 = vmatprep.subr.mxu0 0.0
    %3996 = vmatpush1.msra.mxu0 0.0
    %3997 = vmatprep.subr.mxu0 0.0
    %3998 = vmatpush1.msra.mxu0 0.0
    %3999 = vmatprep.subr.mxu0 0.0
    %4000 = vmatpush1.msra.mxu0 0.0
    %4001 = vmatprep.mubr.f32.mxu0 0.0
    %4002 = vmatmul.mubr.f32.gmra.mrb[0].mxu0 %v3935
    %v4003 = vpop.f32.mrb[0].mxu0
    %v4004 = vadd.f32 %v3929, %v4003
    %v4005 = vpop.f32.mrb[0].mxu0
    %4006 = vdwg.mxu0
    %v4007 = vld [vmem:[%s15] sm:$0x3]
    %v4008 = vadd.f32 %v4004, %v4007
    %vm4009 = vcmask 17408
    %4010 = vst.msk [vmem:[#allocation2] sm:$0x3] %vm4009, %v4008
    // Predicated region
    $region66: #{bilstm_forward.1} parent=1 // pred_check
      _
    $region67: #{bilstm_forward.1} parent=1 // pred_check_branch
      %4012 = sbr.rel (0) target = $region69
    $region68: #{bilstm_forward.1} parent=1 // pred_region
      %s4014 = ssub.s32 32, 32
      %4015 = vsyncadd [#allocation3], %s4014
      %s4017 = sshll.u32 [#allocation2], 4
      %s4018 = int_to_ptr.vmem [resolvable:$true] %s4017
      %4020 = dma.vmem_to_hbm [thread:$0]  %s4018, 32, %s16, [#allocation3]
    $region69: #{bilstm_forward.1} parent=1 // pred_fallthru
      _
    // Predicated region
    $region70: #{bilstm_forward.1} parent=1 // pred_check
      _
    $region71: #{bilstm_forward.1} parent=1 // pred_check_branch
      %4022 = sbr.rel (0) target = $region73
    $region72: #{bilstm_forward.1} parent=1 // pred_region
      %4023 = dma.done [#allocation3], 32
    $region73: #{bilstm_forward.1} parent=1 // pred_fallthru
      _
    %4024 = vsyncpa [#allocation3], 1

</llo_original>
